<compile_context>
chip_gen: v6e
topology: v6e:2x2x1
jax: 0.10.0
libtpu: 0.0.40
codegen_flags: <defaults>
</compile_context>

<pallas_src>
import math

import jax
import jax.numpy as jnp
from jax import lax
from jax.experimental import pallas as pl
from jax.experimental.pallas import tpu as pltpu

# ------------------------- config (small, synthetic) -------------------------
VOCAB = 100
MAX_POS = 64
HIDDEN = 32
N_HEADS = 4
HEAD_DIM = HIDDEN // N_HEADS
FFN = 64
N_LAYERS = 2
NUM_LABELS = 3          # num_labels_proficiency
LN_EPS = 1e-12
BATCH = 2
SEQ = 8

LANE = 128                              # lane padding for packed parameter tables
WROWS = 3 * HIDDEN + FFN                # wqkv(H) + wo(H) + ffn_w1(H) + ffn_w2(FFN) rows


# ------------------------------ kernel helpers -------------------------------
def _layernorm(x, g, b):
    mu = jnp.mean(x, axis=-1, keepdims=True)
    var = jnp.mean((x - mu) ** 2, axis=-1, keepdims=True)
    return (x - mu) * jax.lax.rsqrt(var + LN_EPS) * g + b


# ------------------------------ fused Pallas kernel ---------------------------
def fused_forward_kernel(emb_ref, mask_ref, gvec_ref, lvec_ref, wstack_ref, cw_ref,
                         logits_ref):
    B, S, H = emb_ref.shape
    BS = B * S

    gv = gvec_ref[...]                                        # (8, 128) f32

    # ---- embedding LayerNorm (f32), whole batch flattened to (B*S, H) ----
    x = _layernorm(emb_ref[...].reshape(BS, H), gv[0:1, 0:H], gv[1:2, 0:H])

    # Additive key-mask bias, hoisted + broadcast once (0 attend / -1e9 pad).
    mb = jnp.broadcast_to(mask_ref[...], (B, S, S))           # (B, S_q, S_k)

    def layer_body(l, x):
        wl = wstack_ref[l]                                    # (WROWS, 128) bf16
        lv = lvec_ref[l]                                      # (8, 128) f32

        xb = x.astype(jnp.bfloat16)

        # Fused QKV projection: one (BS, H) @ (H, 3H) MXU stream.
        # 1/sqrt(HEAD_DIM) is pre-folded into the Q columns of wl (and the Q bias).
        qkv = (jnp.dot(xb, wl[0:H, 0:3 * H], preferred_element_type=jnp.float32)
               + lv[0:1, 0:3 * H])                            # (BS, 3H) f32
        qkv3 = qkv.reshape(B, S, 3 * H)
        q3 = qkv3[:, :, 0:H].astype(jnp.bfloat16)             # cast once per layer
        k3 = qkv3[:, :, H:2 * H].astype(jnp.bfloat16)
        v3 = qkv3[:, :, 2 * H:3 * H].astype(jnp.bfloat16)

        # Multi-head attention: per-head score/ctx einsums (batched over B),
        # then ONE full-H output projection on the re-assembled context.
        ctx_heads = []
        for h in range(N_HEADS):                              # tiny static head loop
            lo = h * HEAD_DIM
            s = jnp.einsum('bqd,bkd->bqk',
                           q3[:, :, lo:lo + HEAD_DIM], k3[:, :, lo:lo + HEAD_DIM],
                           preferred_element_type=jnp.float32)          # (B,S,S) f32
            s = s + mb                                        # mask padded keys
            s = s - jnp.max(s, axis=-1, keepdims=True)
            p = jnp.exp(s)
            p = p * pl.reciprocal(jnp.sum(p, axis=-1, keepdims=True), approx=True)
            ctx_heads.append(
                jnp.einsum('bqk,bkd->bqd', p.astype(jnp.bfloat16),
                           v3[:, :, lo:lo + HEAD_DIM],
                           preferred_element_type=jnp.float32))          # (B,S,dh)
        ctx = jnp.concatenate(ctx_heads, axis=-1).reshape(BS, H)         # (BS, H) f32

        attn_out = (jnp.dot(ctx.astype(jnp.bfloat16), wl[H:2 * H, 0:H],
                            preferred_element_type=jnp.float32)
                    + lv[1:2, 0:H])

        h1 = _layernorm(attn_out + x, lv[2:3, 0:H], lv[3:4, 0:H])        # sa_layer_norm

        ff = (jnp.dot(h1.astype(jnp.bfloat16), wl[2 * H:3 * H, 0:FFN],
                      preferred_element_type=jnp.float32)
              + lv[4:5, 0:FFN])
        # TODO(synk): HF DistilBERT uses the exact erf GELU; tanh approximation used here
        # (EUP-friendly, guaranteed to lower); drift is ~1e-3 on activations.
        ff = jax.nn.gelu(ff, approximate=True)
        ff = (jnp.dot(ff.astype(jnp.bfloat16), wl[3 * H:3 * H + FFN, 0:H],
                      preferred_element_type=jnp.float32)
              + lv[5:6, 0:H])
        return _layernorm(ff + h1, lv[6:7, 0:H], lv[7:8, 0:H])           # output_layer_norm

    x = lax.fori_loop(0, N_LAYERS, layer_body, x, unroll=True)

    # Classifier epilogue folded into the same kernel:
    # pooled = last_hidden_state[:, 0]; dropout(p=0.3) is identity at inference.
    pooled = x.reshape(B, S, H)[:, 0, :]                                 # (B, H)
    # Lane-dense (B, 128) store; sliced to NUM_LABELS in the wrapper.
    logits_ref[...] = (jnp.dot(pooled.astype(jnp.bfloat16), cw_ref[...],
                               preferred_element_type=jnp.float32) + gv[2:3, :])


def pallas_fused_forward(emb, mask_bias, params):
    B, S, H = emb.shape
    args = (emb, mask_bias, params["gvec"], params["lvec"],
            params["wstack"], params["clf_w"])

    vmem_spec = pl.BlockSpec(memory_space=pltpu.MemorySpace.VMEM)
    out = pl.pallas_call(
        fused_forward_kernel,
        out_shape=jax.ShapeDtypeStruct((B, LANE), jnp.float32),
        in_specs=[vmem_spec for _ in args],
        out_specs=vmem_spec,
    )(*args)
    return out[:, :NUM_LABELS]


# ------------------------------ parameter init --------------------------------
def init_params(key):
    def nrm(k, shape, scale=0.02):
        return (scale * jax.random.normal(k, shape)).astype(jnp.float32)

    ks = jax.random.split(key, 9)
    wq = nrm(ks[0], (N_LAYERS, HIDDEN, HIDDEN))
    wk = nrm(ks[1], (N_LAYERS, HIDDEN, HIDDEN))
    wv = nrm(ks[2], (N_LAYERS, HIDDEN, HIDDEN))
    wo = nrm(ks[3], (N_LAYERS, HIDDEN, HIDDEN))
    w1 = nrm(ks[4], (N_LAYERS, HIDDEN, FFN))
    w2 = nrm(ks[5], (N_LAYERS, FFN, HIDDEN))
    clf = nrm(ks[8], (HIDDEN, NUM_LABELS))

    attn_scale = 1.0 / math.sqrt(HEAD_DIM)

    # Per-layer biases / LayerNorm params (synthetic init: zeros / ones).
    bqkv = jnp.zeros((N_LAYERS, 3 * HIDDEN), jnp.float32)
    bo = jnp.zeros((N_LAYERS, HIDDEN), jnp.float32)
    b1 = jnp.zeros((N_LAYERS, FFN), jnp.float32)
    b2 = jnp.zeros((N_LAYERS, HIDDEN), jnp.float32)
    ln1_g = jnp.ones((N_LAYERS, HIDDEN), jnp.float32)
    ln1_b = jnp.zeros((N_LAYERS, HIDDEN), jnp.float32)
    ln2_g = jnp.ones((N_LAYERS, HIDDEN), jnp.float32)
    ln2_b = jnp.zeros((N_LAYERS, HIDDEN), jnp.float32)

    # Fused QKV (y = x @ W + b, W = torch weight .T), 1/sqrt(dh) folded into Q block (f32,
    # before the bf16 cast — numerically identical to scaling the scores).
    wqkv = jnp.concatenate([wq * attn_scale, wk, wv], axis=-1)           # (L, H, 3H)
    bqkv = bqkv.at[:, :HIDDEN].multiply(attn_scale)

    # --- packed bf16 weight stack (L, WROWS, 128): [wqkv | wo | ffn_w1 | ffn_w2] rows ---
    wstack = jnp.zeros((N_LAYERS, WROWS, LANE), jnp.float32)
    wstack = wstack.at[:, 0:HIDDEN, 0:3 * HIDDEN].set(wqkv)
    wstack = wstack.at[:, HIDDEN:2 * HIDDEN, 0:HIDDEN].set(wo)
    wstack = wstack.at[:, 2 * HIDDEN:3 * HIDDEN, 0:FFN].set(w1)
    wstack = wstack.at[:, 3 * HIDDEN:3 * HIDDEN + FFN, 0:HIDDEN].set(w2)
    wstack = wstack.astype(jnp.bfloat16)

    # --- packed f32 per-layer vector table (L, 8, 128): one lane-padded row per vector ---
    lvec = jnp.zeros((N_LAYERS, 8, LANE), jnp.float32)
    lvec = lvec.at[:, 0, 0:3 * HIDDEN].set(bqkv)
    lvec = lvec.at[:, 1, 0:HIDDEN].set(bo)
    lvec = lvec.at[:, 2, 0:HIDDEN].set(ln1_g)
    lvec = lvec.at[:, 3, 0:HIDDEN].set(ln1_b)
    lvec = lvec.at[:, 4, 0:FFN].set(b1)
    lvec = lvec.at[:, 5, 0:HIDDEN].set(b2)
    lvec = lvec.at[:, 6, 0:HIDDEN].set(ln2_g)
    lvec = lvec.at[:, 7, 0:HIDDEN].set(ln2_b)

    # --- packed f32 global vector table (8, 128): emb LN gamma/beta, classifier bias ---
    gvec = jnp.zeros((8, LANE), jnp.float32)
    gvec = gvec.at[0, 0:HIDDEN].set(jnp.ones((HIDDEN,), jnp.float32))    # emb_ln_g
    gvec = gvec.at[1, 0:HIDDEN].set(jnp.zeros((HIDDEN,), jnp.float32))   # emb_ln_b
    gvec = gvec.at[2, 0:NUM_LABELS].set(jnp.zeros((NUM_LABELS,), jnp.float32))  # clf_b

    # --- lane-padded classifier weight (H, 128) bf16 ---
    clf_w = jnp.zeros((HIDDEN, LANE), jnp.float32).at[:, 0:NUM_LABELS].set(clf)
    clf_w = clf_w.astype(jnp.bfloat16)

    return {
        "word_emb": nrm(ks[6], (VOCAB, HIDDEN)),
        "pos_emb": nrm(ks[7], (MAX_POS, HIDDEN)),
        "gvec": gvec,
        "lvec": lvec,
        "wstack": wstack,
        "clf_w": clf_w,
    }


# -------------------------------- forward pass ---------------------------------
def proficiency_distilbert_forward(params, input_ids, attention_mask=None,
                                   labels_proficiency=None):
    B, S = input_ids.shape
    if attention_mask is None:
        attention_mask = jnp.ones((B, S), dtype=jnp.int32)

    # Embedding gather (word + position) in plain JAX; everything after is one Pallas call.
    emb = (jnp.take(params["word_emb"], input_ids, axis=0)
           + params["pos_emb"][:S][None, :, :]).astype(jnp.float32)
    mask_bias = ((1.0 - attention_mask.astype(jnp.float32)) * -1e9).reshape(B, 1, S)

    logits = pallas_fused_forward(emb, mask_bias, params)

    loss = None
    if labels_proficiency is not None:
        logp = jax.nn.log_softmax(logits, axis=-1)
        loss = -jnp.mean(jnp.take_along_axis(logp, labels_proficiency[:, None], axis=1))
    return {"loss": loss, "logits_proficiency": logits}


# ------------------------------------ main --------------------------------------
if __name__ == "__main__":
    key = jax.random.PRNGKey(0)
    k_ids, k_params = jax.random.split(key)

    input_ids = jax.random.randint(k_ids, (BATCH, SEQ), 0, VOCAB, dtype=jnp.int32)
    attention_mask = jnp.ones((BATCH, SEQ), dtype=jnp.int32)
    attention_mask = attention_mask.at[1, 6:].set(0)           # pad tail of 2nd sequence

    params = init_params(k_params)

    fwd = jax.jit(lambda p, ids, am:
                  proficiency_distilbert_forward(p, ids, am)["logits_proficiency"])
    logits = jax.block_until_ready(fwd(params, input_ids, attention_mask))

    assert logits.shape == (BATCH, NUM_LABELS)
    assert bool(jnp.all(jnp.isfinite(logits)))
    print("KERNEL_OK")
</pallas_src>

<mosaic_0001>
module attributes {stable_mosaic.version = 11 : i64} {
  func.func @fused_forward_kernel(%arg0: memref<2x8x32xf32, #tpu.memory_space<vmem>>, %arg1: memref<2x1x8xf32, #tpu.memory_space<vmem>>, %arg2: memref<8x128xf32, #tpu.memory_space<vmem>>, %arg3: memref<2x8x128xf32, #tpu.memory_space<vmem>>, %arg4: memref<2x160x128xbf16, #tpu.memory_space<vmem>>, %arg5: memref<32x128xbf16, #tpu.memory_space<vmem>>, %arg6: memref<2x128xf32, #tpu.memory_space<vmem>>) attributes {dimension_semantics = [], scalar_prefetch = 0 : i64, scratch_operands = 0 : i64, tpu.core_type = #tpu.core_type<tc>} {
    %c0 = arith.constant 0 : index
    %c0_0 = arith.constant 0 : index
    %0 = vector.load %arg2[%c0, %c0_0] : memref<8x128xf32, #tpu.memory_space<vmem>>, vector<8x128xf32>
    %c0_1 = arith.constant 0 : index
    %c0_2 = arith.constant 0 : index
    %c0_3 = arith.constant 0 : index
    %1 = vector.load %arg0[%c0_1, %c0_2, %c0_3] : memref<2x8x32xf32, #tpu.memory_space<vmem>>, vector<2x8x32xf32>
    %2 = vector.shape_cast %1 : vector<2x8x32xf32> to vector<16x32xf32>
    %3 = vector.extract_strided_slice %0 {offsets = [0, 0], sizes = [1, 32], strides = [1, 1]} : vector<8x128xf32> to vector<1x32xf32>
    %4 = vector.extract_strided_slice %0 {offsets = [1, 0], sizes = [1, 32], strides = [1, 1]} : vector<8x128xf32> to vector<1x32xf32>
    %cst = arith.constant dense<0.000000e+00> : vector<16xf32>
    %5 = vector.multi_reduction <add>, %2, %cst [1] : vector<16x32xf32> to vector<16xf32>
    %6 = vector.shape_cast %5 : vector<16xf32> to vector<16x1xf32>
    %cst_4 = arith.constant 3.200000e+01 : f32
    %7 = vector.broadcast %cst_4 : f32 to vector<16x1xf32>
    %8 = arith.divf %6, %7 : vector<16x1xf32>
    %9 = vector.broadcast %8 : vector<16x1xf32> to vector<16x32xf32>
    %10 = arith.subf %2, %9 : vector<16x32xf32>
    %11 = arith.mulf %10, %10 : vector<16x32xf32>
    %cst_5 = arith.constant dense<0.000000e+00> : vector<16xf32>
    %12 = vector.multi_reduction <add>, %11, %cst_5 [1] : vector<16x32xf32> to vector<16xf32>
    %13 = vector.shape_cast %12 : vector<16xf32> to vector<16x1xf32>
    %cst_6 = arith.constant 3.200000e+01 : f32
    %14 = vector.broadcast %cst_6 : f32 to vector<16x1xf32>
    %15 = arith.divf %13, %14 : vector<16x1xf32>
    %16 = vector.broadcast %8 : vector<16x1xf32> to vector<16x32xf32>
    %17 = arith.subf %2, %16 : vector<16x32xf32>
    %cst_7 = arith.constant 9.99999996E-13 : f32
    %18 = vector.broadcast %cst_7 : f32 to vector<16x1xf32>
    %19 = arith.addf %15, %18 : vector<16x1xf32>
    %20 = math.rsqrt %19 : vector<16x1xf32>
    %21 = vector.broadcast %20 : vector<16x1xf32> to vector<16x32xf32>
    %22 = arith.mulf %17, %21 : vector<16x32xf32>
    %23 = vector.broadcast %3 : vector<1x32xf32> to vector<16x32xf32>
    %24 = arith.mulf %22, %23 : vector<16x32xf32>
    %25 = vector.broadcast %4 : vector<1x32xf32> to vector<16x32xf32>
    %26 = arith.addf %24, %25 : vector<16x32xf32>
    %c0_8 = arith.constant 0 : index
    %c0_9 = arith.constant 0 : index
    %c0_10 = arith.constant 0 : index
    %27 = vector.load %arg1[%c0_8, %c0_9, %c0_10] : memref<2x1x8xf32, #tpu.memory_space<vmem>>, vector<2x1x8xf32>
    %28 = vector.shape_cast %27 : vector<2x1x8xf32> to vector<2x1x8xf32>
    %29 = vector.broadcast %28 : vector<2x1x8xf32> to vector<2x8x8xf32>
    %c0_i32 = arith.constant 0 : i32
    %30 = arith.index_cast %c0_i32 : i32 to index
    %c0_11 = arith.constant 0 : index
    %c0_12 = arith.constant 0 : index
    %31 = vector.load %arg4[%30, %c0_11, %c0_12] : memref<2x160x128xbf16, #tpu.memory_space<vmem>>, vector<1x160x128xbf16>
    %32 = vector.shape_cast %31 : vector<1x160x128xbf16> to vector<160x128xbf16>
    %33 = arith.index_cast %c0_i32 : i32 to index
    %c0_13 = arith.constant 0 : index
    %c0_14 = arith.constant 0 : index
    %34 = vector.load %arg3[%33, %c0_13, %c0_14] : memref<2x8x128xf32, #tpu.memory_space<vmem>>, vector<1x8x128xf32>
    %35 = vector.shape_cast %34 : vector<1x8x128xf32> to vector<8x128xf32>
    %36 = arith.truncf %26 : vector<16x32xf32> to vector<16x32xbf16>
    %37 = vector.extract_strided_slice %32 {offsets = [0, 0], sizes = [32, 96], strides = [1, 1]} : vector<160x128xbf16> to vector<32x96xbf16>
    %cst_15 = arith.constant dense<0.000000e+00> : vector<16x96xf32>
    %38 = tpu.matmul %36, %37, %cst_15 {dimension_numbers = #tpu.dot_dimension_numbers<[1], [0], [0], [1], [0, 0, 1, 1], [], []>} : vector<16x32xbf16>, vector<32x96xbf16>, vector<16x96xf32> -> vector<16x96xf32>
    %39 = vector.extract_strided_slice %35 {offsets = [0, 0], sizes = [1, 96], strides = [1, 1]} : vector<8x128xf32> to vector<1x96xf32>
    %40 = vector.broadcast %39 : vector<1x96xf32> to vector<16x96xf32>
    %41 = arith.addf %38, %40 : vector<16x96xf32>
    %42 = vector.shape_cast %41 : vector<16x96xf32> to vector<2x8x96xf32>
    %43 = vector.extract_strided_slice %42 {offsets = [0, 0, 0], sizes = [2, 8, 32], strides = [1, 1, 1]} : vector<2x8x96xf32> to vector<2x8x32xf32>
    %44 = arith.truncf %43 : vector<2x8x32xf32> to vector<2x8x32xbf16>
    %45 = vector.extract_strided_slice %42 {offsets = [0, 0, 32], sizes = [2, 8, 32], strides = [1, 1, 1]} : vector<2x8x96xf32> to vector<2x8x32xf32>
    %46 = arith.truncf %45 : vector<2x8x32xf32> to vector<2x8x32xbf16>
    %47 = vector.extract_strided_slice %42 {offsets = [0, 0, 64], sizes = [2, 8, 32], strides = [1, 1, 1]} : vector<2x8x96xf32> to vector<2x8x32xf32>
    %48 = arith.truncf %47 : vector<2x8x32xf32> to vector<2x8x32xbf16>
    %49 = vector.extract_strided_slice %44 {offsets = [0, 0, 0], sizes = [2, 8, 8], strides = [1, 1, 1]} : vector<2x8x32xbf16> to vector<2x8x8xbf16>
    %50 = vector.extract_strided_slice %46 {offsets = [0, 0, 0], sizes = [2, 8, 8], strides = [1, 1, 1]} : vector<2x8x32xbf16> to vector<2x8x8xbf16>
    "tpu.trace_start"() <{level = 10 : i32, message = "bqd,bkd->bqk"}> : () -> ()
    %cst_16 = arith.constant dense<0.000000e+00> : vector<2x8x8xf32>
    %51 = tpu.matmul %49, %50, %cst_16 {dimension_numbers = #tpu.dot_dimension_numbers<[2], [2], [1], [1], [0, 0, 0, 1, 1, 1], [0], [0]>} : vector<2x8x8xbf16>, vector<2x8x8xbf16>, vector<2x8x8xf32> -> vector<2x8x8xf32>
    "tpu.trace_stop"() : () -> ()
    %52 = arith.addf %51, %29 : vector<2x8x8xf32>
    %cst_17 = arith.constant dense<0xFF800000> : vector<2x8xf32>
    %53 = vector.multi_reduction <maximumf>, %52, %cst_17 [2] : vector<2x8x8xf32> to vector<2x8xf32>
    %54 = vector.shape_cast %53 : vector<2x8xf32> to vector<2x8x1xf32>
    %55 = vector.broadcast %54 : vector<2x8x1xf32> to vector<2x8x8xf32>
    %56 = arith.subf %52, %55 : vector<2x8x8xf32>
    %57 = math.exp %56 : vector<2x8x8xf32>
    %cst_18 = arith.constant dense<0.000000e+00> : vector<2x8xf32>
    %58 = vector.multi_reduction <add>, %57, %cst_18 [2] : vector<2x8x8xf32> to vector<2x8xf32>
    %59 = vector.shape_cast %58 : vector<2x8xf32> to vector<2x8x1xf32>
    %60 = tpu.reciprocal %59 {approx = true} : vector<2x8x1xf32> -> vector<2x8x1xf32>
    %61 = vector.broadcast %60 : vector<2x8x1xf32> to vector<2x8x8xf32>
    %62 = arith.mulf %57, %61 : vector<2x8x8xf32>
    %63 = arith.truncf %62 : vector<2x8x8xf32> to vector<2x8x8xbf16>
    %64 = vector.extract_strided_slice %48 {offsets = [0, 0, 0], sizes = [2, 8, 8], strides = [1, 1, 1]} : vector<2x8x32xbf16> to vector<2x8x8xbf16>
    "tpu.trace_start"() <{level = 10 : i32, message = "bqk,bkd->bqd"}> : () -> ()
    %cst_19 = arith.constant dense<0.000000e+00> : vector<2x8x8xf32>
    %65 = tpu.matmul %63, %64, %cst_19 {dimension_numbers = #tpu.dot_dimension_numbers<[2], [1], [1], [2], [0, 0, 0, 1, 1, 2], [0], [0]>} : vector<2x8x8xbf16>, vector<2x8x8xbf16>, vector<2x8x8xf32> -> vector<2x8x8xf32>
    "tpu.trace_stop"() : () -> ()
    %66 = vector.extract_strided_slice %44 {offsets = [0, 0, 8], sizes = [2, 8, 8], strides = [1, 1, 1]} : vector<2x8x32xbf16> to vector<2x8x8xbf16>
    %67 = vector.extract_strided_slice %46 {offsets = [0, 0, 8], sizes = [2, 8, 8], strides = [1, 1, 1]} : vector<2x8x32xbf16> to vector<2x8x8xbf16>
    "tpu.trace_start"() <{level = 10 : i32, message = "bqd,bkd->bqk"}> : () -> ()
    %cst_20 = arith.constant dense<0.000000e+00> : vector<2x8x8xf32>
    %68 = tpu.matmul %66, %67, %cst_20 {dimension_numbers = #tpu.dot_dimension_numbers<[2], [2], [1], [1], [0, 0, 0, 1, 1, 1], [0], [0]>} : vector<2x8x8xbf16>, vector<2x8x8xbf16>, vector<2x8x8xf32> -> vector<2x8x8xf32>
    "tpu.trace_stop"() : () -> ()
    %69 = arith.addf %68, %29 : vector<2x8x8xf32>
    %cst_21 = arith.constant dense<0xFF800000> : vector<2x8xf32>
    %70 = vector.multi_reduction <maximumf>, %69, %cst_21 [2] : vector<2x8x8xf32> to vector<2x8xf32>
    %71 = vector.shape_cast %70 : vector<2x8xf32> to vector<2x8x1xf32>
    %72 = vector.broadcast %71 : vector<2x8x1xf32> to vector<2x8x8xf32>
    %73 = arith.subf %69, %72 : vector<2x8x8xf32>
    %74 = math.exp %73 : vector<2x8x8xf32>
    %cst_22 = arith.constant dense<0.000000e+00> : vector<2x8xf32>
    %75 = vector.multi_reduction <add>, %74, %cst_22 [2] : vector<2x8x8xf32> to vector<2x8xf32>
    %76 = vector.shape_cast %75 : vector<2x8xf32> to vector<2x8x1xf32>
    %77 = tpu.reciprocal %76 {approx = true} : vector<2x8x1xf32> -> vector<2x8x1xf32>
    %78 = vector.broadcast %77 : vector<2x8x1xf32> to vector<2x8x8xf32>
    %79 = arith.mulf %74, %78 : vector<2x8x8xf32>
    %80 = arith.truncf %79 : vector<2x8x8xf32> to vector<2x8x8xbf16>
    %81 = vector.extract_strided_slice %48 {offsets = [0, 0, 8], sizes = [2, 8, 8], strides = [1, 1, 1]} : vector<2x8x32xbf16> to vector<2x8x8xbf16>
    "tpu.trace_start"() <{level = 10 : i32, message = "bqk,bkd->bqd"}> : () -> ()
    %cst_23 = arith.constant dense<0.000000e+00> : vector<2x8x8xf32>
    %82 = tpu.matmul %80, %81, %cst_23 {dimension_numbers = #tpu.dot_dimension_numbers<[2], [1], [1], [2], [0, 0, 0, 1, 1, 2], [0], [0]>} : vector<2x8x8xbf16>, vector<2x8x8xbf16>, vector<2x8x8xf32> -> vector<2x8x8xf32>
    "tpu.trace_stop"() : () -> ()
    %83 = vector.extract_strided_slice %44 {offsets = [0, 0, 16], sizes = [2, 8, 8], strides = [1, 1, 1]} : vector<2x8x32xbf16> to vector<2x8x8xbf16>
    %84 = vector.extract_strided_slice %46 {offsets = [0, 0, 16], sizes = [2, 8, 8], strides = [1, 1, 1]} : vector<2x8x32xbf16> to vector<2x8x8xbf16>
    "tpu.trace_start"() <{level = 10 : i32, message = "bqd,bkd->bqk"}> : () -> ()
    %cst_24 = arith.constant dense<0.000000e+00> : vector<2x8x8xf32>
    %85 = tpu.matmul %83, %84, %cst_24 {dimension_numbers = #tpu.dot_dimension_numbers<[2], [2], [1], [1], [0, 0, 0, 1, 1, 1], [0], [0]>} : vector<2x8x8xbf16>, vector<2x8x8xbf16>, vector<2x8x8xf32> -> vector<2x8x8xf32>
    "tpu.trace_stop"() : () -> ()
    %86 = arith.addf %85, %29 : vector<2x8x8xf32>
    %cst_25 = arith.constant dense<0xFF800000> : vector<2x8xf32>
    %87 = vector.multi_reduction <maximumf>, %86, %cst_25 [2] : vector<2x8x8xf32> to vector<2x8xf32>
    %88 = vector.shape_cast %87 : vector<2x8xf32> to vector<2x8x1xf32>
    %89 = vector.broadcast %88 : vector<2x8x1xf32> to vector<2x8x8xf32>
    %90 = arith.subf %86, %89 : vector<2x8x8xf32>
    %91 = math.exp %90 : vector<2x8x8xf32>
    %cst_26 = arith.constant dense<0.000000e+00> : vector<2x8xf32>
    %92 = vector.multi_reduction <add>, %91, %cst_26 [2] : vector<2x8x8xf32> to vector<2x8xf32>
    %93 = vector.shape_cast %92 : vector<2x8xf32> to vector<2x8x1xf32>
    %94 = tpu.reciprocal %93 {approx = true} : vector<2x8x1xf32> -> vector<2x8x1xf32>
    %95 = vector.broadcast %94 : vector<2x8x1xf32> to vector<2x8x8xf32>
    %96 = arith.mulf %91, %95 : vector<2x8x8xf32>
    %97 = arith.truncf %96 : vector<2x8x8xf32> to vector<2x8x8xbf16>
    %98 = vector.extract_strided_slice %48 {offsets = [0, 0, 16], sizes = [2, 8, 8], strides = [1, 1, 1]} : vector<2x8x32xbf16> to vector<2x8x8xbf16>
    "tpu.trace_start"() <{level = 10 : i32, message = "bqk,bkd->bqd"}> : () -> ()
    %cst_27 = arith.constant dense<0.000000e+00> : vector<2x8x8xf32>
    %99 = tpu.matmul %97, %98, %cst_27 {dimension_numbers = #tpu.dot_dimension_numbers<[2], [1], [1], [2], [0, 0, 0, 1, 1, 2], [0], [0]>} : vector<2x8x8xbf16>, vector<2x8x8xbf16>, vector<2x8x8xf32> -> vector<2x8x8xf32>
    "tpu.trace_stop"() : () -> ()
    %100 = vector.extract_strided_slice %44 {offsets = [0, 0, 24], sizes = [2, 8, 8], strides = [1, 1, 1]} : vector<2x8x32xbf16> to vector<2x8x8xbf16>
    %101 = vector.extract_strided_slice %46 {offsets = [0, 0, 24], sizes = [2, 8, 8], strides = [1, 1, 1]} : vector<2x8x32xbf16> to vector<2x8x8xbf16>
    "tpu.trace_start"() <{level = 10 : i32, message = "bqd,bkd->bqk"}> : () -> ()
    %cst_28 = arith.constant dense<0.000000e+00> : vector<2x8x8xf32>
    %102 = tpu.matmul %100, %101, %cst_28 {dimension_numbers = #tpu.dot_dimension_numbers<[2], [2], [1], [1], [0, 0, 0, 1, 1, 1], [0], [0]>} : vector<2x8x8xbf16>, vector<2x8x8xbf16>, vector<2x8x8xf32> -> vector<2x8x8xf32>
    "tpu.trace_stop"() : () -> ()
    %103 = arith.addf %102, %29 : vector<2x8x8xf32>
    %cst_29 = arith.constant dense<0xFF800000> : vector<2x8xf32>
    %104 = vector.multi_reduction <maximumf>, %103, %cst_29 [2] : vector<2x8x8xf32> to vector<2x8xf32>
    %105 = vector.shape_cast %104 : vector<2x8xf32> to vector<2x8x1xf32>
    %106 = vector.broadcast %105 : vector<2x8x1xf32> to vector<2x8x8xf32>
    %107 = arith.subf %103, %106 : vector<2x8x8xf32>
    %108 = math.exp %107 : vector<2x8x8xf32>
    %cst_30 = arith.constant dense<0.000000e+00> : vector<2x8xf32>
    %109 = vector.multi_reduction <add>, %108, %cst_30 [2] : vector<2x8x8xf32> to vector<2x8xf32>
    %110 = vector.shape_cast %109 : vector<2x8xf32> to vector<2x8x1xf32>
    %111 = tpu.reciprocal %110 {approx = true} : vector<2x8x1xf32> -> vector<2x8x1xf32>
    %112 = vector.broadcast %111 : vector<2x8x1xf32> to vector<2x8x8xf32>
    %113 = arith.mulf %108, %112 : vector<2x8x8xf32>
    %114 = arith.truncf %113 : vector<2x8x8xf32> to vector<2x8x8xbf16>
    %115 = vector.extract_strided_slice %48 {offsets = [0, 0, 24], sizes = [2, 8, 8], strides = [1, 1, 1]} : vector<2x8x32xbf16> to vector<2x8x8xbf16>
    "tpu.trace_start"() <{level = 10 : i32, message = "bqk,bkd->bqd"}> : () -> ()
    %cst_31 = arith.constant dense<0.000000e+00> : vector<2x8x8xf32>
    %116 = tpu.matmul %114, %115, %cst_31 {dimension_numbers = #tpu.dot_dimension_numbers<[2], [1], [1], [2], [0, 0, 0, 1, 1, 2], [0], [0]>} : vector<2x8x8xbf16>, vector<2x8x8xbf16>, vector<2x8x8xf32> -> vector<2x8x8xf32>
    "tpu.trace_stop"() : () -> ()
    %117 = tpu.concatenate %65, %82, %99, %116 in 2 : vector<2x8x8xf32>, vector<2x8x8xf32>, vector<2x8x8xf32>, vector<2x8x8xf32> -> vector<2x8x32xf32>
    %118 = vector.shape_cast %117 : vector<2x8x32xf32> to vector<16x32xf32>
    %119 = arith.truncf %118 : vector<16x32xf32> to vector<16x32xbf16>
    %120 = vector.extract_strided_slice %32 {offsets = [32, 0], sizes = [32, 32], strides = [1, 1]} : vector<160x128xbf16> to vector<32x32xbf16>
    %cst_32 = arith.constant dense<0.000000e+00> : vector<16x32xf32>
    %121 = tpu.matmul %119, %120, %cst_32 {dimension_numbers = #tpu.dot_dimension_numbers<[1], [0], [0], [1], [0, 0, 1, 1], [], []>} : vector<16x32xbf16>, vector<32x32xbf16>, vector<16x32xf32> -> vector<16x32xf32>
    %122 = vector.extract_strided_slice %35 {offsets = [1, 0], sizes = [1, 32], strides = [1, 1]} : vector<8x128xf32> to vector<1x32xf32>
    %123 = vector.broadcast %122 : vector<1x32xf32> to vector<16x32xf32>
    %124 = arith.addf %121, %123 : vector<16x32xf32>
    %125 = arith.addf %124, %26 : vector<16x32xf32>
    %126 = vector.extract_strided_slice %35 {offsets = [2, 0], sizes = [1, 32], strides = [1, 1]} : vector<8x128xf32> to vector<1x32xf32>
    %127 = vector.extract_strided_slice %35 {offsets = [3, 0], sizes = [1, 32], strides = [1, 1]} : vector<8x128xf32> to vector<1x32xf32>
    %cst_33 = arith.constant dense<0.000000e+00> : vector<16xf32>
    %128 = vector.multi_reduction <add>, %125, %cst_33 [1] : vector<16x32xf32> to vector<16xf32>
    %129 = vector.shape_cast %128 : vector<16xf32> to vector<16x1xf32>
    %cst_34 = arith.constant 3.200000e+01 : f32
    %130 = vector.broadcast %cst_34 : f32 to vector<16x1xf32>
    %131 = arith.divf %129, %130 : vector<16x1xf32>
    %132 = vector.broadcast %131 : vector<16x1xf32> to vector<16x32xf32>
    %133 = arith.subf %125, %132 : vector<16x32xf32>
    %134 = arith.mulf %133, %133 : vector<16x32xf32>
    %cst_35 = arith.constant dense<0.000000e+00> : vector<16xf32>
    %135 = vector.multi_reduction <add>, %134, %cst_35 [1] : vector<16x32xf32> to vector<16xf32>
    %136 = vector.shape_cast %135 : vector<16xf32> to vector<16x1xf32>
    %cst_36 = arith.constant 3.200000e+01 : f32
    %137 = vector.broadcast %cst_36 : f32 to vector<16x1xf32>
    %138 = arith.divf %136, %137 : vector<16x1xf32>
    %139 = vector.broadcast %131 : vector<16x1xf32> to vector<16x32xf32>
    %140 = arith.subf %125, %139 : vector<16x32xf32>
    %cst_37 = arith.constant 9.99999996E-13 : f32
    %141 = vector.broadcast %cst_37 : f32 to vector<16x1xf32>
    %142 = arith.addf %138, %141 : vector<16x1xf32>
    %143 = math.rsqrt %142 : vector<16x1xf32>
    %144 = vector.broadcast %143 : vector<16x1xf32> to vector<16x32xf32>
    %145 = arith.mulf %140, %144 : vector<16x32xf32>
    %146 = vector.broadcast %126 : vector<1x32xf32> to vector<16x32xf32>
    %147 = arith.mulf %145, %146 : vector<16x32xf32>
    %148 = vector.broadcast %127 : vector<1x32xf32> to vector<16x32xf32>
    %149 = arith.addf %147, %148 : vector<16x32xf32>
    %150 = arith.truncf %149 : vector<16x32xf32> to vector<16x32xbf16>
    %151 = vector.extract_strided_slice %32 {offsets = [64, 0], sizes = [32, 64], strides = [1, 1]} : vector<160x128xbf16> to vector<32x64xbf16>
    %cst_38 = arith.constant dense<0.000000e+00> : vector<16x64xf32>
    %152 = tpu.matmul %150, %151, %cst_38 {dimension_numbers = #tpu.dot_dimension_numbers<[1], [0], [0], [1], [0, 0, 1, 1], [], []>} : vector<16x32xbf16>, vector<32x64xbf16>, vector<16x64xf32> -> vector<16x64xf32>
    %153 = vector.extract_strided_slice %35 {offsets = [4, 0], sizes = [1, 64], strides = [1, 1]} : vector<8x128xf32> to vector<1x64xf32>
    %154 = vector.broadcast %153 : vector<1x64xf32> to vector<16x64xf32>
    %155 = arith.addf %152, %154 : vector<16x64xf32>
    %156 = arith.mulf %155, %155 : vector<16x64xf32>
    %157 = arith.mulf %155, %156 : vector<16x64xf32>
    %cst_39 = arith.constant 4.471500e-02 : f32
    %158 = vector.broadcast %cst_39 : f32 to vector<16x64xf32>
    %159 = arith.mulf %158, %157 : vector<16x64xf32>
    %160 = arith.addf %155, %159 : vector<16x64xf32>
    %cst_40 = arith.constant 0.797884583 : f32
    %161 = vector.broadcast %cst_40 : f32 to vector<16x64xf32>
    %162 = arith.mulf %161, %160 : vector<16x64xf32>
    %163 = math.tanh %162 : vector<16x64xf32>
    %cst_41 = arith.constant 1.000000e+00 : f32
    %164 = vector.broadcast %cst_41 : f32 to vector<16x64xf32>
    %165 = arith.addf %164, %163 : vector<16x64xf32>
    %cst_42 = arith.constant 5.000000e-01 : f32
    %166 = vector.broadcast %cst_42 : f32 to vector<16x64xf32>
    %167 = arith.mulf %166, %165 : vector<16x64xf32>
    %168 = arith.mulf %155, %167 : vector<16x64xf32>
    %169 = arith.truncf %168 : vector<16x64xf32> to vector<16x64xbf16>
    %170 = vector.extract_strided_slice %32 {offsets = [96, 0], sizes = [64, 32], strides = [1, 1]} : vector<160x128xbf16> to vector<64x32xbf16>
    %cst_43 = arith.constant dense<0.000000e+00> : vector<16x32xf32>
    %171 = tpu.matmul %169, %170, %cst_43 {dimension_numbers = #tpu.dot_dimension_numbers<[1], [0], [0], [1], [0, 0, 1, 1], [], []>} : vector<16x64xbf16>, vector<64x32xbf16>, vector<16x32xf32> -> vector<16x32xf32>
    %172 = vector.extract_strided_slice %35 {offsets = [5, 0], sizes = [1, 32], strides = [1, 1]} : vector<8x128xf32> to vector<1x32xf32>
    %173 = vector.broadcast %172 : vector<1x32xf32> to vector<16x32xf32>
    %174 = arith.addf %171, %173 : vector<16x32xf32>
    %175 = arith.addf %174, %149 : vector<16x32xf32>
    %176 = vector.extract_strided_slice %35 {offsets = [6, 0], sizes = [1, 32], strides = [1, 1]} : vector<8x128xf32> to vector<1x32xf32>
    %177 = vector.extract_strided_slice %35 {offsets = [7, 0], sizes = [1, 32], strides = [1, 1]} : vector<8x128xf32> to vector<1x32xf32>
    %cst_44 = arith.constant dense<0.000000e+00> : vector<16xf32>
    %178 = vector.multi_reduction <add>, %175, %cst_44 [1] : vector<16x32xf32> to vector<16xf32>
    %179 = vector.shape_cast %178 : vector<16xf32> to vector<16x1xf32>
    %cst_45 = arith.constant 3.200000e+01 : f32
    %180 = vector.broadcast %cst_45 : f32 to vector<16x1xf32>
    %181 = arith.divf %179, %180 : vector<16x1xf32>
    %182 = vector.broadcast %181 : vector<16x1xf32> to vector<16x32xf32>
    %183 = arith.subf %175, %182 : vector<16x32xf32>
    %184 = arith.mulf %183, %183 : vector<16x32xf32>
    %cst_46 = arith.constant dense<0.000000e+00> : vector<16xf32>
    %185 = vector.multi_reduction <add>, %184, %cst_46 [1] : vector<16x32xf32> to vector<16xf32>
    %186 = vector.shape_cast %185 : vector<16xf32> to vector<16x1xf32>
    %cst_47 = arith.constant 3.200000e+01 : f32
    %187 = vector.broadcast %cst_47 : f32 to vector<16x1xf32>
    %188 = arith.divf %186, %187 : vector<16x1xf32>
    %189 = vector.broadcast %181 : vector<16x1xf32> to vector<16x32xf32>
    %190 = arith.subf %175, %189 : vector<16x32xf32>
    %cst_48 = arith.constant 9.99999996E-13 : f32
    %191 = vector.broadcast %cst_48 : f32 to vector<16x1xf32>
    %192 = arith.addf %188, %191 : vector<16x1xf32>
    %193 = math.rsqrt %192 : vector<16x1xf32>
    %194 = vector.broadcast %193 : vector<16x1xf32> to vector<16x32xf32>
    %195 = arith.mulf %190, %194 : vector<16x32xf32>
    %196 = vector.broadcast %176 : vector<1x32xf32> to vector<16x32xf32>
    %197 = arith.mulf %195, %196 : vector<16x32xf32>
    %198 = vector.broadcast %177 : vector<1x32xf32> to vector<16x32xf32>
    %199 = arith.addf %197, %198 : vector<16x32xf32>
    %c1_i32 = arith.constant 1 : i32
    %200 = arith.index_cast %c1_i32 : i32 to index
    %c0_49 = arith.constant 0 : index
    %c0_50 = arith.constant 0 : index
    %201 = vector.load %arg4[%200, %c0_49, %c0_50] : memref<2x160x128xbf16, #tpu.memory_space<vmem>>, vector<1x160x128xbf16>
    %202 = vector.shape_cast %201 : vector<1x160x128xbf16> to vector<160x128xbf16>
    %203 = arith.index_cast %c1_i32 : i32 to index
    %c0_51 = arith.constant 0 : index
    %c0_52 = arith.constant 0 : index
    %204 = vector.load %arg3[%203, %c0_51, %c0_52] : memref<2x8x128xf32, #tpu.memory_space<vmem>>, vector<1x8x128xf32>
    %205 = vector.shape_cast %204 : vector<1x8x128xf32> to vector<8x128xf32>
    %206 = arith.truncf %199 : vector<16x32xf32> to vector<16x32xbf16>
    %207 = vector.extract_strided_slice %202 {offsets = [0, 0], sizes = [32, 96], strides = [1, 1]} : vector<160x128xbf16> to vector<32x96xbf16>
    %cst_53 = arith.constant dense<0.000000e+00> : vector<16x96xf32>
    %208 = tpu.matmul %206, %207, %cst_53 {dimension_numbers = #tpu.dot_dimension_numbers<[1], [0], [0], [1], [0, 0, 1, 1], [], []>} : vector<16x32xbf16>, vector<32x96xbf16>, vector<16x96xf32> -> vector<16x96xf32>
    %209 = vector.extract_strided_slice %205 {offsets = [0, 0], sizes = [1, 96], strides = [1, 1]} : vector<8x128xf32> to vector<1x96xf32>
    %210 = vector.broadcast %209 : vector<1x96xf32> to vector<16x96xf32>
    %211 = arith.addf %208, %210 : vector<16x96xf32>
    %212 = vector.shape_cast %211 : vector<16x96xf32> to vector<2x8x96xf32>
    %213 = vector.extract_strided_slice %212 {offsets = [0, 0, 0], sizes = [2, 8, 32], strides = [1, 1, 1]} : vector<2x8x96xf32> to vector<2x8x32xf32>
    %214 = arith.truncf %213 : vector<2x8x32xf32> to vector<2x8x32xbf16>
    %215 = vector.extract_strided_slice %212 {offsets = [0, 0, 32], sizes = [2, 8, 32], strides = [1, 1, 1]} : vector<2x8x96xf32> to vector<2x8x32xf32>
    %216 = arith.truncf %215 : vector<2x8x32xf32> to vector<2x8x32xbf16>
    %217 = vector.extract_strided_slice %212 {offsets = [0, 0, 64], sizes = [2, 8, 32], strides = [1, 1, 1]} : vector<2x8x96xf32> to vector<2x8x32xf32>
    %218 = arith.truncf %217 : vector<2x8x32xf32> to vector<2x8x32xbf16>
    %219 = vector.extract_strided_slice %214 {offsets = [0, 0, 0], sizes = [2, 8, 8], strides = [1, 1, 1]} : vector<2x8x32xbf16> to vector<2x8x8xbf16>
    %220 = vector.extract_strided_slice %216 {offsets = [0, 0, 0], sizes = [2, 8, 8], strides = [1, 1, 1]} : vector<2x8x32xbf16> to vector<2x8x8xbf16>
    "tpu.trace_start"() <{level = 10 : i32, message = "bqd,bkd->bqk"}> : () -> ()
    %cst_54 = arith.constant dense<0.000000e+00> : vector<2x8x8xf32>
    %221 = tpu.matmul %219, %220, %cst_54 {dimension_numbers = #tpu.dot_dimension_numbers<[2], [2], [1], [1], [0, 0, 0, 1, 1, 1], [0], [0]>} : vector<2x8x8xbf16>, vector<2x8x8xbf16>, vector<2x8x8xf32> -> vector<2x8x8xf32>
    "tpu.trace_stop"() : () -> ()
    %222 = arith.addf %221, %29 : vector<2x8x8xf32>
    %cst_55 = arith.constant dense<0xFF800000> : vector<2x8xf32>
    %223 = vector.multi_reduction <maximumf>, %222, %cst_55 [2] : vector<2x8x8xf32> to vector<2x8xf32>
    %224 = vector.shape_cast %223 : vector<2x8xf32> to vector<2x8x1xf32>
    %225 = vector.broadcast %224 : vector<2x8x1xf32> to vector<2x8x8xf32>
    %226 = arith.subf %222, %225 : vector<2x8x8xf32>
    %227 = math.exp %226 : vector<2x8x8xf32>
    %cst_56 = arith.constant dense<0.000000e+00> : vector<2x8xf32>
    %228 = vector.multi_reduction <add>, %227, %cst_56 [2] : vector<2x8x8xf32> to vector<2x8xf32>
    %229 = vector.shape_cast %228 : vector<2x8xf32> to vector<2x8x1xf32>
    %230 = tpu.reciprocal %229 {approx = true} : vector<2x8x1xf32> -> vector<2x8x1xf32>
    %231 = vector.broadcast %230 : vector<2x8x1xf32> to vector<2x8x8xf32>
    %232 = arith.mulf %227, %231 : vector<2x8x8xf32>
    %233 = arith.truncf %232 : vector<2x8x8xf32> to vector<2x8x8xbf16>
    %234 = vector.extract_strided_slice %218 {offsets = [0, 0, 0], sizes = [2, 8, 8], strides = [1, 1, 1]} : vector<2x8x32xbf16> to vector<2x8x8xbf16>
    "tpu.trace_start"() <{level = 10 : i32, message = "bqk,bkd->bqd"}> : () -> ()
    %cst_57 = arith.constant dense<0.000000e+00> : vector<2x8x8xf32>
    %235 = tpu.matmul %233, %234, %cst_57 {dimension_numbers = #tpu.dot_dimension_numbers<[2], [1], [1], [2], [0, 0, 0, 1, 1, 2], [0], [0]>} : vector<2x8x8xbf16>, vector<2x8x8xbf16>, vector<2x8x8xf32> -> vector<2x8x8xf32>
    "tpu.trace_stop"() : () -> ()
    %236 = vector.extract_strided_slice %214 {offsets = [0, 0, 8], sizes = [2, 8, 8], strides = [1, 1, 1]} : vector<2x8x32xbf16> to vector<2x8x8xbf16>
    %237 = vector.extract_strided_slice %216 {offsets = [0, 0, 8], sizes = [2, 8, 8], strides = [1, 1, 1]} : vector<2x8x32xbf16> to vector<2x8x8xbf16>
    "tpu.trace_start"() <{level = 10 : i32, message = "bqd,bkd->bqk"}> : () -> ()
    %cst_58 = arith.constant dense<0.000000e+00> : vector<2x8x8xf32>
    %238 = tpu.matmul %236, %237, %cst_58 {dimension_numbers = #tpu.dot_dimension_numbers<[2], [2], [1], [1], [0, 0, 0, 1, 1, 1], [0], [0]>} : vector<2x8x8xbf16>, vector<2x8x8xbf16>, vector<2x8x8xf32> -> vector<2x8x8xf32>
    "tpu.trace_stop"() : () -> ()
    %239 = arith.addf %238, %29 : vector<2x8x8xf32>
    %cst_59 = arith.constant dense<0xFF800000> : vector<2x8xf32>
    %240 = vector.multi_reduction <maximumf>, %239, %cst_59 [2] : vector<2x8x8xf32> to vector<2x8xf32>
    %241 = vector.shape_cast %240 : vector<2x8xf32> to vector<2x8x1xf32>
    %242 = vector.broadcast %241 : vector<2x8x1xf32> to vector<2x8x8xf32>
    %243 = arith.subf %239, %242 : vector<2x8x8xf32>
    %244 = math.exp %243 : vector<2x8x8xf32>
    %cst_60 = arith.constant dense<0.000000e+00> : vector<2x8xf32>
    %245 = vector.multi_reduction <add>, %244, %cst_60 [2] : vector<2x8x8xf32> to vector<2x8xf32>
    %246 = vector.shape_cast %245 : vector<2x8xf32> to vector<2x8x1xf32>
    %247 = tpu.reciprocal %246 {approx = true} : vector<2x8x1xf32> -> vector<2x8x1xf32>
    %248 = vector.broadcast %247 : vector<2x8x1xf32> to vector<2x8x8xf32>
    %249 = arith.mulf %244, %248 : vector<2x8x8xf32>
    %250 = arith.truncf %249 : vector<2x8x8xf32> to vector<2x8x8xbf16>
    %251 = vector.extract_strided_slice %218 {offsets = [0, 0, 8], sizes = [2, 8, 8], strides = [1, 1, 1]} : vector<2x8x32xbf16> to vector<2x8x8xbf16>
    "tpu.trace_start"() <{level = 10 : i32, message = "bqk,bkd->bqd"}> : () -> ()
    %cst_61 = arith.constant dense<0.000000e+00> : vector<2x8x8xf32>
    %252 = tpu.matmul %250, %251, %cst_61 {dimension_numbers = #tpu.dot_dimension_numbers<[2], [1], [1], [2], [0, 0, 0, 1, 1, 2], [0], [0]>} : vector<2x8x8xbf16>, vector<2x8x8xbf16>, vector<2x8x8xf32> -> vector<2x8x8xf32>
    "tpu.trace_stop"() : () -> ()
    %253 = vector.extract_strided_slice %214 {offsets = [0, 0, 16], sizes = [2, 8, 8], strides = [1, 1, 1]} : vector<2x8x32xbf16> to vector<2x8x8xbf16>
    %254 = vector.extract_strided_slice %216 {offsets = [0, 0, 16], sizes = [2, 8, 8], strides = [1, 1, 1]} : vector<2x8x32xbf16> to vector<2x8x8xbf16>
    "tpu.trace_start"() <{level = 10 : i32, message = "bqd,bkd->bqk"}> : () -> ()
    %cst_62 = arith.constant dense<0.000000e+00> : vector<2x8x8xf32>
    %255 = tpu.matmul %253, %254, %cst_62 {dimension_numbers = #tpu.dot_dimension_numbers<[2], [2], [1], [1], [0, 0, 0, 1, 1, 1], [0], [0]>} : vector<2x8x8xbf16>, vector<2x8x8xbf16>, vector<2x8x8xf32> -> vector<2x8x8xf32>
    "tpu.trace_stop"() : () -> ()
    %256 = arith.addf %255, %29 : vector<2x8x8xf32>
    %cst_63 = arith.constant dense<0xFF800000> : vector<2x8xf32>
    %257 = vector.multi_reduction <maximumf>, %256, %cst_63 [2] : vector<2x8x8xf32> to vector<2x8xf32>
    %258 = vector.shape_cast %257 : vector<2x8xf32> to vector<2x8x1xf32>
    %259 = vector.broadcast %258 : vector<2x8x1xf32> to vector<2x8x8xf32>
    %260 = arith.subf %256, %259 : vector<2x8x8xf32>
    %261 = math.exp %260 : vector<2x8x8xf32>
    %cst_64 = arith.constant dense<0.000000e+00> : vector<2x8xf32>
    %262 = vector.multi_reduction <add>, %261, %cst_64 [2] : vector<2x8x8xf32> to vector<2x8xf32>
    %263 = vector.shape_cast %262 : vector<2x8xf32> to vector<2x8x1xf32>
    %264 = tpu.reciprocal %263 {approx = true} : vector<2x8x1xf32> -> vector<2x8x1xf32>
    %265 = vector.broadcast %264 : vector<2x8x1xf32> to vector<2x8x8xf32>
    %266 = arith.mulf %261, %265 : vector<2x8x8xf32>
    %267 = arith.truncf %266 : vector<2x8x8xf32> to vector<2x8x8xbf16>
    %268 = vector.extract_strided_slice %218 {offsets = [0, 0, 16], sizes = [2, 8, 8], strides = [1, 1, 1]} : vector<2x8x32xbf16> to vector<2x8x8xbf16>
    "tpu.trace_start"() <{level = 10 : i32, message = "bqk,bkd->bqd"}> : () -> ()
    %cst_65 = arith.constant dense<0.000000e+00> : vector<2x8x8xf32>
    %269 = tpu.matmul %267, %268, %cst_65 {dimension_numbers = #tpu.dot_dimension_numbers<[2], [1], [1], [2], [0, 0, 0, 1, 1, 2], [0], [0]>} : vector<2x8x8xbf16>, vector<2x8x8xbf16>, vector<2x8x8xf32> -> vector<2x8x8xf32>
    "tpu.trace_stop"() : () -> ()
    %270 = vector.extract_strided_slice %214 {offsets = [0, 0, 24], sizes = [2, 8, 8], strides = [1, 1, 1]} : vector<2x8x32xbf16> to vector<2x8x8xbf16>
    %271 = vector.extract_strided_slice %216 {offsets = [0, 0, 24], sizes = [2, 8, 8], strides = [1, 1, 1]} : vector<2x8x32xbf16> to vector<2x8x8xbf16>
    "tpu.trace_start"() <{level = 10 : i32, message = "bqd,bkd->bqk"}> : () -> ()
    %cst_66 = arith.constant dense<0.000000e+00> : vector<2x8x8xf32>
    %272 = tpu.matmul %270, %271, %cst_66 {dimension_numbers = #tpu.dot_dimension_numbers<[2], [2], [1], [1], [0, 0, 0, 1, 1, 1], [0], [0]>} : vector<2x8x8xbf16>, vector<2x8x8xbf16>, vector<2x8x8xf32> -> vector<2x8x8xf32>
    "tpu.trace_stop"() : () -> ()
    %273 = arith.addf %272, %29 : vector<2x8x8xf32>
    %cst_67 = arith.constant dense<0xFF800000> : vector<2x8xf32>
    %274 = vector.multi_reduction <maximumf>, %273, %cst_67 [2] : vector<2x8x8xf32> to vector<2x8xf32>
    %275 = vector.shape_cast %274 : vector<2x8xf32> to vector<2x8x1xf32>
    %276 = vector.broadcast %275 : vector<2x8x1xf32> to vector<2x8x8xf32>
    %277 = arith.subf %273, %276 : vector<2x8x8xf32>
    %278 = math.exp %277 : vector<2x8x8xf32>
    %cst_68 = arith.constant dense<0.000000e+00> : vector<2x8xf32>
    %279 = vector.multi_reduction <add>, %278, %cst_68 [2] : vector<2x8x8xf32> to vector<2x8xf32>
    %280 = vector.shape_cast %279 : vector<2x8xf32> to vector<2x8x1xf32>
    %281 = tpu.reciprocal %280 {approx = true} : vector<2x8x1xf32> -> vector<2x8x1xf32>
    %282 = vector.broadcast %281 : vector<2x8x1xf32> to vector<2x8x8xf32>
    %283 = arith.mulf %278, %282 : vector<2x8x8xf32>
    %284 = arith.truncf %283 : vector<2x8x8xf32> to vector<2x8x8xbf16>
    %285 = vector.extract_strided_slice %218 {offsets = [0, 0, 24], sizes = [2, 8, 8], strides = [1, 1, 1]} : vector<2x8x32xbf16> to vector<2x8x8xbf16>
    "tpu.trace_start"() <{level = 10 : i32, message = "bqk,bkd->bqd"}> : () -> ()
    %cst_69 = arith.constant dense<0.000000e+00> : vector<2x8x8xf32>
    %286 = tpu.matmul %284, %285, %cst_69 {dimension_numbers = #tpu.dot_dimension_numbers<[2], [1], [1], [2], [0, 0, 0, 1, 1, 2], [0], [0]>} : vector<2x8x8xbf16>, vector<2x8x8xbf16>, vector<2x8x8xf32> -> vector<2x8x8xf32>
    "tpu.trace_stop"() : () -> ()
    %287 = tpu.concatenate %235, %252, %269, %286 in 2 : vector<2x8x8xf32>, vector<2x8x8xf32>, vector<2x8x8xf32>, vector<2x8x8xf32> -> vector<2x8x32xf32>
    %288 = vector.shape_cast %287 : vector<2x8x32xf32> to vector<16x32xf32>
    %289 = arith.truncf %288 : vector<16x32xf32> to vector<16x32xbf16>
    %290 = vector.extract_strided_slice %202 {offsets = [32, 0], sizes = [32, 32], strides = [1, 1]} : vector<160x128xbf16> to vector<32x32xbf16>
    %cst_70 = arith.constant dense<0.000000e+00> : vector<16x32xf32>
    %291 = tpu.matmul %289, %290, %cst_70 {dimension_numbers = #tpu.dot_dimension_numbers<[1], [0], [0], [1], [0, 0, 1, 1], [], []>} : vector<16x32xbf16>, vector<32x32xbf16>, vector<16x32xf32> -> vector<16x32xf32>
    %292 = vector.extract_strided_slice %205 {offsets = [1, 0], sizes = [1, 32], strides = [1, 1]} : vector<8x128xf32> to vector<1x32xf32>
    %293 = vector.broadcast %292 : vector<1x32xf32> to vector<16x32xf32>
    %294 = arith.addf %291, %293 : vector<16x32xf32>
    %295 = arith.addf %294, %199 : vector<16x32xf32>
    %296 = vector.extract_strided_slice %205 {offsets = [2, 0], sizes = [1, 32], strides = [1, 1]} : vector<8x128xf32> to vector<1x32xf32>
    %297 = vector.extract_strided_slice %205 {offsets = [3, 0], sizes = [1, 32], strides = [1, 1]} : vector<8x128xf32> to vector<1x32xf32>
    %cst_71 = arith.constant dense<0.000000e+00> : vector<16xf32>
    %298 = vector.multi_reduction <add>, %295, %cst_71 [1] : vector<16x32xf32> to vector<16xf32>
    %299 = vector.shape_cast %298 : vector<16xf32> to vector<16x1xf32>
    %cst_72 = arith.constant 3.200000e+01 : f32
    %300 = vector.broadcast %cst_72 : f32 to vector<16x1xf32>
    %301 = arith.divf %299, %300 : vector<16x1xf32>
    %302 = vector.broadcast %301 : vector<16x1xf32> to vector<16x32xf32>
    %303 = arith.subf %295, %302 : vector<16x32xf32>
    %304 = arith.mulf %303, %303 : vector<16x32xf32>
    %cst_73 = arith.constant dense<0.000000e+00> : vector<16xf32>
    %305 = vector.multi_reduction <add>, %304, %cst_73 [1] : vector<16x32xf32> to vector<16xf32>
    %306 = vector.shape_cast %305 : vector<16xf32> to vector<16x1xf32>
    %cst_74 = arith.constant 3.200000e+01 : f32
    %307 = vector.broadcast %cst_74 : f32 to vector<16x1xf32>
    %308 = arith.divf %306, %307 : vector<16x1xf32>
    %309 = vector.broadcast %301 : vector<16x1xf32> to vector<16x32xf32>
    %310 = arith.subf %295, %309 : vector<16x32xf32>
    %cst_75 = arith.constant 9.99999996E-13 : f32
    %311 = vector.broadcast %cst_75 : f32 to vector<16x1xf32>
    %312 = arith.addf %308, %311 : vector<16x1xf32>
    %313 = math.rsqrt %312 : vector<16x1xf32>
    %314 = vector.broadcast %313 : vector<16x1xf32> to vector<16x32xf32>
    %315 = arith.mulf %310, %314 : vector<16x32xf32>
    %316 = vector.broadcast %296 : vector<1x32xf32> to vector<16x32xf32>
    %317 = arith.mulf %315, %316 : vector<16x32xf32>
    %318 = vector.broadcast %297 : vector<1x32xf32> to vector<16x32xf32>
    %319 = arith.addf %317, %318 : vector<16x32xf32>
    %320 = arith.truncf %319 : vector<16x32xf32> to vector<16x32xbf16>
    %321 = vector.extract_strided_slice %202 {offsets = [64, 0], sizes = [32, 64], strides = [1, 1]} : vector<160x128xbf16> to vector<32x64xbf16>
    %cst_76 = arith.constant dense<0.000000e+00> : vector<16x64xf32>
    %322 = tpu.matmul %320, %321, %cst_76 {dimension_numbers = #tpu.dot_dimension_numbers<[1], [0], [0], [1], [0, 0, 1, 1], [], []>} : vector<16x32xbf16>, vector<32x64xbf16>, vector<16x64xf32> -> vector<16x64xf32>
    %323 = vector.extract_strided_slice %205 {offsets = [4, 0], sizes = [1, 64], strides = [1, 1]} : vector<8x128xf32> to vector<1x64xf32>
    %324 = vector.broadcast %323 : vector<1x64xf32> to vector<16x64xf32>
    %325 = arith.addf %322, %324 : vector<16x64xf32>
    %326 = arith.mulf %325, %325 : vector<16x64xf32>
    %327 = arith.mulf %325, %326 : vector<16x64xf32>
    %cst_77 = arith.constant 4.471500e-02 : f32
    %328 = vector.broadcast %cst_77 : f32 to vector<16x64xf32>
    %329 = arith.mulf %328, %327 : vector<16x64xf32>
    %330 = arith.addf %325, %329 : vector<16x64xf32>
    %cst_78 = arith.constant 0.797884583 : f32
    %331 = vector.broadcast %cst_78 : f32 to vector<16x64xf32>
    %332 = arith.mulf %331, %330 : vector<16x64xf32>
    %333 = math.tanh %332 : vector<16x64xf32>
    %cst_79 = arith.constant 1.000000e+00 : f32
    %334 = vector.broadcast %cst_79 : f32 to vector<16x64xf32>
    %335 = arith.addf %334, %333 : vector<16x64xf32>
    %cst_80 = arith.constant 5.000000e-01 : f32
    %336 = vector.broadcast %cst_80 : f32 to vector<16x64xf32>
    %337 = arith.mulf %336, %335 : vector<16x64xf32>
    %338 = arith.mulf %325, %337 : vector<16x64xf32>
    %339 = arith.truncf %338 : vector<16x64xf32> to vector<16x64xbf16>
    %340 = vector.extract_strided_slice %202 {offsets = [96, 0], sizes = [64, 32], strides = [1, 1]} : vector<160x128xbf16> to vector<64x32xbf16>
    %cst_81 = arith.constant dense<0.000000e+00> : vector<16x32xf32>
    %341 = tpu.matmul %339, %340, %cst_81 {dimension_numbers = #tpu.dot_dimension_numbers<[1], [0], [0], [1], [0, 0, 1, 1], [], []>} : vector<16x64xbf16>, vector<64x32xbf16>, vector<16x32xf32> -> vector<16x32xf32>
    %342 = vector.extract_strided_slice %205 {offsets = [5, 0], sizes = [1, 32], strides = [1, 1]} : vector<8x128xf32> to vector<1x32xf32>
    %343 = vector.broadcast %342 : vector<1x32xf32> to vector<16x32xf32>
    %344 = arith.addf %341, %343 : vector<16x32xf32>
    %345 = arith.addf %344, %319 : vector<16x32xf32>
    %346 = vector.extract_strided_slice %205 {offsets = [6, 0], sizes = [1, 32], strides = [1, 1]} : vector<8x128xf32> to vector<1x32xf32>
    %347 = vector.extract_strided_slice %205 {offsets = [7, 0], sizes = [1, 32], strides = [1, 1]} : vector<8x128xf32> to vector<1x32xf32>
    %cst_82 = arith.constant dense<0.000000e+00> : vector<16xf32>
    %348 = vector.multi_reduction <add>, %345, %cst_82 [1] : vector<16x32xf32> to vector<16xf32>
    %349 = vector.shape_cast %348 : vector<16xf32> to vector<16x1xf32>
    %cst_83 = arith.constant 3.200000e+01 : f32
    %350 = vector.broadcast %cst_83 : f32 to vector<16x1xf32>
    %351 = arith.divf %349, %350 : vector<16x1xf32>
    %352 = vector.broadcast %351 : vector<16x1xf32> to vector<16x32xf32>
    %353 = arith.subf %345, %352 : vector<16x32xf32>
    %354 = arith.mulf %353, %353 : vector<16x32xf32>
    %cst_84 = arith.constant dense<0.000000e+00> : vector<16xf32>
    %355 = vector.multi_reduction <add>, %354, %cst_84 [1] : vector<16x32xf32> to vector<16xf32>
    %356 = vector.shape_cast %355 : vector<16xf32> to vector<16x1xf32>
    %cst_85 = arith.constant 3.200000e+01 : f32
    %357 = vector.broadcast %cst_85 : f32 to vector<16x1xf32>
    %358 = arith.divf %356, %357 : vector<16x1xf32>
    %359 = vector.broadcast %351 : vector<16x1xf32> to vector<16x32xf32>
    %360 = arith.subf %345, %359 : vector<16x32xf32>
    %cst_86 = arith.constant 9.99999996E-13 : f32
    %361 = vector.broadcast %cst_86 : f32 to vector<16x1xf32>
    %362 = arith.addf %358, %361 : vector<16x1xf32>
    %363 = math.rsqrt %362 : vector<16x1xf32>
    %364 = vector.broadcast %363 : vector<16x1xf32> to vector<16x32xf32>
    %365 = arith.mulf %360, %364 : vector<16x32xf32>
    %366 = vector.broadcast %346 : vector<1x32xf32> to vector<16x32xf32>
    %367 = arith.mulf %365, %366 : vector<16x32xf32>
    %368 = vector.broadcast %347 : vector<1x32xf32> to vector<16x32xf32>
    %369 = arith.addf %367, %368 : vector<16x32xf32>
    %c2_i32 = arith.constant 2 : i32
    %370 = vector.shape_cast %369 : vector<16x32xf32> to vector<2x8x32xf32>
    %371 = vector.extract_strided_slice %370 {offsets = [0, 0, 0], sizes = [2, 1, 32], strides = [1, 1, 1]} : vector<2x8x32xf32> to vector<2x1x32xf32>
    %372 = vector.shape_cast %371 : vector<2x1x32xf32> to vector<2x32xf32>
    %373 = arith.truncf %372 : vector<2x32xf32> to vector<2x32xbf16>
    %c0_87 = arith.constant 0 : index
    %c0_88 = arith.constant 0 : index
    %374 = vector.load %arg5[%c0_87, %c0_88] : memref<32x128xbf16, #tpu.memory_space<vmem>>, vector<32x128xbf16>
    %cst_89 = arith.constant dense<0.000000e+00> : vector<2x128xf32>
    %375 = tpu.matmul %373, %374, %cst_89 {dimension_numbers = #tpu.dot_dimension_numbers<[1], [0], [0], [1], [0, 0, 1, 1], [], []>} : vector<2x32xbf16>, vector<32x128xbf16>, vector<2x128xf32> -> vector<2x128xf32>
    %376 = vector.extract_strided_slice %0 {offsets = [2, 0], sizes = [1, 128], strides = [1, 1]} : vector<8x128xf32> to vector<1x128xf32>
    %377 = vector.broadcast %376 : vector<1x128xf32> to vector<2x128xf32>
    %378 = arith.addf %375, %377 : vector<2x128xf32>
    %c0_90 = arith.constant 0 : index
    %c0_91 = arith.constant 0 : index
    %379 = vector.load %arg6[%c0_90, %c0_91] : memref<2x128xf32, #tpu.memory_space<vmem>>, vector<2x128xf32>
    tpu.vector_store %arg6[%c0_90, %c0_91], %378 {strides = array<i32>} : memref<2x128xf32, #tpu.memory_space<vmem>>, vector<2x128xf32>,
    return
  }
}

</mosaic_0001>

<llo_original>
// kernel: _lambda_.1
$region0: #{_lambda_.1}
  #allocation0 [shape = 'u32[]', space=smem, size = 0x4, offset = 0x4, fixed_abs, tag = 'smem constant byte address 0x4 - core index']
  #allocation1 [shape = 'u32[144,128]{1,0:T(1,128)}', space=vmem, size = 0x12000, scoped, tag = 'internal scratch']
  %s0 = inlined_call_operand.vmem [shape: f32[2,8,32], index: 0, kind: input, shape index: {}]
  %s1 = inlined_call_operand.vmem [shape: f32[2,1,8], index: 1, kind: input, shape index: {}]
  %s2 = inlined_call_operand.vmem [shape: f32[8,128], index: 2, kind: input, shape index: {}]
  %s3 = inlined_call_operand.vmem [shape: f32[2,8,128], index: 3, kind: input, shape index: {}]
  %s4 = inlined_call_operand.vmem [shape: bf16[2,160,128], index: 4, kind: input, shape index: {}]
  %s5 = inlined_call_operand.vmem [shape: bf16[32,128], index: 5, kind: input, shape index: {}]
  %s6 = inlined_call_operand.hbm [shape: f32[2,128], index: 6, kind: output, shape index: {}]
  %s7 = sld [smem:[#allocation0]]
  $region34: #{_lambda_.1} parent=0
    _
  %s9 = ssub.s32 1, %s7
  %s10 = scalar_select 0, %s9, %s7
  $region1: #{_lambda_.1} parent=0
    #allocation2 [shape = 'u8[1024]{0}', space=vmem, size = 0x400, scoped, tag = 'output window, operand 0, single buffered']
    #allocation3 [shape = 's32[1]{0}', space=sflag, size = 0x4, scoped, tag = 'scoped memory for _lambda_.1']
    %11 = vsyncpa [#allocation3], 0
    // Predicated region
    $region2: #{_lambda_.1} parent=1 // pred_check
      _
    $region3: #{_lambda_.1} parent=1 // pred_check_branch
      %13 = sbr.rel (0) target = $region5
    $region4: #{_lambda_.1} parent=1 // pred_region
      _
    $region5: #{_lambda_.1} parent=1 // pred_fallthru
      _
    // Predicated region
    $region6: #{_lambda_.1} parent=1 // pred_check
      _
    $region7: #{_lambda_.1} parent=1 // pred_check_branch
      %15 = sbr.rel (0) target = $region9
    $region8: #{_lambda_.1} parent=1 // pred_region
      _
    $region9: #{_lambda_.1} parent=1 // pred_fallthru
      _
    // Predicated region
    $region10: #{_lambda_.1} parent=1 // pred_check
      _
    $region11: #{_lambda_.1} parent=1 // pred_check_branch
      %17 = sbr.rel (0) target = $region13
    $region12: #{_lambda_.1} parent=1 // pred_region
      _
    $region13: #{_lambda_.1} parent=1 // pred_fallthru
      _
    // Predicated region
    $region14: #{_lambda_.1} parent=1 // pred_check
      _
    $region15: #{_lambda_.1} parent=1 // pred_check_branch
      %19 = sbr.rel (0) target = $region17
    $region16: #{_lambda_.1} parent=1 // pred_region
      _
    $region17: #{_lambda_.1} parent=1 // pred_fallthru
      _
    // Predicated region
    $region18: #{_lambda_.1} parent=1 // pred_check
      _
    $region19: #{_lambda_.1} parent=1 // pred_check_branch
      %21 = sbr.rel (0) target = $region21
    $region20: #{_lambda_.1} parent=1 // pred_region
      _
    $region21: #{_lambda_.1} parent=1 // pred_fallthru
      _
    // Predicated region
    $region22: #{_lambda_.1} parent=1 // pred_check
      _
    $region23: #{_lambda_.1} parent=1 // pred_check_branch
      %23 = sbr.rel (0) target = $region25
    $region24: #{_lambda_.1} parent=1 // pred_region
      _
    $region25: #{_lambda_.1} parent=1 // pred_fallthru
      _
    %v25 = vld [vmem:[%s2] sm:$0xff]
    %v26 = vld [vmem:[%s0] sm:$0xff]
    %v27 = vld [vmem:[%s0 + $0x8] sm:$0xff]
    %vm28 = vcmask 261120
    %v29 = vsel %vm28, %v26, 0.0
    %30 = vadd.xlane.f32.xlu0 %v29
    %v31 = vpop.xlane.xlu0 %30
    %v32 = vsel %vm28, %v27, 0.0
    %33 = vadd.xlane.f32.xlu0 %v32
    %v34 = vpop.xlane.xlu0 %33
    %v35 = vrcp.pop 32.0
    %v36 = vmul.f32 %v31, %v35
    %v37 = vmul.f32 %v34, %v35
    %v38 = vsub.f32 %v26, %v36
    %v39 = vsub.f32 %v27, %v37
    %v40 = vmul.f32 %v38, %v38
    %v41 = vmul.f32 %v39, %v39
    %v42 = vsel %vm28, %v40, 0.0
    %43 = vadd.xlane.f32.xlu0 %v42
    %v44 = vpop.xlane.xlu0 %43
    %v45 = vsel %vm28, %v41, 0.0
    %46 = vadd.xlane.f32.xlu0 %v45
    %v47 = vpop.xlane.xlu0 %46
    %v48 = vmul.f32 %v44, %v35
    %v49 = vmul.f32 %v47, %v35
    %v50 = vadd.f32 %v48, 1e-12
    %v51 = vadd.f32 %v49, 1e-12
    %v52 = vrsqrt.pop %v50
    %v53 = vrsqrt.pop %v51
    %v54 = vmul.f32 %v38, %v52
    %v55 = vmul.f32 %v39, %v53
    %v56 = vlaneseq
    %v57 = vshrl.u32 %v56, 7
    %v58 = vsub.s32 0, %v57
    %v59 = vrot.slane %v25, %v58
    %v60 = vmul.f32 %v54, %v59
    %v61 = vmul.f32 %v55, %v59
    %v62 = vlaneseq
    %v63 = vshrl.u32 %v62, 7
    %v64 = vsub.s32 1, %v63
    %v65 = vrot.slane %v25, %v64
    %v66 = vadd.f32 %v60, %v65
    %v67 = vadd.f32 %v61, %v65
    %v68 = vld [vmem:[%s1] sm:$0x1]
    %v69 = vld [vmem:[%s1 + $0x1] sm:$0x1]
    %v72 = vlaneseq
    %v73 = vshrl.u32 %v72, 7
    %v74 = vsub.s32 0, %v73
    %v75 = vrot.slane %v68, %v74
    %v76 = vlaneseq
    %v77 = vshrl.u32 %v76, 7
    %v78 = vsub.s32 0, %v77
    %v79 = vrot.slane %v69, %v78
    %v82 = vld [vmem:[%s4] sm:$0xf]
    %v83 = vld [vmem:[%s4 + $0x4] sm:$0xf]
    %v84 = vld [vmem:[%s4 + $0x8] sm:$0xf]
    %v85 = vld [vmem:[%s4 + $0xc] sm:$0xf]
    %v86 = vld [vmem:[%s4 + $0x10] sm:$0xf]
    %v87 = vld [vmem:[%s4 + $0x14] sm:$0xf]
    %v88 = vld [vmem:[%s4 + $0x18] sm:$0xf]
    %v89 = vld [vmem:[%s4 + $0x1c] sm:$0xf]
    %v90 = vld [vmem:[%s4 + $0x20] sm:$0xf]
    %v91 = vld [vmem:[%s4 + $0x24] sm:$0xf]
    %v92 = vld [vmem:[%s4 + $0x28] sm:$0xf]
    %v93 = vld [vmem:[%s4 + $0x2c] sm:$0xf]
    %v94 = vld [vmem:[%s4 + $0x30] sm:$0xf]
    %v95 = vld [vmem:[%s4 + $0x34] sm:$0xf]
    %v96 = vld [vmem:[%s4 + $0x38] sm:$0xf]
    %v97 = vld [vmem:[%s4 + $0x3c] sm:$0xf]
    %v98 = vld [vmem:[%s4 + $0x40] sm:$0xf]
    %v99 = vld [vmem:[%s4 + $0x44] sm:$0xf]
    %v100 = vld [vmem:[%s4 + $0x48] sm:$0xf]
    %v101 = vld [vmem:[%s4 + $0x4c] sm:$0xf]
    %v102 = vld [vmem:[%s3] sm:$0xff]
    %v103 = vpack.c.bf16 %v67, %v66
    %v104 = vlaneseq
    %v105 = vshrl.u32 %v104, 7
    %v106 = vsub.s32 0, %v105
    %v107 = vrot.slane %v102, %v106
    %v112 = vunpack.c.l.b16 %v82
    %v113 = vunpack.c.l.b16 %v83
    %v114 = vunpack.c.l.b16 %v84
    %v115 = vunpack.c.l.b16 %v85
    %v116 = vpack.c.b16 %v113, %v112
    %v117 = vpack.c.b16 %v115, %v114
    %v121 = vsel %vm28, %v103, 0
    %123 = vmatprep.subr.bf16.mxu0 0
    %124 = vmatpush1.bf16.msra.mxu0 0
    %125 = vmatprep.subr.bf16.mxu0 0
    %126 = vmatpush1.bf16.msra.mxu0 0
    %127 = vmatprep.subr.bf16.mxu0 0
    %128 = vmatpush1.bf16.msra.mxu0 0
    %129 = vmatprep.subr.bf16.mxu0 0
    %130 = vmatpush1.bf16.msra.mxu0 0
    %131 = vmatprep.subr.bf16.mxu0 0
    %132 = vmatpush1.bf16.msra.mxu0 0
    %133 = vmatprep.subr.bf16.mxu0 0
    %134 = vmatpush1.bf16.msra.mxu0 0
    %135 = vmatprep.subr.bf16.mxu0 0
    %136 = vmatpush1.bf16.msra.mxu0 %v117
    %137 = vmatprep.subr.bf16.mxu0 0
    %138 = vmatpush1.bf16.msra.mxu0 %v116
    %139 = vmatprep.subr.bf16.mxu0 0
    %140 = vmatpush2.bf16.msra.mxu0 0
    %141 = vmatprep.subr.bf16.mxu0 0
    %142 = vmatpush2.bf16.msra.mxu0 0
    %143 = vmatprep.subr.bf16.mxu0 0
    %144 = vmatpush2.bf16.msra.mxu0 0
    %145 = vmatprep.subr.bf16.mxu0 0
    %146 = vmatpush2.bf16.msra.mxu0 0
    %147 = vmatprep.subr.bf16.mxu0 0
    %148 = vmatpush2.bf16.msra.mxu0 0
    %149 = vmatprep.subr.bf16.mxu0 0
    %150 = vmatpush2.bf16.msra.mxu0 0
    %151 = vmatprep.subr.bf16.mxu0 0
    %152 = vmatpush2.bf16.msra.mxu0 0
    %153 = vmatprep.subr.bf16.mxu0 0
    %154 = vmatpush2.bf16.msra.mxu0 0
    %155 = vmatprep.mubr.bf16.mxu0 0
    %156 = vmatmul.mubr.bf16.gmra.mxu0 %v121
    %v157 = vpop.f32.mrf.mxu0
    %v158 = vadd.f32 %v107, %v157
    %v159 = vpop.f32.mrf.mxu0
    %v160 = vpop.f32.mrf.mxu0
    %v161 = vadd.f32 %v107, %v160
    %v162 = vpop.f32.mrf.mxu0
    %163 = vdwg.mxu0
    %v164 = vpack.c.bf16 %v158, %v158
    %v165 = vpack.c.bf16 %v161, %v161
    %167 = vrot.lane.b32.xlu0 %v164, 96
    %v168 = vpop.permute.xlu0 %167
    %vm169 = vcmask 64512
    %v171 = vsel %vm169, %v164, 0
    %v174 = vsel %vm169, %v168, 0
    %176 = vmatprep.subr.bf16.mxu0 0
    %177 = vmatpush1.bf16.xpose.msra.mxu0 0
    %178 = vmatprep.subr.bf16.mxu0 0
    %179 = vmatpush1.bf16.xpose.msra.mxu0 0
    %180 = vmatprep.subr.bf16.mxu0 0
    %181 = vmatpush1.bf16.xpose.msra.mxu0 0
    %182 = vmatprep.subr.bf16.mxu0 0
    %183 = vmatpush1.bf16.xpose.msra.mxu0 0
    %184 = vmatprep.subr.bf16.mxu0 0
    %185 = vmatpush1.bf16.xpose.msra.mxu0 0
    %186 = vmatprep.subr.bf16.mxu0 0
    %187 = vmatpush1.bf16.xpose.msra.mxu0 0
    %188 = vmatprep.subr.bf16.mxu0 0
    %189 = vmatpush1.bf16.xpose.msra.mxu0 0
    %190 = vmatprep.subr.bf16.mxu0 0
    %191 = vmatpush1.bf16.xpose.msra.mxu0 %v174
    %192 = vmatprep.subr.bf16.mxu0 0
    %193 = vmatpush2.bf16.xpose.msra.mxu0 0
    %194 = vmatprep.subr.bf16.mxu0 0
    %195 = vmatpush2.bf16.xpose.msra.mxu0 0
    %196 = vmatprep.subr.bf16.mxu0 0
    %197 = vmatpush2.bf16.xpose.msra.mxu0 0
    %198 = vmatprep.subr.bf16.mxu0 0
    %199 = vmatpush2.bf16.xpose.msra.mxu0 0
    %200 = vmatprep.subr.bf16.mxu0 0
    %201 = vmatpush2.bf16.xpose.msra.mxu0 0
    %202 = vmatprep.subr.bf16.mxu0 0
    %203 = vmatpush2.bf16.xpose.msra.mxu0 0
    %204 = vmatprep.subr.bf16.mxu0 0
    %205 = vmatpush2.bf16.xpose.msra.mxu0 0
    %206 = vmatprep.subr.bf16.mxu0 0
    %207 = vmatpush2.bf16.xpose.msra.mxu0 0
    %208 = vmatprep.mubr.bf16.mxu0 0
    %209 = vmatmul.mubr.bf16.gmra.mxu0 %v171
    %v210 = vpop.f32.mrf.mxu0
    %v211 = vadd.f32 %v75, %v210
    %v212 = vpop.f32.mrf.mxu0
    %v213 = vpop.f32.mrf.mxu0
    %v214 = vpop.f32.mrf.mxu0
    %215 = vdwg.mxu0
    %217 = vrot.lane.b32.xlu0 %v165, 96
    %v218 = vpop.permute.xlu0 %217
    %v220 = vsel %vm169, %v165, 0
    %v223 = vsel %vm169, %v218, 0
    %225 = vmatprep.subr.bf16.mxu0 0
    %226 = vmatpush1.bf16.xpose.msra.mxu0 0
    %227 = vmatprep.subr.bf16.mxu0 0
    %228 = vmatpush1.bf16.xpose.msra.mxu0 0
    %229 = vmatprep.subr.bf16.mxu0 0
    %230 = vmatpush1.bf16.xpose.msra.mxu0 0
    %231 = vmatprep.subr.bf16.mxu0 0
    %232 = vmatpush1.bf16.xpose.msra.mxu0 0
    %233 = vmatprep.subr.bf16.mxu0 0
    %234 = vmatpush1.bf16.xpose.msra.mxu0 0
    %235 = vmatprep.subr.bf16.mxu0 0
    %236 = vmatpush1.bf16.xpose.msra.mxu0 0
    %237 = vmatprep.subr.bf16.mxu0 0
    %238 = vmatpush1.bf16.xpose.msra.mxu0 0
    %239 = vmatprep.subr.bf16.mxu0 0
    %240 = vmatpush1.bf16.xpose.msra.mxu0 %v223
    %241 = vmatprep.subr.bf16.mxu0 0
    %242 = vmatpush2.bf16.xpose.msra.mxu0 0
    %243 = vmatprep.subr.bf16.mxu0 0
    %244 = vmatpush2.bf16.xpose.msra.mxu0 0
    %245 = vmatprep.subr.bf16.mxu0 0
    %246 = vmatpush2.bf16.xpose.msra.mxu0 0
    %247 = vmatprep.subr.bf16.mxu0 0
    %248 = vmatpush2.bf16.xpose.msra.mxu0 0
    %249 = vmatprep.subr.bf16.mxu0 0
    %250 = vmatpush2.bf16.xpose.msra.mxu0 0
    %251 = vmatprep.subr.bf16.mxu0 0
    %252 = vmatpush2.bf16.xpose.msra.mxu0 0
    %253 = vmatprep.subr.bf16.mxu0 0
    %254 = vmatpush2.bf16.xpose.msra.mxu0 0
    %255 = vmatprep.subr.bf16.mxu0 0
    %256 = vmatpush2.bf16.xpose.msra.mxu0 0
    %257 = vmatprep.mubr.bf16.mxu0 0
    %258 = vmatmul.mubr.bf16.gmra.mxu0 %v220
    %v259 = vpop.f32.mrf.mxu0
    %v260 = vadd.f32 %v79, %v259
    %v261 = vpop.f32.mrf.mxu0
    %v262 = vpop.f32.mrf.mxu0
    %v263 = vpop.f32.mrf.mxu0
    %264 = vdwg.mxu0
    %v265 = vsel %vm169, %v211, -inf
    %266 = vmax.xlane.f32.xlu0 %v265
    %v267 = vpop.xlane.xlu0 %266
    %v268 = vsel %vm169, %v260, -inf
    %269 = vmax.xlane.f32.xlu0 %v268
    %v270 = vpop.xlane.xlu0 %269
    %v271 = vsub.f32 %v211, %v267
    %v272 = vsub.f32 %v260, %v270
    %v273 = vmul.f32 %v271, 1.442695
    %v274 = vpow.pop %v273
    %v275 = vmul.f32 %v272, 1.442695
    %v276 = vpow.pop %v275
    %v277 = vsel %vm169, %v274, 0.0
    %278 = vadd.xlane.f32.xlu0 %v277
    %v279 = vpop.xlane.xlu0 %278
    %v280 = vsel %vm169, %v276, 0.0
    %281 = vadd.xlane.f32.xlu0 %v280
    %v282 = vpop.xlane.xlu0 %281
    %v283 = vrcp.pop %v279
    %v284 = vrcp.pop %v282
    %v285 = vmul.f32 %v274, %v283
    %v286 = vmul.f32 %v276, %v284
    %v287 = vpack.c.bf16 %v285, %v285
    %v288 = vpack.c.bf16 %v286, %v286
    %289 = vrot.lane.b32.xlu0 %v164, 64
    %v290 = vpop.permute.xlu0 %289
    %v292 = vsel %vm169, %v287, 0
    %vm294 = vcmask 1043456
    %v296 = vsel %vm294, %v290, 0
    %298 = vmatprep.subr.bf16.mxu0 0
    %299 = vmatpush1.bf16.msra.mxu0 0
    %300 = vmatprep.subr.bf16.mxu0 0
    %301 = vmatpush1.bf16.msra.mxu0 0
    %302 = vmatprep.subr.bf16.mxu0 0
    %303 = vmatpush1.bf16.msra.mxu0 0
    %304 = vmatprep.subr.bf16.mxu0 0
    %305 = vmatpush1.bf16.msra.mxu0 0
    %306 = vmatprep.subr.bf16.mxu0 0
    %307 = vmatpush1.bf16.msra.mxu0 0
    %308 = vmatprep.subr.bf16.mxu0 0
    %309 = vmatpush1.bf16.msra.mxu0 0
    %310 = vmatprep.subr.bf16.mxu0 0
    %311 = vmatpush1.bf16.msra.mxu0 0
    %312 = vmatprep.subr.bf16.mxu0 0
    %313 = vmatpush1.bf16.msra.mxu0 %v296
    %314 = vmatprep.subr.bf16.mxu0 0
    %315 = vmatpush2.bf16.msra.mxu0 0
    %316 = vmatprep.subr.bf16.mxu0 0
    %317 = vmatpush2.bf16.msra.mxu0 0
    %318 = vmatprep.subr.bf16.mxu0 0
    %319 = vmatpush2.bf16.msra.mxu0 0
    %320 = vmatprep.subr.bf16.mxu0 0
    %321 = vmatpush2.bf16.msra.mxu0 0
    %322 = vmatprep.subr.bf16.mxu0 0
    %323 = vmatpush2.bf16.msra.mxu0 0
    %324 = vmatprep.subr.bf16.mxu0 0
    %325 = vmatpush2.bf16.msra.mxu0 0
    %326 = vmatprep.subr.bf16.mxu0 0
    %327 = vmatpush2.bf16.msra.mxu0 0
    %328 = vmatprep.subr.bf16.mxu0 0
    %329 = vmatpush2.bf16.msra.mxu0 0
    %330 = vmatprep.mubr.bf16.mxu0 0
    %331 = vmatmul.mubr.bf16.gmra.mxu0 %v292
    %v332 = vpop.f32.mrf.mxu0
    %v333 = vadd.f32 0.0, %v332
    %v334 = vpop.f32.mrf.mxu0
    %v335 = vpop.f32.mrf.mxu0
    %v336 = vpop.f32.mrf.mxu0
    %337 = vdwg.mxu0
    %338 = vrot.lane.b32.xlu0 %v165, 64
    %v339 = vpop.permute.xlu0 %338
    %v341 = vsel %vm169, %v288, 0
    %v344 = vsel %vm294, %v339, 0
    %346 = vmatprep.subr.bf16.mxu0 0
    %347 = vmatpush1.bf16.msra.mxu0 0
    %348 = vmatprep.subr.bf16.mxu0 0
    %349 = vmatpush1.bf16.msra.mxu0 0
    %350 = vmatprep.subr.bf16.mxu0 0
    %351 = vmatpush1.bf16.msra.mxu0 0
    %352 = vmatprep.subr.bf16.mxu0 0
    %353 = vmatpush1.bf16.msra.mxu0 0
    %354 = vmatprep.subr.bf16.mxu0 0
    %355 = vmatpush1.bf16.msra.mxu0 0
    %356 = vmatprep.subr.bf16.mxu0 0
    %357 = vmatpush1.bf16.msra.mxu0 0
    %358 = vmatprep.subr.bf16.mxu0 0
    %359 = vmatpush1.bf16.msra.mxu0 0
    %360 = vmatprep.subr.bf16.mxu0 0
    %361 = vmatpush1.bf16.msra.mxu0 %v344
    %362 = vmatprep.subr.bf16.mxu0 0
    %363 = vmatpush2.bf16.msra.mxu0 0
    %364 = vmatprep.subr.bf16.mxu0 0
    %365 = vmatpush2.bf16.msra.mxu0 0
    %366 = vmatprep.subr.bf16.mxu0 0
    %367 = vmatpush2.bf16.msra.mxu0 0
    %368 = vmatprep.subr.bf16.mxu0 0
    %369 = vmatpush2.bf16.msra.mxu0 0
    %370 = vmatprep.subr.bf16.mxu0 0
    %371 = vmatpush2.bf16.msra.mxu0 0
    %372 = vmatprep.subr.bf16.mxu0 0
    %373 = vmatpush2.bf16.msra.mxu0 0
    %374 = vmatprep.subr.bf16.mxu0 0
    %375 = vmatpush2.bf16.msra.mxu0 0
    %376 = vmatprep.subr.bf16.mxu0 0
    %377 = vmatpush2.bf16.msra.mxu0 0
    %378 = vmatprep.mubr.bf16.mxu0 0
    %379 = vmatmul.mubr.bf16.gmra.mxu0 %v341
    %v380 = vpop.f32.mrf.mxu0
    %v381 = vadd.f32 0.0, %v380
    %v382 = vpop.f32.mrf.mxu0
    %v383 = vpop.f32.mrf.mxu0
    %v384 = vpop.f32.mrf.mxu0
    %385 = vdwg.mxu0
    %386 = vrot.lane.b32.xlu0 %v164, 120
    %v387 = vpop.permute.xlu0 %386
    %388 = vrot.lane.b32.xlu0 %v164, 88
    %v389 = vpop.permute.xlu0 %388
    %v391 = vsel %vm169, %v387, 0
    %v394 = vsel %vm169, %v389, 0
    %396 = vmatprep.subr.bf16.mxu0 0
    %397 = vmatpush1.bf16.xpose.msra.mxu0 0
    %398 = vmatprep.subr.bf16.mxu0 0
    %399 = vmatpush1.bf16.xpose.msra.mxu0 0
    %400 = vmatprep.subr.bf16.mxu0 0
    %401 = vmatpush1.bf16.xpose.msra.mxu0 0
    %402 = vmatprep.subr.bf16.mxu0 0
    %403 = vmatpush1.bf16.xpose.msra.mxu0 0
    %404 = vmatprep.subr.bf16.mxu0 0
    %405 = vmatpush1.bf16.xpose.msra.mxu0 0
    %406 = vmatprep.subr.bf16.mxu0 0
    %407 = vmatpush1.bf16.xpose.msra.mxu0 0
    %408 = vmatprep.subr.bf16.mxu0 0
    %409 = vmatpush1.bf16.xpose.msra.mxu0 0
    %410 = vmatprep.subr.bf16.mxu0 0
    %411 = vmatpush1.bf16.xpose.msra.mxu0 %v394
    %412 = vmatprep.subr.bf16.mxu0 0
    %413 = vmatpush2.bf16.xpose.msra.mxu0 0
    %414 = vmatprep.subr.bf16.mxu0 0
    %415 = vmatpush2.bf16.xpose.msra.mxu0 0
    %416 = vmatprep.subr.bf16.mxu0 0
    %417 = vmatpush2.bf16.xpose.msra.mxu0 0
    %418 = vmatprep.subr.bf16.mxu0 0
    %419 = vmatpush2.bf16.xpose.msra.mxu0 0
    %420 = vmatprep.subr.bf16.mxu0 0
    %421 = vmatpush2.bf16.xpose.msra.mxu0 0
    %422 = vmatprep.subr.bf16.mxu0 0
    %423 = vmatpush2.bf16.xpose.msra.mxu0 0
    %424 = vmatprep.subr.bf16.mxu0 0
    %425 = vmatpush2.bf16.xpose.msra.mxu0 0
    %426 = vmatprep.subr.bf16.mxu0 0
    %427 = vmatpush2.bf16.xpose.msra.mxu0 0
    %428 = vmatprep.mubr.bf16.mxu0 0
    %429 = vmatmul.mubr.bf16.gmra.mxu0 %v391
    %v430 = vpop.f32.mrf.mxu0
    %v431 = vadd.f32 %v75, %v430
    %v432 = vpop.f32.mrf.mxu0
    %v433 = vpop.f32.mrf.mxu0
    %v434 = vpop.f32.mrf.mxu0
    %435 = vdwg.mxu0
    %436 = vrot.lane.b32.xlu0 %v165, 120
    %v437 = vpop.permute.xlu0 %436
    %438 = vrot.lane.b32.xlu0 %v165, 88
    %v439 = vpop.permute.xlu0 %438
    %v441 = vsel %vm169, %v437, 0
    %v444 = vsel %vm169, %v439, 0
    %446 = vmatprep.subr.bf16.mxu0 0
    %447 = vmatpush1.bf16.xpose.msra.mxu0 0
    %448 = vmatprep.subr.bf16.mxu0 0
    %449 = vmatpush1.bf16.xpose.msra.mxu0 0
    %450 = vmatprep.subr.bf16.mxu0 0
    %451 = vmatpush1.bf16.xpose.msra.mxu0 0
    %452 = vmatprep.subr.bf16.mxu0 0
    %453 = vmatpush1.bf16.xpose.msra.mxu0 0
    %454 = vmatprep.subr.bf16.mxu0 0
    %455 = vmatpush1.bf16.xpose.msra.mxu0 0
    %456 = vmatprep.subr.bf16.mxu0 0
    %457 = vmatpush1.bf16.xpose.msra.mxu0 0
    %458 = vmatprep.subr.bf16.mxu0 0
    %459 = vmatpush1.bf16.xpose.msra.mxu0 0
    %460 = vmatprep.subr.bf16.mxu0 0
    %461 = vmatpush1.bf16.xpose.msra.mxu0 %v444
    %462 = vmatprep.subr.bf16.mxu0 0
    %463 = vmatpush2.bf16.xpose.msra.mxu0 0
    %464 = vmatprep.subr.bf16.mxu0 0
    %465 = vmatpush2.bf16.xpose.msra.mxu0 0
    %466 = vmatprep.subr.bf16.mxu0 0
    %467 = vmatpush2.bf16.xpose.msra.mxu0 0
    %468 = vmatprep.subr.bf16.mxu0 0
    %469 = vmatpush2.bf16.xpose.msra.mxu0 0
    %470 = vmatprep.subr.bf16.mxu0 0
    %471 = vmatpush2.bf16.xpose.msra.mxu0 0
    %472 = vmatprep.subr.bf16.mxu0 0
    %473 = vmatpush2.bf16.xpose.msra.mxu0 0
    %474 = vmatprep.subr.bf16.mxu0 0
    %475 = vmatpush2.bf16.xpose.msra.mxu0 0
    %476 = vmatprep.subr.bf16.mxu0 0
    %477 = vmatpush2.bf16.xpose.msra.mxu0 0
    %478 = vmatprep.mubr.bf16.mxu0 0
    %479 = vmatmul.mubr.bf16.gmra.mxu0 %v441
    %v480 = vpop.f32.mrf.mxu0
    %v481 = vadd.f32 %v79, %v480
    %v482 = vpop.f32.mrf.mxu0
    %v483 = vpop.f32.mrf.mxu0
    %v484 = vpop.f32.mrf.mxu0
    %485 = vdwg.mxu0
    %v486 = vsel %vm169, %v431, -inf
    %487 = vmax.xlane.f32.xlu0 %v486
    %v488 = vpop.xlane.xlu0 %487
    %v489 = vsel %vm169, %v481, -inf
    %490 = vmax.xlane.f32.xlu0 %v489
    %v491 = vpop.xlane.xlu0 %490
    %v492 = vsub.f32 %v431, %v488
    %v493 = vsub.f32 %v481, %v491
    %v494 = vmul.f32 %v492, 1.442695
    %v495 = vpow.pop %v494
    %v496 = vmul.f32 %v493, 1.442695
    %v497 = vpow.pop %v496
    %v498 = vsel %vm169, %v495, 0.0
    %499 = vadd.xlane.f32.xlu0 %v498
    %v500 = vpop.xlane.xlu0 %499
    %v501 = vsel %vm169, %v497, 0.0
    %502 = vadd.xlane.f32.xlu0 %v501
    %v503 = vpop.xlane.xlu0 %502
    %v504 = vrcp.pop %v500
    %v505 = vrcp.pop %v503
    %v506 = vmul.f32 %v495, %v504
    %v507 = vmul.f32 %v497, %v505
    %v508 = vpack.c.bf16 %v506, %v506
    %v509 = vpack.c.bf16 %v507, %v507
    %510 = vrot.lane.b32.xlu0 %v164, 56
    %v511 = vpop.permute.xlu0 %510
    %v513 = vsel %vm169, %v508, 0
    %v516 = vsel %vm294, %v511, 0
    %518 = vmatprep.subr.bf16.mxu0 0
    %519 = vmatpush1.bf16.msra.mxu0 0
    %520 = vmatprep.subr.bf16.mxu0 0
    %521 = vmatpush1.bf16.msra.mxu0 0
    %522 = vmatprep.subr.bf16.mxu0 0
    %523 = vmatpush1.bf16.msra.mxu0 0
    %524 = vmatprep.subr.bf16.mxu0 0
    %525 = vmatpush1.bf16.msra.mxu0 0
    %526 = vmatprep.subr.bf16.mxu0 0
    %527 = vmatpush1.bf16.msra.mxu0 0
    %528 = vmatprep.subr.bf16.mxu0 0
    %529 = vmatpush1.bf16.msra.mxu0 0
    %530 = vmatprep.subr.bf16.mxu0 0
    %531 = vmatpush1.bf16.msra.mxu0 0
    %532 = vmatprep.subr.bf16.mxu0 0
    %533 = vmatpush1.bf16.msra.mxu0 %v516
    %534 = vmatprep.subr.bf16.mxu0 0
    %535 = vmatpush2.bf16.msra.mxu0 0
    %536 = vmatprep.subr.bf16.mxu0 0
    %537 = vmatpush2.bf16.msra.mxu0 0
    %538 = vmatprep.subr.bf16.mxu0 0
    %539 = vmatpush2.bf16.msra.mxu0 0
    %540 = vmatprep.subr.bf16.mxu0 0
    %541 = vmatpush2.bf16.msra.mxu0 0
    %542 = vmatprep.subr.bf16.mxu0 0
    %543 = vmatpush2.bf16.msra.mxu0 0
    %544 = vmatprep.subr.bf16.mxu0 0
    %545 = vmatpush2.bf16.msra.mxu0 0
    %546 = vmatprep.subr.bf16.mxu0 0
    %547 = vmatpush2.bf16.msra.mxu0 0
    %548 = vmatprep.subr.bf16.mxu0 0
    %549 = vmatpush2.bf16.msra.mxu0 0
    %550 = vmatprep.mubr.bf16.mxu0 0
    %551 = vmatmul.mubr.bf16.gmra.mxu0 %v513
    %v552 = vpop.f32.mrf.mxu0
    %v553 = vadd.f32 0.0, %v552
    %v554 = vpop.f32.mrf.mxu0
    %v555 = vpop.f32.mrf.mxu0
    %v556 = vpop.f32.mrf.mxu0
    %557 = vdwg.mxu0
    %558 = vrot.lane.b32.xlu0 %v165, 56
    %v559 = vpop.permute.xlu0 %558
    %v561 = vsel %vm169, %v509, 0
    %v564 = vsel %vm294, %v559, 0
    %566 = vmatprep.subr.bf16.mxu0 0
    %567 = vmatpush1.bf16.msra.mxu0 0
    %568 = vmatprep.subr.bf16.mxu0 0
    %569 = vmatpush1.bf16.msra.mxu0 0
    %570 = vmatprep.subr.bf16.mxu0 0
    %571 = vmatpush1.bf16.msra.mxu0 0
    %572 = vmatprep.subr.bf16.mxu0 0
    %573 = vmatpush1.bf16.msra.mxu0 0
    %574 = vmatprep.subr.bf16.mxu0 0
    %575 = vmatpush1.bf16.msra.mxu0 0
    %576 = vmatprep.subr.bf16.mxu0 0
    %577 = vmatpush1.bf16.msra.mxu0 0
    %578 = vmatprep.subr.bf16.mxu0 0
    %579 = vmatpush1.bf16.msra.mxu0 0
    %580 = vmatprep.subr.bf16.mxu0 0
    %581 = vmatpush1.bf16.msra.mxu0 %v564
    %582 = vmatprep.subr.bf16.mxu0 0
    %583 = vmatpush2.bf16.msra.mxu0 0
    %584 = vmatprep.subr.bf16.mxu0 0
    %585 = vmatpush2.bf16.msra.mxu0 0
    %586 = vmatprep.subr.bf16.mxu0 0
    %587 = vmatpush2.bf16.msra.mxu0 0
    %588 = vmatprep.subr.bf16.mxu0 0
    %589 = vmatpush2.bf16.msra.mxu0 0
    %590 = vmatprep.subr.bf16.mxu0 0
    %591 = vmatpush2.bf16.msra.mxu0 0
    %592 = vmatprep.subr.bf16.mxu0 0
    %593 = vmatpush2.bf16.msra.mxu0 0
    %594 = vmatprep.subr.bf16.mxu0 0
    %595 = vmatpush2.bf16.msra.mxu0 0
    %596 = vmatprep.subr.bf16.mxu0 0
    %597 = vmatpush2.bf16.msra.mxu0 0
    %598 = vmatprep.mubr.bf16.mxu0 0
    %599 = vmatmul.mubr.bf16.gmra.mxu0 %v561
    %v600 = vpop.f32.mrf.mxu0
    %v601 = vadd.f32 0.0, %v600
    %v602 = vpop.f32.mrf.mxu0
    %v603 = vpop.f32.mrf.mxu0
    %v604 = vpop.f32.mrf.mxu0
    %605 = vdwg.mxu0
    %606 = vrot.lane.b32.xlu0 %v164, 112
    %v607 = vpop.permute.xlu0 %606
    %608 = vrot.lane.b32.xlu0 %v164, 80
    %v609 = vpop.permute.xlu0 %608
    %v611 = vsel %vm169, %v607, 0
    %v614 = vsel %vm169, %v609, 0
    %616 = vmatprep.subr.bf16.mxu0 0
    %617 = vmatpush1.bf16.xpose.msra.mxu0 0
    %618 = vmatprep.subr.bf16.mxu0 0
    %619 = vmatpush1.bf16.xpose.msra.mxu0 0
    %620 = vmatprep.subr.bf16.mxu0 0
    %621 = vmatpush1.bf16.xpose.msra.mxu0 0
    %622 = vmatprep.subr.bf16.mxu0 0
    %623 = vmatpush1.bf16.xpose.msra.mxu0 0
    %624 = vmatprep.subr.bf16.mxu0 0
    %625 = vmatpush1.bf16.xpose.msra.mxu0 0
    %626 = vmatprep.subr.bf16.mxu0 0
    %627 = vmatpush1.bf16.xpose.msra.mxu0 0
    %628 = vmatprep.subr.bf16.mxu0 0
    %629 = vmatpush1.bf16.xpose.msra.mxu0 0
    %630 = vmatprep.subr.bf16.mxu0 0
    %631 = vmatpush1.bf16.xpose.msra.mxu0 %v614
    %632 = vmatprep.subr.bf16.mxu0 0
    %633 = vmatpush2.bf16.xpose.msra.mxu0 0
    %634 = vmatprep.subr.bf16.mxu0 0
    %635 = vmatpush2.bf16.xpose.msra.mxu0 0
    %636 = vmatprep.subr.bf16.mxu0 0
    %637 = vmatpush2.bf16.xpose.msra.mxu0 0
    %638 = vmatprep.subr.bf16.mxu0 0
    %639 = vmatpush2.bf16.xpose.msra.mxu0 0
    %640 = vmatprep.subr.bf16.mxu0 0
    %641 = vmatpush2.bf16.xpose.msra.mxu0 0
    %642 = vmatprep.subr.bf16.mxu0 0
    %643 = vmatpush2.bf16.xpose.msra.mxu0 0
    %644 = vmatprep.subr.bf16.mxu0 0
    %645 = vmatpush2.bf16.xpose.msra.mxu0 0
    %646 = vmatprep.subr.bf16.mxu0 0
    %647 = vmatpush2.bf16.xpose.msra.mxu0 0
    %648 = vmatprep.mubr.bf16.mxu0 0
    %649 = vmatmul.mubr.bf16.gmra.mxu0 %v611
    %v650 = vpop.f32.mrf.mxu0
    %v651 = vadd.f32 %v75, %v650
    %v652 = vpop.f32.mrf.mxu0
    %v653 = vpop.f32.mrf.mxu0
    %v654 = vpop.f32.mrf.mxu0
    %655 = vdwg.mxu0
    %656 = vrot.lane.b32.xlu0 %v165, 112
    %v657 = vpop.permute.xlu0 %656
    %658 = vrot.lane.b32.xlu0 %v165, 80
    %v659 = vpop.permute.xlu0 %658
    %v661 = vsel %vm169, %v657, 0
    %v664 = vsel %vm169, %v659, 0
    %666 = vmatprep.subr.bf16.mxu0 0
    %667 = vmatpush1.bf16.xpose.msra.mxu0 0
    %668 = vmatprep.subr.bf16.mxu0 0
    %669 = vmatpush1.bf16.xpose.msra.mxu0 0
    %670 = vmatprep.subr.bf16.mxu0 0
    %671 = vmatpush1.bf16.xpose.msra.mxu0 0
    %672 = vmatprep.subr.bf16.mxu0 0
    %673 = vmatpush1.bf16.xpose.msra.mxu0 0
    %674 = vmatprep.subr.bf16.mxu0 0
    %675 = vmatpush1.bf16.xpose.msra.mxu0 0
    %676 = vmatprep.subr.bf16.mxu0 0
    %677 = vmatpush1.bf16.xpose.msra.mxu0 0
    %678 = vmatprep.subr.bf16.mxu0 0
    %679 = vmatpush1.bf16.xpose.msra.mxu0 0
    %680 = vmatprep.subr.bf16.mxu0 0
    %681 = vmatpush1.bf16.xpose.msra.mxu0 %v664
    %682 = vmatprep.subr.bf16.mxu0 0
    %683 = vmatpush2.bf16.xpose.msra.mxu0 0
    %684 = vmatprep.subr.bf16.mxu0 0
    %685 = vmatpush2.bf16.xpose.msra.mxu0 0
    %686 = vmatprep.subr.bf16.mxu0 0
    %687 = vmatpush2.bf16.xpose.msra.mxu0 0
    %688 = vmatprep.subr.bf16.mxu0 0
    %689 = vmatpush2.bf16.xpose.msra.mxu0 0
    %690 = vmatprep.subr.bf16.mxu0 0
    %691 = vmatpush2.bf16.xpose.msra.mxu0 0
    %692 = vmatprep.subr.bf16.mxu0 0
    %693 = vmatpush2.bf16.xpose.msra.mxu0 0
    %694 = vmatprep.subr.bf16.mxu0 0
    %695 = vmatpush2.bf16.xpose.msra.mxu0 0
    %696 = vmatprep.subr.bf16.mxu0 0
    %697 = vmatpush2.bf16.xpose.msra.mxu0 0
    %698 = vmatprep.mubr.bf16.mxu0 0
    %699 = vmatmul.mubr.bf16.gmra.mxu0 %v661
    %v700 = vpop.f32.mrf.mxu0
    %v701 = vadd.f32 %v79, %v700
    %v702 = vpop.f32.mrf.mxu0
    %v703 = vpop.f32.mrf.mxu0
    %v704 = vpop.f32.mrf.mxu0
    %705 = vdwg.mxu0
    %v706 = vsel %vm169, %v651, -inf
    %707 = vmax.xlane.f32.xlu0 %v706
    %v708 = vpop.xlane.xlu0 %707
    %v709 = vsel %vm169, %v701, -inf
    %710 = vmax.xlane.f32.xlu0 %v709
    %v711 = vpop.xlane.xlu0 %710
    %v712 = vsub.f32 %v651, %v708
    %v713 = vsub.f32 %v701, %v711
    %v714 = vmul.f32 %v712, 1.442695
    %v715 = vpow.pop %v714
    %v716 = vmul.f32 %v713, 1.442695
    %v717 = vpow.pop %v716
    %v718 = vsel %vm169, %v715, 0.0
    %719 = vadd.xlane.f32.xlu0 %v718
    %v720 = vpop.xlane.xlu0 %719
    %v721 = vsel %vm169, %v717, 0.0
    %722 = vadd.xlane.f32.xlu0 %v721
    %v723 = vpop.xlane.xlu0 %722
    %v724 = vrcp.pop %v720
    %v725 = vrcp.pop %v723
    %v726 = vmul.f32 %v715, %v724
    %v727 = vmul.f32 %v717, %v725
    %v728 = vpack.c.bf16 %v726, %v726
    %v729 = vpack.c.bf16 %v727, %v727
    %730 = vrot.lane.b32.xlu0 %v164, 48
    %v731 = vpop.permute.xlu0 %730
    %v733 = vsel %vm169, %v728, 0
    %v736 = vsel %vm294, %v731, 0
    %738 = vmatprep.subr.bf16.mxu0 0
    %739 = vmatpush1.bf16.msra.mxu0 0
    %740 = vmatprep.subr.bf16.mxu0 0
    %741 = vmatpush1.bf16.msra.mxu0 0
    %742 = vmatprep.subr.bf16.mxu0 0
    %743 = vmatpush1.bf16.msra.mxu0 0
    %744 = vmatprep.subr.bf16.mxu0 0
    %745 = vmatpush1.bf16.msra.mxu0 0
    %746 = vmatprep.subr.bf16.mxu0 0
    %747 = vmatpush1.bf16.msra.mxu0 0
    %748 = vmatprep.subr.bf16.mxu0 0
    %749 = vmatpush1.bf16.msra.mxu0 0
    %750 = vmatprep.subr.bf16.mxu0 0
    %751 = vmatpush1.bf16.msra.mxu0 0
    %752 = vmatprep.subr.bf16.mxu0 0
    %753 = vmatpush1.bf16.msra.mxu0 %v736
    %754 = vmatprep.subr.bf16.mxu0 0
    %755 = vmatpush2.bf16.msra.mxu0 0
    %756 = vmatprep.subr.bf16.mxu0 0
    %757 = vmatpush2.bf16.msra.mxu0 0
    %758 = vmatprep.subr.bf16.mxu0 0
    %759 = vmatpush2.bf16.msra.mxu0 0
    %760 = vmatprep.subr.bf16.mxu0 0
    %761 = vmatpush2.bf16.msra.mxu0 0
    %762 = vmatprep.subr.bf16.mxu0 0
    %763 = vmatpush2.bf16.msra.mxu0 0
    %764 = vmatprep.subr.bf16.mxu0 0
    %765 = vmatpush2.bf16.msra.mxu0 0
    %766 = vmatprep.subr.bf16.mxu0 0
    %767 = vmatpush2.bf16.msra.mxu0 0
    %768 = vmatprep.subr.bf16.mxu0 0
    %769 = vmatpush2.bf16.msra.mxu0 0
    %770 = vmatprep.mubr.bf16.mxu0 0
    %771 = vmatmul.mubr.bf16.gmra.mxu0 %v733
    %v772 = vpop.f32.mrf.mxu0
    %v773 = vadd.f32 0.0, %v772
    %v774 = vpop.f32.mrf.mxu0
    %v775 = vpop.f32.mrf.mxu0
    %v776 = vpop.f32.mrf.mxu0
    %777 = vdwg.mxu0
    %778 = vrot.lane.b32.xlu0 %v165, 48
    %v779 = vpop.permute.xlu0 %778
    %v781 = vsel %vm169, %v729, 0
    %v784 = vsel %vm294, %v779, 0
    %786 = vmatprep.subr.bf16.mxu0 0
    %787 = vmatpush1.bf16.msra.mxu0 0
    %788 = vmatprep.subr.bf16.mxu0 0
    %789 = vmatpush1.bf16.msra.mxu0 0
    %790 = vmatprep.subr.bf16.mxu0 0
    %791 = vmatpush1.bf16.msra.mxu0 0
    %792 = vmatprep.subr.bf16.mxu0 0
    %793 = vmatpush1.bf16.msra.mxu0 0
    %794 = vmatprep.subr.bf16.mxu0 0
    %795 = vmatpush1.bf16.msra.mxu0 0
    %796 = vmatprep.subr.bf16.mxu0 0
    %797 = vmatpush1.bf16.msra.mxu0 0
    %798 = vmatprep.subr.bf16.mxu0 0
    %799 = vmatpush1.bf16.msra.mxu0 0
    %800 = vmatprep.subr.bf16.mxu0 0
    %801 = vmatpush1.bf16.msra.mxu0 %v784
    %802 = vmatprep.subr.bf16.mxu0 0
    %803 = vmatpush2.bf16.msra.mxu0 0
    %804 = vmatprep.subr.bf16.mxu0 0
    %805 = vmatpush2.bf16.msra.mxu0 0
    %806 = vmatprep.subr.bf16.mxu0 0
    %807 = vmatpush2.bf16.msra.mxu0 0
    %808 = vmatprep.subr.bf16.mxu0 0
    %809 = vmatpush2.bf16.msra.mxu0 0
    %810 = vmatprep.subr.bf16.mxu0 0
    %811 = vmatpush2.bf16.msra.mxu0 0
    %812 = vmatprep.subr.bf16.mxu0 0
    %813 = vmatpush2.bf16.msra.mxu0 0
    %814 = vmatprep.subr.bf16.mxu0 0
    %815 = vmatpush2.bf16.msra.mxu0 0
    %816 = vmatprep.subr.bf16.mxu0 0
    %817 = vmatpush2.bf16.msra.mxu0 0
    %818 = vmatprep.mubr.bf16.mxu0 0
    %819 = vmatmul.mubr.bf16.gmra.mxu0 %v781
    %v820 = vpop.f32.mrf.mxu0
    %v821 = vadd.f32 0.0, %v820
    %v822 = vpop.f32.mrf.mxu0
    %v823 = vpop.f32.mrf.mxu0
    %v824 = vpop.f32.mrf.mxu0
    %825 = vdwg.mxu0
    %826 = vrot.lane.b32.xlu0 %v164, 104
    %v827 = vpop.permute.xlu0 %826
    %828 = vrot.lane.b32.xlu0 %v164, 72
    %v829 = vpop.permute.xlu0 %828
    %v831 = vsel %vm169, %v827, 0
    %v834 = vsel %vm169, %v829, 0
    %836 = vmatprep.subr.bf16.mxu0 0
    %837 = vmatpush1.bf16.xpose.msra.mxu0 0
    %838 = vmatprep.subr.bf16.mxu0 0
    %839 = vmatpush1.bf16.xpose.msra.mxu0 0
    %840 = vmatprep.subr.bf16.mxu0 0
    %841 = vmatpush1.bf16.xpose.msra.mxu0 0
    %842 = vmatprep.subr.bf16.mxu0 0
    %843 = vmatpush1.bf16.xpose.msra.mxu0 0
    %844 = vmatprep.subr.bf16.mxu0 0
    %845 = vmatpush1.bf16.xpose.msra.mxu0 0
    %846 = vmatprep.subr.bf16.mxu0 0
    %847 = vmatpush1.bf16.xpose.msra.mxu0 0
    %848 = vmatprep.subr.bf16.mxu0 0
    %849 = vmatpush1.bf16.xpose.msra.mxu0 0
    %850 = vmatprep.subr.bf16.mxu0 0
    %851 = vmatpush1.bf16.xpose.msra.mxu0 %v834
    %852 = vmatprep.subr.bf16.mxu0 0
    %853 = vmatpush2.bf16.xpose.msra.mxu0 0
    %854 = vmatprep.subr.bf16.mxu0 0
    %855 = vmatpush2.bf16.xpose.msra.mxu0 0
    %856 = vmatprep.subr.bf16.mxu0 0
    %857 = vmatpush2.bf16.xpose.msra.mxu0 0
    %858 = vmatprep.subr.bf16.mxu0 0
    %859 = vmatpush2.bf16.xpose.msra.mxu0 0
    %860 = vmatprep.subr.bf16.mxu0 0
    %861 = vmatpush2.bf16.xpose.msra.mxu0 0
    %862 = vmatprep.subr.bf16.mxu0 0
    %863 = vmatpush2.bf16.xpose.msra.mxu0 0
    %864 = vmatprep.subr.bf16.mxu0 0
    %865 = vmatpush2.bf16.xpose.msra.mxu0 0
    %866 = vmatprep.subr.bf16.mxu0 0
    %867 = vmatpush2.bf16.xpose.msra.mxu0 0
    %868 = vmatprep.mubr.bf16.mxu0 0
    %869 = vmatmul.mubr.bf16.gmra.mxu0 %v831
    %v870 = vpop.f32.mrf.mxu0
    %v871 = vadd.f32 %v75, %v870
    %v872 = vpop.f32.mrf.mxu0
    %v873 = vpop.f32.mrf.mxu0
    %v874 = vpop.f32.mrf.mxu0
    %875 = vdwg.mxu0
    %876 = vrot.lane.b32.xlu0 %v165, 104
    %v877 = vpop.permute.xlu0 %876
    %878 = vrot.lane.b32.xlu0 %v165, 72
    %v879 = vpop.permute.xlu0 %878
    %v881 = vsel %vm169, %v877, 0
    %v884 = vsel %vm169, %v879, 0
    %886 = vmatprep.subr.bf16.mxu0 0
    %887 = vmatpush1.bf16.xpose.msra.mxu0 0
    %888 = vmatprep.subr.bf16.mxu0 0
    %889 = vmatpush1.bf16.xpose.msra.mxu0 0
    %890 = vmatprep.subr.bf16.mxu0 0
    %891 = vmatpush1.bf16.xpose.msra.mxu0 0
    %892 = vmatprep.subr.bf16.mxu0 0
    %893 = vmatpush1.bf16.xpose.msra.mxu0 0
    %894 = vmatprep.subr.bf16.mxu0 0
    %895 = vmatpush1.bf16.xpose.msra.mxu0 0
    %896 = vmatprep.subr.bf16.mxu0 0
    %897 = vmatpush1.bf16.xpose.msra.mxu0 0
    %898 = vmatprep.subr.bf16.mxu0 0
    %899 = vmatpush1.bf16.xpose.msra.mxu0 0
    %900 = vmatprep.subr.bf16.mxu0 0
    %901 = vmatpush1.bf16.xpose.msra.mxu0 %v884
    %902 = vmatprep.subr.bf16.mxu0 0
    %903 = vmatpush2.bf16.xpose.msra.mxu0 0
    %904 = vmatprep.subr.bf16.mxu0 0
    %905 = vmatpush2.bf16.xpose.msra.mxu0 0
    %906 = vmatprep.subr.bf16.mxu0 0
    %907 = vmatpush2.bf16.xpose.msra.mxu0 0
    %908 = vmatprep.subr.bf16.mxu0 0
    %909 = vmatpush2.bf16.xpose.msra.mxu0 0
    %910 = vmatprep.subr.bf16.mxu0 0
    %911 = vmatpush2.bf16.xpose.msra.mxu0 0
    %912 = vmatprep.subr.bf16.mxu0 0
    %913 = vmatpush2.bf16.xpose.msra.mxu0 0
    %914 = vmatprep.subr.bf16.mxu0 0
    %915 = vmatpush2.bf16.xpose.msra.mxu0 0
    %916 = vmatprep.subr.bf16.mxu0 0
    %917 = vmatpush2.bf16.xpose.msra.mxu0 0
    %918 = vmatprep.mubr.bf16.mxu0 0
    %919 = vmatmul.mubr.bf16.gmra.mxu0 %v881
    %v920 = vpop.f32.mrf.mxu0
    %v921 = vadd.f32 %v79, %v920
    %v922 = vpop.f32.mrf.mxu0
    %v923 = vpop.f32.mrf.mxu0
    %v924 = vpop.f32.mrf.mxu0
    %925 = vdwg.mxu0
    %v926 = vsel %vm169, %v871, -inf
    %927 = vmax.xlane.f32.xlu0 %v926
    %v928 = vpop.xlane.xlu0 %927
    %v929 = vsel %vm169, %v921, -inf
    %930 = vmax.xlane.f32.xlu0 %v929
    %v931 = vpop.xlane.xlu0 %930
    %v932 = vsub.f32 %v871, %v928
    %v933 = vsub.f32 %v921, %v931
    %v934 = vmul.f32 %v932, 1.442695
    %v935 = vpow.pop %v934
    %v936 = vmul.f32 %v933, 1.442695
    %v937 = vpow.pop %v936
    %v938 = vsel %vm169, %v935, 0.0
    %939 = vadd.xlane.f32.xlu0 %v938
    %v940 = vpop.xlane.xlu0 %939
    %v941 = vsel %vm169, %v937, 0.0
    %942 = vadd.xlane.f32.xlu0 %v941
    %v943 = vpop.xlane.xlu0 %942
    %v944 = vrcp.pop %v940
    %v945 = vrcp.pop %v943
    %v946 = vmul.f32 %v935, %v944
    %v947 = vmul.f32 %v937, %v945
    %v948 = vpack.c.bf16 %v946, %v946
    %v949 = vpack.c.bf16 %v947, %v947
    %950 = vrot.lane.b32.xlu0 %v164, 40
    %v951 = vpop.permute.xlu0 %950
    %v953 = vsel %vm169, %v948, 0
    %v956 = vsel %vm294, %v951, 0
    %958 = vmatprep.subr.bf16.mxu0 0
    %959 = vmatpush1.bf16.msra.mxu0 0
    %960 = vmatprep.subr.bf16.mxu0 0
    %961 = vmatpush1.bf16.msra.mxu0 0
    %962 = vmatprep.subr.bf16.mxu0 0
    %963 = vmatpush1.bf16.msra.mxu0 0
    %964 = vmatprep.subr.bf16.mxu0 0
    %965 = vmatpush1.bf16.msra.mxu0 0
    %966 = vmatprep.subr.bf16.mxu0 0
    %967 = vmatpush1.bf16.msra.mxu0 0
    %968 = vmatprep.subr.bf16.mxu0 0
    %969 = vmatpush1.bf16.msra.mxu0 0
    %970 = vmatprep.subr.bf16.mxu0 0
    %971 = vmatpush1.bf16.msra.mxu0 0
    %972 = vmatprep.subr.bf16.mxu0 0
    %973 = vmatpush1.bf16.msra.mxu0 %v956
    %974 = vmatprep.subr.bf16.mxu0 0
    %975 = vmatpush2.bf16.msra.mxu0 0
    %976 = vmatprep.subr.bf16.mxu0 0
    %977 = vmatpush2.bf16.msra.mxu0 0
    %978 = vmatprep.subr.bf16.mxu0 0
    %979 = vmatpush2.bf16.msra.mxu0 0
    %980 = vmatprep.subr.bf16.mxu0 0
    %981 = vmatpush2.bf16.msra.mxu0 0
    %982 = vmatprep.subr.bf16.mxu0 0
    %983 = vmatpush2.bf16.msra.mxu0 0
    %984 = vmatprep.subr.bf16.mxu0 0
    %985 = vmatpush2.bf16.msra.mxu0 0
    %986 = vmatprep.subr.bf16.mxu0 0
    %987 = vmatpush2.bf16.msra.mxu0 0
    %988 = vmatprep.subr.bf16.mxu0 0
    %989 = vmatpush2.bf16.msra.mxu0 0
    %990 = vmatprep.mubr.bf16.mxu0 0
    %991 = vmatmul.mubr.bf16.gmra.mxu0 %v953
    %v992 = vpop.f32.mrf.mxu0
    %v993 = vadd.f32 0.0, %v992
    %v994 = vpop.f32.mrf.mxu0
    %v995 = vpop.f32.mrf.mxu0
    %v996 = vpop.f32.mrf.mxu0
    %997 = vdwg.mxu0
    %998 = vrot.lane.b32.xlu0 %v165, 40
    %v999 = vpop.permute.xlu0 %998
    %v1001 = vsel %vm169, %v949, 0
    %v1004 = vsel %vm294, %v999, 0
    %1006 = vmatprep.subr.bf16.mxu0 0
    %1007 = vmatpush1.bf16.msra.mxu0 0
    %1008 = vmatprep.subr.bf16.mxu0 0
    %1009 = vmatpush1.bf16.msra.mxu0 0
    %1010 = vmatprep.subr.bf16.mxu0 0
    %1011 = vmatpush1.bf16.msra.mxu0 0
    %1012 = vmatprep.subr.bf16.mxu0 0
    %1013 = vmatpush1.bf16.msra.mxu0 0
    %1014 = vmatprep.subr.bf16.mxu0 0
    %1015 = vmatpush1.bf16.msra.mxu0 0
    %1016 = vmatprep.subr.bf16.mxu0 0
    %1017 = vmatpush1.bf16.msra.mxu0 0
    %1018 = vmatprep.subr.bf16.mxu0 0
    %1019 = vmatpush1.bf16.msra.mxu0 0
    %1020 = vmatprep.subr.bf16.mxu0 0
    %1021 = vmatpush1.bf16.msra.mxu0 %v1004
    %1022 = vmatprep.subr.bf16.mxu0 0
    %1023 = vmatpush2.bf16.msra.mxu0 0
    %1024 = vmatprep.subr.bf16.mxu0 0
    %1025 = vmatpush2.bf16.msra.mxu0 0
    %1026 = vmatprep.subr.bf16.mxu0 0
    %1027 = vmatpush2.bf16.msra.mxu0 0
    %1028 = vmatprep.subr.bf16.mxu0 0
    %1029 = vmatpush2.bf16.msra.mxu0 0
    %1030 = vmatprep.subr.bf16.mxu0 0
    %1031 = vmatpush2.bf16.msra.mxu0 0
    %1032 = vmatprep.subr.bf16.mxu0 0
    %1033 = vmatpush2.bf16.msra.mxu0 0
    %1034 = vmatprep.subr.bf16.mxu0 0
    %1035 = vmatpush2.bf16.msra.mxu0 0
    %1036 = vmatprep.subr.bf16.mxu0 0
    %1037 = vmatpush2.bf16.msra.mxu0 0
    %1038 = vmatprep.mubr.bf16.mxu0 0
    %1039 = vmatmul.mubr.bf16.gmra.mxu0 %v1001
    %v1040 = vpop.f32.mrf.mxu0
    %v1041 = vadd.f32 0.0, %v1040
    %v1042 = vpop.f32.mrf.mxu0
    %v1043 = vpop.f32.mrf.mxu0
    %v1044 = vpop.f32.mrf.mxu0
    %1045 = vdwg.mxu0
    %1048 = vrot.lane.b32.xlu0 %v553, 8
    %v1049 = vpop.permute.xlu0 %1048
    %1050 = vrot.lane.b32.xlu0 %v601, 8
    %v1051 = vpop.permute.xlu0 %1050
    %1056 = vrot.lane.b32.xlu0 %v773, 16
    %v1057 = vpop.permute.xlu0 %1056
    %1058 = vrot.lane.b32.xlu0 %v821, 16
    %v1059 = vpop.permute.xlu0 %1058
    %1064 = vrot.lane.b32.xlu0 %v993, 24
    %v1065 = vpop.permute.xlu0 %1064
    %1066 = vrot.lane.b32.xlu0 %v1041, 24
    %v1067 = vpop.permute.xlu0 %1066
    %v1070 = vsel %vm169, %v333, %v1049
    %v1071 = vsel %vm169, %v381, %v1051
    %vm1072 = vcmask 130048
    %v1073 = vsel %vm1072, %v1070, %v1057
    %v1074 = vsel %vm1072, %v1071, %v1059
    %vm1075 = vcmask 195584
    %v1076 = vsel %vm1075, %v1073, %v1065
    %v1077 = vsel %vm1075, %v1074, %v1067
    %v1078 = vpack.c.bf16 %v1077, %v1076
    %v1079 = vlaneseq
    %v1080 = vshrl.u32 %v1079, 7
    %v1081 = vsub.s32 1, %v1080
    %v1082 = vrot.slane %v102, %v1081
    %v1087 = vunpack.c.l.b16 %v86
    %v1088 = vunpack.c.l.b16 %v87
    %v1089 = vunpack.c.l.b16 %v88
    %v1090 = vunpack.c.l.b16 %v89
    %v1091 = vpack.c.b16 %v1088, %v1087
    %v1092 = vpack.c.b16 %v1090, %v1089
    %v1096 = vsel %vm28, %v1078, 0
    %1098 = vmatprep.subr.bf16.mxu0 0
    %1099 = vmatpush1.bf16.msra.mxu0 0
    %1100 = vmatprep.subr.bf16.mxu0 0
    %1101 = vmatpush1.bf16.msra.mxu0 0
    %1102 = vmatprep.subr.bf16.mxu0 0
    %1103 = vmatpush1.bf16.msra.mxu0 0
    %1104 = vmatprep.subr.bf16.mxu0 0
    %1105 = vmatpush1.bf16.msra.mxu0 0
    %1106 = vmatprep.subr.bf16.mxu0 0
    %1107 = vmatpush1.bf16.msra.mxu0 0
    %1108 = vmatprep.subr.bf16.mxu0 0
    %1109 = vmatpush1.bf16.msra.mxu0 0
    %1110 = vmatprep.subr.bf16.mxu0 0
    %1111 = vmatpush1.bf16.msra.mxu0 %v1092
    %1112 = vmatprep.subr.bf16.mxu0 0
    %1113 = vmatpush1.bf16.msra.mxu0 %v1091
    %1114 = vmatprep.subr.bf16.mxu0 0
    %1115 = vmatpush2.bf16.msra.mxu0 0
    %1116 = vmatprep.subr.bf16.mxu0 0
    %1117 = vmatpush2.bf16.msra.mxu0 0
    %1118 = vmatprep.subr.bf16.mxu0 0
    %1119 = vmatpush2.bf16.msra.mxu0 0
    %1120 = vmatprep.subr.bf16.mxu0 0
    %1121 = vmatpush2.bf16.msra.mxu0 0
    %1122 = vmatprep.subr.bf16.mxu0 0
    %1123 = vmatpush2.bf16.msra.mxu0 0
    %1124 = vmatprep.subr.bf16.mxu0 0
    %1125 = vmatpush2.bf16.msra.mxu0 0
    %1126 = vmatprep.subr.bf16.mxu0 0
    %1127 = vmatpush2.bf16.msra.mxu0 0
    %1128 = vmatprep.subr.bf16.mxu0 0
    %1129 = vmatpush2.bf16.msra.mxu0 0
    %1130 = vmatprep.mubr.bf16.mxu0 0
    %1131 = vmatmul.mubr.bf16.gmra.mxu0 %v1096
    %v1132 = vpop.f32.mrf.mxu0
    %v1133 = vadd.f32 %v1082, %v1132
    %v1134 = vpop.f32.mrf.mxu0
    %v1135 = vpop.f32.mrf.mxu0
    %v1136 = vadd.f32 %v1082, %v1135
    %v1137 = vpop.f32.mrf.mxu0
    %1138 = vdwg.mxu0
    %v1139 = vadd.f32 %v1133, %v66
    %v1140 = vadd.f32 %v1136, %v67
    %v1141 = vsel %vm28, %v1139, 0.0
    %1142 = vadd.xlane.f32.xlu0 %v1141
    %v1143 = vpop.xlane.xlu0 %1142
    %v1144 = vsel %vm28, %v1140, 0.0
    %1145 = vadd.xlane.f32.xlu0 %v1144
    %v1146 = vpop.xlane.xlu0 %1145
    %v1147 = vmul.f32 %v1143, %v35
    %v1148 = vmul.f32 %v1146, %v35
    %v1149 = vsub.f32 %v1139, %v1147
    %v1150 = vsub.f32 %v1140, %v1148
    %v1151 = vmul.f32 %v1149, %v1149
    %v1152 = vmul.f32 %v1150, %v1150
    %v1153 = vsel %vm28, %v1151, 0.0
    %1154 = vadd.xlane.f32.xlu0 %v1153
    %v1155 = vpop.xlane.xlu0 %1154
    %v1156 = vsel %vm28, %v1152, 0.0
    %1157 = vadd.xlane.f32.xlu0 %v1156
    %v1158 = vpop.xlane.xlu0 %1157
    %v1159 = vmul.f32 %v1155, %v35
    %v1160 = vmul.f32 %v1158, %v35
    %v1161 = vadd.f32 %v1159, 1e-12
    %v1162 = vadd.f32 %v1160, 1e-12
    %v1163 = vrsqrt.pop %v1161
    %v1164 = vrsqrt.pop %v1162
    %v1165 = vmul.f32 %v1149, %v1163
    %v1166 = vmul.f32 %v1150, %v1164
    %v1167 = vlaneseq
    %v1168 = vshrl.u32 %v1167, 7
    %v1169 = vsub.s32 2, %v1168
    %v1170 = vrot.slane %v102, %v1169
    %v1171 = vmul.f32 %v1165, %v1170
    %v1172 = vmul.f32 %v1166, %v1170
    %v1173 = vlaneseq
    %v1174 = vshrl.u32 %v1173, 7
    %v1175 = vsub.s32 3, %v1174
    %v1176 = vrot.slane %v102, %v1175
    %v1177 = vadd.f32 %v1171, %v1176
    %v1178 = vadd.f32 %v1172, %v1176
    %v1179 = vpack.c.bf16 %v1178, %v1177
    %v1180 = vlaneseq
    %v1181 = vshrl.u32 %v1180, 7
    %v1182 = vsub.s32 4, %v1181
    %v1183 = vrot.slane %v102, %v1182
    %v1188 = vunpack.c.l.b16 %v90
    %v1189 = vunpack.c.l.b16 %v91
    %v1190 = vunpack.c.l.b16 %v92
    %v1191 = vunpack.c.l.b16 %v93
    %v1192 = vpack.c.b16 %v1189, %v1188
    %v1193 = vpack.c.b16 %v1191, %v1190
    %v1197 = vsel %vm28, %v1179, 0
    %1199 = vmatprep.subr.bf16.mxu0 0
    %1200 = vmatpush1.bf16.msra.mxu0 0
    %1201 = vmatprep.subr.bf16.mxu0 0
    %1202 = vmatpush1.bf16.msra.mxu0 0
    %1203 = vmatprep.subr.bf16.mxu0 0
    %1204 = vmatpush1.bf16.msra.mxu0 0
    %1205 = vmatprep.subr.bf16.mxu0 0
    %1206 = vmatpush1.bf16.msra.mxu0 0
    %1207 = vmatprep.subr.bf16.mxu0 0
    %1208 = vmatpush1.bf16.msra.mxu0 0
    %1209 = vmatprep.subr.bf16.mxu0 0
    %1210 = vmatpush1.bf16.msra.mxu0 0
    %1211 = vmatprep.subr.bf16.mxu0 0
    %1212 = vmatpush1.bf16.msra.mxu0 %v1193
    %1213 = vmatprep.subr.bf16.mxu0 0
    %1214 = vmatpush1.bf16.msra.mxu0 %v1192
    %1215 = vmatprep.subr.bf16.mxu0 0
    %1216 = vmatpush2.bf16.msra.mxu0 0
    %1217 = vmatprep.subr.bf16.mxu0 0
    %1218 = vmatpush2.bf16.msra.mxu0 0
    %1219 = vmatprep.subr.bf16.mxu0 0
    %1220 = vmatpush2.bf16.msra.mxu0 0
    %1221 = vmatprep.subr.bf16.mxu0 0
    %1222 = vmatpush2.bf16.msra.mxu0 0
    %1223 = vmatprep.subr.bf16.mxu0 0
    %1224 = vmatpush2.bf16.msra.mxu0 0
    %1225 = vmatprep.subr.bf16.mxu0 0
    %1226 = vmatpush2.bf16.msra.mxu0 0
    %1227 = vmatprep.subr.bf16.mxu0 0
    %1228 = vmatpush2.bf16.msra.mxu0 0
    %1229 = vmatprep.subr.bf16.mxu0 0
    %1230 = vmatpush2.bf16.msra.mxu0 0
    %1231 = vmatprep.mubr.bf16.mxu0 0
    %1232 = vmatmul.mubr.bf16.gmra.mxu0 %v1197
    %v1233 = vpop.f32.mrf.mxu0
    %v1234 = vadd.f32 %v1183, %v1233
    %v1235 = vpop.f32.mrf.mxu0
    %v1236 = vpop.f32.mrf.mxu0
    %v1237 = vadd.f32 %v1183, %v1236
    %v1238 = vpop.f32.mrf.mxu0
    %1239 = vdwg.mxu0
    %v1240 = vmul.f32 %v1234, %v1234
    %v1241 = vmul.f32 %v1237, %v1237
    %v1242 = vmul.f32 %v1234, %v1240
    %v1243 = vmul.f32 %v1237, %v1241
    %v1244 = vmul.f32 %v1242, 0.044715
    %v1245 = vmul.f32 %v1243, 0.044715
    %v1246 = vadd.f32 %v1234, %v1244
    %v1247 = vadd.f32 %v1237, %v1245
    %v1248 = vmul.f32 %v1246, 0.7978846
    %v1249 = vmul.f32 %v1247, 0.7978846
    %v1250 = vtanh.pop %v1248
    %v1251 = vtanh.pop %v1249
    %v1252 = vadd.f32 %v1250, 1.0
    %v1253 = vadd.f32 %v1251, 1.0
    %v1254 = vmul.f32 %v1252, 0.5
    %v1255 = vmul.f32 %v1253, 0.5
    %v1256 = vmul.f32 %v1234, %v1254
    %v1257 = vmul.f32 %v1237, %v1255
    %v1258 = vpack.c.bf16 %v1257, %v1256
    %v1259 = vlaneseq
    %v1260 = vshrl.u32 %v1259, 7
    %v1261 = vsub.s32 5, %v1260
    %v1262 = vrot.slane %v102, %v1261
    %v1271 = vunpack.c.l.b16 %v94
    %v1272 = vunpack.c.l.b16 %v95
    %v1273 = vunpack.c.l.b16 %v96
    %v1274 = vunpack.c.l.b16 %v97
    %v1275 = vunpack.c.l.b16 %v98
    %v1276 = vunpack.c.l.b16 %v99
    %v1277 = vunpack.c.l.b16 %v100
    %v1278 = vunpack.c.l.b16 %v101
    %v1279 = vpack.c.b16 %v1272, %v1271
    %v1280 = vpack.c.b16 %v1274, %v1273
    %v1281 = vpack.c.b16 %v1276, %v1275
    %v1282 = vpack.c.b16 %v1278, %v1277
    %vm1287 = vcmask 523264
    %v1289 = vsel %vm1287, %v1258, 0
    %1291 = vmatprep.subr.bf16.mxu0 0
    %1292 = vmatpush1.bf16.msra.mxu0 0
    %1293 = vmatprep.subr.bf16.mxu0 0
    %1294 = vmatpush1.bf16.msra.mxu0 0
    %1295 = vmatprep.subr.bf16.mxu0 0
    %1296 = vmatpush1.bf16.msra.mxu0 0
    %1297 = vmatprep.subr.bf16.mxu0 0
    %1298 = vmatpush1.bf16.msra.mxu0 0
    %1299 = vmatprep.subr.bf16.mxu0 0
    %1300 = vmatpush1.bf16.msra.mxu0 %v1282
    %1301 = vmatprep.subr.bf16.mxu0 0
    %1302 = vmatpush1.bf16.msra.mxu0 %v1281
    %1303 = vmatprep.subr.bf16.mxu0 0
    %1304 = vmatpush1.bf16.msra.mxu0 %v1280
    %1305 = vmatprep.subr.bf16.mxu0 0
    %1306 = vmatpush1.bf16.msra.mxu0 %v1279
    %1307 = vmatprep.subr.bf16.mxu0 0
    %1308 = vmatpush2.bf16.msra.mxu0 0
    %1309 = vmatprep.subr.bf16.mxu0 0
    %1310 = vmatpush2.bf16.msra.mxu0 0
    %1311 = vmatprep.subr.bf16.mxu0 0
    %1312 = vmatpush2.bf16.msra.mxu0 0
    %1313 = vmatprep.subr.bf16.mxu0 0
    %1314 = vmatpush2.bf16.msra.mxu0 0
    %1315 = vmatprep.subr.bf16.mxu0 0
    %1316 = vmatpush2.bf16.msra.mxu0 0
    %1317 = vmatprep.subr.bf16.mxu0 0
    %1318 = vmatpush2.bf16.msra.mxu0 0
    %1319 = vmatprep.subr.bf16.mxu0 0
    %1320 = vmatpush2.bf16.msra.mxu0 0
    %1321 = vmatprep.subr.bf16.mxu0 0
    %1322 = vmatpush2.bf16.msra.mxu0 0
    %1323 = vmatprep.mubr.bf16.mxu0 0
    %1324 = vmatmul.mubr.bf16.gmra.mxu0 %v1289
    %v1325 = vpop.f32.mrf.mxu0
    %v1326 = vadd.f32 %v1262, %v1325
    %v1327 = vpop.f32.mrf.mxu0
    %v1328 = vpop.f32.mrf.mxu0
    %v1329 = vadd.f32 %v1262, %v1328
    %v1330 = vpop.f32.mrf.mxu0
    %1331 = vdwg.mxu0
    %v1332 = vadd.f32 %v1326, %v1177
    %v1333 = vadd.f32 %v1329, %v1178
    %v1334 = vsel %vm28, %v1332, 0.0
    %1335 = vadd.xlane.f32.xlu0 %v1334
    %v1336 = vpop.xlane.xlu0 %1335
    %v1337 = vsel %vm28, %v1333, 0.0
    %1338 = vadd.xlane.f32.xlu0 %v1337
    %v1339 = vpop.xlane.xlu0 %1338
    %v1340 = vmul.f32 %v1336, %v35
    %v1341 = vmul.f32 %v1339, %v35
    %v1342 = vsub.f32 %v1332, %v1340
    %v1343 = vsub.f32 %v1333, %v1341
    %v1344 = vmul.f32 %v1342, %v1342
    %v1345 = vmul.f32 %v1343, %v1343
    %v1346 = vsel %vm28, %v1344, 0.0
    %1347 = vadd.xlane.f32.xlu0 %v1346
    %v1348 = vpop.xlane.xlu0 %1347
    %v1349 = vsel %vm28, %v1345, 0.0
    %1350 = vadd.xlane.f32.xlu0 %v1349
    %v1351 = vpop.xlane.xlu0 %1350
    %v1352 = vmul.f32 %v1348, %v35
    %v1353 = vmul.f32 %v1351, %v35
    %v1354 = vadd.f32 %v1352, 1e-12
    %v1355 = vadd.f32 %v1353, 1e-12
    %v1356 = vrsqrt.pop %v1354
    %v1357 = vrsqrt.pop %v1355
    %v1358 = vmul.f32 %v1342, %v1356
    %v1359 = vmul.f32 %v1343, %v1357
    %v1360 = vlaneseq
    %v1361 = vshrl.u32 %v1360, 7
    %v1362 = vsub.s32 6, %v1361
    %v1363 = vrot.slane %v102, %v1362
    %v1364 = vmul.f32 %v1358, %v1363
    %v1365 = vmul.f32 %v1359, %v1363
    %v1366 = vlaneseq
    %v1367 = vshrl.u32 %v1366, 7
    %v1368 = vsub.s32 7, %v1367
    %v1369 = vrot.slane %v102, %v1368
    %v1370 = vadd.f32 %v1364, %v1369
    %v1371 = vadd.f32 %v1365, %v1369
    %s1372 = scalar_lea.vmem %s4, 80
    %v1373 = vld [vmem:[%s1372] sm:$0xf]
    %v1374 = vld [vmem:[%s1372 + $0x4] sm:$0xf]
    %v1375 = vld [vmem:[%s1372 + $0x8] sm:$0xf]
    %v1376 = vld [vmem:[%s1372 + $0xc] sm:$0xf]
    %v1377 = vld [vmem:[%s1372 + $0x10] sm:$0xf]
    %v1378 = vld [vmem:[%s1372 + $0x14] sm:$0xf]
    %v1379 = vld [vmem:[%s1372 + $0x18] sm:$0xf]
    %v1380 = vld [vmem:[%s1372 + $0x1c] sm:$0xf]
    %v1381 = vld [vmem:[%s1372 + $0x20] sm:$0xf]
    %v1382 = vld [vmem:[%s1372 + $0x24] sm:$0xf]
    %v1383 = vld [vmem:[%s1372 + $0x28] sm:$0xf]
    %v1384 = vld [vmem:[%s1372 + $0x2c] sm:$0xf]
    %v1385 = vld [vmem:[%s1372 + $0x30] sm:$0xf]
    %v1386 = vld [vmem:[%s1372 + $0x34] sm:$0xf]
    %v1387 = vld [vmem:[%s1372 + $0x38] sm:$0xf]
    %v1388 = vld [vmem:[%s1372 + $0x3c] sm:$0xf]
    %v1389 = vld [vmem:[%s1372 + $0x40] sm:$0xf]
    %v1390 = vld [vmem:[%s1372 + $0x44] sm:$0xf]
    %v1391 = vld [vmem:[%s1372 + $0x48] sm:$0xf]
    %v1392 = vld [vmem:[%s1372 + $0x4c] sm:$0xf]
    %s1393 = scalar_lea.vmem %s3, 8
    %v1394 = vld [vmem:[%s1393] sm:$0xff]
    %v1395 = vpack.c.bf16 %v1371, %v1370
    %v1396 = vlaneseq
    %v1397 = vshrl.u32 %v1396, 7
    %v1398 = vsub.s32 0, %v1397
    %v1399 = vrot.slane %v1394, %v1398
    %v1404 = vunpack.c.l.b16 %v1373
    %v1405 = vunpack.c.l.b16 %v1374
    %v1406 = vunpack.c.l.b16 %v1375
    %v1407 = vunpack.c.l.b16 %v1376
    %v1408 = vpack.c.b16 %v1405, %v1404
    %v1409 = vpack.c.b16 %v1407, %v1406
    %v1413 = vsel %vm28, %v1395, 0
    %1415 = vmatprep.subr.bf16.mxu0 0
    %1416 = vmatpush1.bf16.msra.mxu0 0
    %1417 = vmatprep.subr.bf16.mxu0 0
    %1418 = vmatpush1.bf16.msra.mxu0 0
    %1419 = vmatprep.subr.bf16.mxu0 0
    %1420 = vmatpush1.bf16.msra.mxu0 0
    %1421 = vmatprep.subr.bf16.mxu0 0
    %1422 = vmatpush1.bf16.msra.mxu0 0
    %1423 = vmatprep.subr.bf16.mxu0 0
    %1424 = vmatpush1.bf16.msra.mxu0 0
    %1425 = vmatprep.subr.bf16.mxu0 0
    %1426 = vmatpush1.bf16.msra.mxu0 0
    %1427 = vmatprep.subr.bf16.mxu0 0
    %1428 = vmatpush1.bf16.msra.mxu0 %v1409
    %1429 = vmatprep.subr.bf16.mxu0 0
    %1430 = vmatpush1.bf16.msra.mxu0 %v1408
    %1431 = vmatprep.subr.bf16.mxu0 0
    %1432 = vmatpush2.bf16.msra.mxu0 0
    %1433 = vmatprep.subr.bf16.mxu0 0
    %1434 = vmatpush2.bf16.msra.mxu0 0
    %1435 = vmatprep.subr.bf16.mxu0 0
    %1436 = vmatpush2.bf16.msra.mxu0 0
    %1437 = vmatprep.subr.bf16.mxu0 0
    %1438 = vmatpush2.bf16.msra.mxu0 0
    %1439 = vmatprep.subr.bf16.mxu0 0
    %1440 = vmatpush2.bf16.msra.mxu0 0
    %1441 = vmatprep.subr.bf16.mxu0 0
    %1442 = vmatpush2.bf16.msra.mxu0 0
    %1443 = vmatprep.subr.bf16.mxu0 0
    %1444 = vmatpush2.bf16.msra.mxu0 0
    %1445 = vmatprep.subr.bf16.mxu0 0
    %1446 = vmatpush2.bf16.msra.mxu0 0
    %1447 = vmatprep.mubr.bf16.mxu0 0
    %1448 = vmatmul.mubr.bf16.gmra.mxu0 %v1413
    %v1449 = vpop.f32.mrf.mxu0
    %v1450 = vadd.f32 %v1399, %v1449
    %v1451 = vpop.f32.mrf.mxu0
    %v1452 = vpop.f32.mrf.mxu0
    %v1453 = vadd.f32 %v1399, %v1452
    %v1454 = vpop.f32.mrf.mxu0
    %1455 = vdwg.mxu0
    %v1456 = vpack.c.bf16 %v1450, %v1450
    %v1457 = vpack.c.bf16 %v1453, %v1453
    %1459 = vrot.lane.b32.xlu0 %v1456, 96
    %v1460 = vpop.permute.xlu0 %1459
    %v1462 = vsel %vm169, %v1456, 0
    %v1465 = vsel %vm169, %v1460, 0
    %1467 = vmatprep.subr.bf16.mxu0 0
    %1468 = vmatpush1.bf16.xpose.msra.mxu0 0
    %1469 = vmatprep.subr.bf16.mxu0 0
    %1470 = vmatpush1.bf16.xpose.msra.mxu0 0
    %1471 = vmatprep.subr.bf16.mxu0 0
    %1472 = vmatpush1.bf16.xpose.msra.mxu0 0
    %1473 = vmatprep.subr.bf16.mxu0 0
    %1474 = vmatpush1.bf16.xpose.msra.mxu0 0
    %1475 = vmatprep.subr.bf16.mxu0 0
    %1476 = vmatpush1.bf16.xpose.msra.mxu0 0
    %1477 = vmatprep.subr.bf16.mxu0 0
    %1478 = vmatpush1.bf16.xpose.msra.mxu0 0
    %1479 = vmatprep.subr.bf16.mxu0 0
    %1480 = vmatpush1.bf16.xpose.msra.mxu0 0
    %1481 = vmatprep.subr.bf16.mxu0 0
    %1482 = vmatpush1.bf16.xpose.msra.mxu0 %v1465
    %1483 = vmatprep.subr.bf16.mxu0 0
    %1484 = vmatpush2.bf16.xpose.msra.mxu0 0
    %1485 = vmatprep.subr.bf16.mxu0 0
    %1486 = vmatpush2.bf16.xpose.msra.mxu0 0
    %1487 = vmatprep.subr.bf16.mxu0 0
    %1488 = vmatpush2.bf16.xpose.msra.mxu0 0
    %1489 = vmatprep.subr.bf16.mxu0 0
    %1490 = vmatpush2.bf16.xpose.msra.mxu0 0
    %1491 = vmatprep.subr.bf16.mxu0 0
    %1492 = vmatpush2.bf16.xpose.msra.mxu0 0
    %1493 = vmatprep.subr.bf16.mxu0 0
    %1494 = vmatpush2.bf16.xpose.msra.mxu0 0
    %1495 = vmatprep.subr.bf16.mxu0 0
    %1496 = vmatpush2.bf16.xpose.msra.mxu0 0
    %1497 = vmatprep.subr.bf16.mxu0 0
    %1498 = vmatpush2.bf16.xpose.msra.mxu0 0
    %1499 = vmatprep.mubr.bf16.mxu0 0
    %1500 = vmatmul.mubr.bf16.gmra.mxu0 %v1462
    %v1501 = vpop.f32.mrf.mxu0
    %v1502 = vadd.f32 %v75, %v1501
    %v1503 = vpop.f32.mrf.mxu0
    %v1504 = vpop.f32.mrf.mxu0
    %v1505 = vpop.f32.mrf.mxu0
    %1506 = vdwg.mxu0
    %1508 = vrot.lane.b32.xlu0 %v1457, 96
    %v1509 = vpop.permute.xlu0 %1508
    %v1511 = vsel %vm169, %v1457, 0
    %v1514 = vsel %vm169, %v1509, 0
    %1516 = vmatprep.subr.bf16.mxu0 0
    %1517 = vmatpush1.bf16.xpose.msra.mxu0 0
    %1518 = vmatprep.subr.bf16.mxu0 0
    %1519 = vmatpush1.bf16.xpose.msra.mxu0 0
    %1520 = vmatprep.subr.bf16.mxu0 0
    %1521 = vmatpush1.bf16.xpose.msra.mxu0 0
    %1522 = vmatprep.subr.bf16.mxu0 0
    %1523 = vmatpush1.bf16.xpose.msra.mxu0 0
    %1524 = vmatprep.subr.bf16.mxu0 0
    %1525 = vmatpush1.bf16.xpose.msra.mxu0 0
    %1526 = vmatprep.subr.bf16.mxu0 0
    %1527 = vmatpush1.bf16.xpose.msra.mxu0 0
    %1528 = vmatprep.subr.bf16.mxu0 0
    %1529 = vmatpush1.bf16.xpose.msra.mxu0 0
    %1530 = vmatprep.subr.bf16.mxu0 0
    %1531 = vmatpush1.bf16.xpose.msra.mxu0 %v1514
    %1532 = vmatprep.subr.bf16.mxu0 0
    %1533 = vmatpush2.bf16.xpose.msra.mxu0 0
    %1534 = vmatprep.subr.bf16.mxu0 0
    %1535 = vmatpush2.bf16.xpose.msra.mxu0 0
    %1536 = vmatprep.subr.bf16.mxu0 0
    %1537 = vmatpush2.bf16.xpose.msra.mxu0 0
    %1538 = vmatprep.subr.bf16.mxu0 0
    %1539 = vmatpush2.bf16.xpose.msra.mxu0 0
    %1540 = vmatprep.subr.bf16.mxu0 0
    %1541 = vmatpush2.bf16.xpose.msra.mxu0 0
    %1542 = vmatprep.subr.bf16.mxu0 0
    %1543 = vmatpush2.bf16.xpose.msra.mxu0 0
    %1544 = vmatprep.subr.bf16.mxu0 0
    %1545 = vmatpush2.bf16.xpose.msra.mxu0 0
    %1546 = vmatprep.subr.bf16.mxu0 0
    %1547 = vmatpush2.bf16.xpose.msra.mxu0 0
    %1548 = vmatprep.mubr.bf16.mxu0 0
    %1549 = vmatmul.mubr.bf16.gmra.mxu0 %v1511
    %v1550 = vpop.f32.mrf.mxu0
    %v1551 = vadd.f32 %v79, %v1550
    %v1552 = vpop.f32.mrf.mxu0
    %v1553 = vpop.f32.mrf.mxu0
    %v1554 = vpop.f32.mrf.mxu0
    %1555 = vdwg.mxu0
    %v1556 = vsel %vm169, %v1502, -inf
    %1557 = vmax.xlane.f32.xlu0 %v1556
    %v1558 = vpop.xlane.xlu0 %1557
    %v1559 = vsel %vm169, %v1551, -inf
    %1560 = vmax.xlane.f32.xlu0 %v1559
    %v1561 = vpop.xlane.xlu0 %1560
    %v1562 = vsub.f32 %v1502, %v1558
    %v1563 = vsub.f32 %v1551, %v1561
    %v1564 = vmul.f32 %v1562, 1.442695
    %v1565 = vpow.pop %v1564
    %v1566 = vmul.f32 %v1563, 1.442695
    %v1567 = vpow.pop %v1566
    %v1568 = vsel %vm169, %v1565, 0.0
    %1569 = vadd.xlane.f32.xlu0 %v1568
    %v1570 = vpop.xlane.xlu0 %1569
    %v1571 = vsel %vm169, %v1567, 0.0
    %1572 = vadd.xlane.f32.xlu0 %v1571
    %v1573 = vpop.xlane.xlu0 %1572
    %v1574 = vrcp.pop %v1570
    %v1575 = vrcp.pop %v1573
    %v1576 = vmul.f32 %v1565, %v1574
    %v1577 = vmul.f32 %v1567, %v1575
    %v1578 = vpack.c.bf16 %v1576, %v1576
    %v1579 = vpack.c.bf16 %v1577, %v1577
    %1580 = vrot.lane.b32.xlu0 %v1456, 64
    %v1581 = vpop.permute.xlu0 %1580
    %v1583 = vsel %vm169, %v1578, 0
    %v1586 = vsel %vm294, %v1581, 0
    %1588 = vmatprep.subr.bf16.mxu0 0
    %1589 = vmatpush1.bf16.msra.mxu0 0
    %1590 = vmatprep.subr.bf16.mxu0 0
    %1591 = vmatpush1.bf16.msra.mxu0 0
    %1592 = vmatprep.subr.bf16.mxu0 0
    %1593 = vmatpush1.bf16.msra.mxu0 0
    %1594 = vmatprep.subr.bf16.mxu0 0
    %1595 = vmatpush1.bf16.msra.mxu0 0
    %1596 = vmatprep.subr.bf16.mxu0 0
    %1597 = vmatpush1.bf16.msra.mxu0 0
    %1598 = vmatprep.subr.bf16.mxu0 0
    %1599 = vmatpush1.bf16.msra.mxu0 0
    %1600 = vmatprep.subr.bf16.mxu0 0
    %1601 = vmatpush1.bf16.msra.mxu0 0
    %1602 = vmatprep.subr.bf16.mxu0 0
    %1603 = vmatpush1.bf16.msra.mxu0 %v1586
    %1604 = vmatprep.subr.bf16.mxu0 0
    %1605 = vmatpush2.bf16.msra.mxu0 0
    %1606 = vmatprep.subr.bf16.mxu0 0
    %1607 = vmatpush2.bf16.msra.mxu0 0
    %1608 = vmatprep.subr.bf16.mxu0 0
    %1609 = vmatpush2.bf16.msra.mxu0 0
    %1610 = vmatprep.subr.bf16.mxu0 0
    %1611 = vmatpush2.bf16.msra.mxu0 0
    %1612 = vmatprep.subr.bf16.mxu0 0
    %1613 = vmatpush2.bf16.msra.mxu0 0
    %1614 = vmatprep.subr.bf16.mxu0 0
    %1615 = vmatpush2.bf16.msra.mxu0 0
    %1616 = vmatprep.subr.bf16.mxu0 0
    %1617 = vmatpush2.bf16.msra.mxu0 0
    %1618 = vmatprep.subr.bf16.mxu0 0
    %1619 = vmatpush2.bf16.msra.mxu0 0
    %1620 = vmatprep.mubr.bf16.mxu0 0
    %1621 = vmatmul.mubr.bf16.gmra.mxu0 %v1583
    %v1622 = vpop.f32.mrf.mxu0
    %v1623 = vadd.f32 0.0, %v1622
    %v1624 = vpop.f32.mrf.mxu0
    %v1625 = vpop.f32.mrf.mxu0
    %v1626 = vpop.f32.mrf.mxu0
    %1627 = vdwg.mxu0
    %1628 = vrot.lane.b32.xlu0 %v1457, 64
    %v1629 = vpop.permute.xlu0 %1628
    %v1631 = vsel %vm169, %v1579, 0
    %v1634 = vsel %vm294, %v1629, 0
    %1636 = vmatprep.subr.bf16.mxu0 0
    %1637 = vmatpush1.bf16.msra.mxu0 0
    %1638 = vmatprep.subr.bf16.mxu0 0
    %1639 = vmatpush1.bf16.msra.mxu0 0
    %1640 = vmatprep.subr.bf16.mxu0 0
    %1641 = vmatpush1.bf16.msra.mxu0 0
    %1642 = vmatprep.subr.bf16.mxu0 0
    %1643 = vmatpush1.bf16.msra.mxu0 0
    %1644 = vmatprep.subr.bf16.mxu0 0
    %1645 = vmatpush1.bf16.msra.mxu0 0
    %1646 = vmatprep.subr.bf16.mxu0 0
    %1647 = vmatpush1.bf16.msra.mxu0 0
    %1648 = vmatprep.subr.bf16.mxu0 0
    %1649 = vmatpush1.bf16.msra.mxu0 0
    %1650 = vmatprep.subr.bf16.mxu0 0
    %1651 = vmatpush1.bf16.msra.mxu0 %v1634
    %1652 = vmatprep.subr.bf16.mxu0 0
    %1653 = vmatpush2.bf16.msra.mxu0 0
    %1654 = vmatprep.subr.bf16.mxu0 0
    %1655 = vmatpush2.bf16.msra.mxu0 0
    %1656 = vmatprep.subr.bf16.mxu0 0
    %1657 = vmatpush2.bf16.msra.mxu0 0
    %1658 = vmatprep.subr.bf16.mxu0 0
    %1659 = vmatpush2.bf16.msra.mxu0 0
    %1660 = vmatprep.subr.bf16.mxu0 0
    %1661 = vmatpush2.bf16.msra.mxu0 0
    %1662 = vmatprep.subr.bf16.mxu0 0
    %1663 = vmatpush2.bf16.msra.mxu0 0
    %1664 = vmatprep.subr.bf16.mxu0 0
    %1665 = vmatpush2.bf16.msra.mxu0 0
    %1666 = vmatprep.subr.bf16.mxu0 0
    %1667 = vmatpush2.bf16.msra.mxu0 0
    %1668 = vmatprep.mubr.bf16.mxu0 0
    %1669 = vmatmul.mubr.bf16.gmra.mxu0 %v1631
    %v1670 = vpop.f32.mrf.mxu0
    %v1671 = vadd.f32 0.0, %v1670
    %v1672 = vpop.f32.mrf.mxu0
    %v1673 = vpop.f32.mrf.mxu0
    %v1674 = vpop.f32.mrf.mxu0
    %1675 = vdwg.mxu0
    %1676 = vrot.lane.b32.xlu0 %v1456, 120
    %v1677 = vpop.permute.xlu0 %1676
    %1678 = vrot.lane.b32.xlu0 %v1456, 88
    %v1679 = vpop.permute.xlu0 %1678
    %v1681 = vsel %vm169, %v1677, 0
    %v1684 = vsel %vm169, %v1679, 0
    %1686 = vmatprep.subr.bf16.mxu0 0
    %1687 = vmatpush1.bf16.xpose.msra.mxu0 0
    %1688 = vmatprep.subr.bf16.mxu0 0
    %1689 = vmatpush1.bf16.xpose.msra.mxu0 0
    %1690 = vmatprep.subr.bf16.mxu0 0
    %1691 = vmatpush1.bf16.xpose.msra.mxu0 0
    %1692 = vmatprep.subr.bf16.mxu0 0
    %1693 = vmatpush1.bf16.xpose.msra.mxu0 0
    %1694 = vmatprep.subr.bf16.mxu0 0
    %1695 = vmatpush1.bf16.xpose.msra.mxu0 0
    %1696 = vmatprep.subr.bf16.mxu0 0
    %1697 = vmatpush1.bf16.xpose.msra.mxu0 0
    %1698 = vmatprep.subr.bf16.mxu0 0
    %1699 = vmatpush1.bf16.xpose.msra.mxu0 0
    %1700 = vmatprep.subr.bf16.mxu0 0
    %1701 = vmatpush1.bf16.xpose.msra.mxu0 %v1684
    %1702 = vmatprep.subr.bf16.mxu0 0
    %1703 = vmatpush2.bf16.xpose.msra.mxu0 0
    %1704 = vmatprep.subr.bf16.mxu0 0
    %1705 = vmatpush2.bf16.xpose.msra.mxu0 0
    %1706 = vmatprep.subr.bf16.mxu0 0
    %1707 = vmatpush2.bf16.xpose.msra.mxu0 0
    %1708 = vmatprep.subr.bf16.mxu0 0
    %1709 = vmatpush2.bf16.xpose.msra.mxu0 0
    %1710 = vmatprep.subr.bf16.mxu0 0
    %1711 = vmatpush2.bf16.xpose.msra.mxu0 0
    %1712 = vmatprep.subr.bf16.mxu0 0
    %1713 = vmatpush2.bf16.xpose.msra.mxu0 0
    %1714 = vmatprep.subr.bf16.mxu0 0
    %1715 = vmatpush2.bf16.xpose.msra.mxu0 0
    %1716 = vmatprep.subr.bf16.mxu0 0
    %1717 = vmatpush2.bf16.xpose.msra.mxu0 0
    %1718 = vmatprep.mubr.bf16.mxu0 0
    %1719 = vmatmul.mubr.bf16.gmra.mxu0 %v1681
    %v1720 = vpop.f32.mrf.mxu0
    %v1721 = vadd.f32 %v75, %v1720
    %v1722 = vpop.f32.mrf.mxu0
    %v1723 = vpop.f32.mrf.mxu0
    %v1724 = vpop.f32.mrf.mxu0
    %1725 = vdwg.mxu0
    %1726 = vrot.lane.b32.xlu0 %v1457, 120
    %v1727 = vpop.permute.xlu0 %1726
    %1728 = vrot.lane.b32.xlu0 %v1457, 88
    %v1729 = vpop.permute.xlu0 %1728
    %v1731 = vsel %vm169, %v1727, 0
    %v1734 = vsel %vm169, %v1729, 0
    %1736 = vmatprep.subr.bf16.mxu0 0
    %1737 = vmatpush1.bf16.xpose.msra.mxu0 0
    %1738 = vmatprep.subr.bf16.mxu0 0
    %1739 = vmatpush1.bf16.xpose.msra.mxu0 0
    %1740 = vmatprep.subr.bf16.mxu0 0
    %1741 = vmatpush1.bf16.xpose.msra.mxu0 0
    %1742 = vmatprep.subr.bf16.mxu0 0
    %1743 = vmatpush1.bf16.xpose.msra.mxu0 0
    %1744 = vmatprep.subr.bf16.mxu0 0
    %1745 = vmatpush1.bf16.xpose.msra.mxu0 0
    %1746 = vmatprep.subr.bf16.mxu0 0
    %1747 = vmatpush1.bf16.xpose.msra.mxu0 0
    %1748 = vmatprep.subr.bf16.mxu0 0
    %1749 = vmatpush1.bf16.xpose.msra.mxu0 0
    %1750 = vmatprep.subr.bf16.mxu0 0
    %1751 = vmatpush1.bf16.xpose.msra.mxu0 %v1734
    %1752 = vmatprep.subr.bf16.mxu0 0
    %1753 = vmatpush2.bf16.xpose.msra.mxu0 0
    %1754 = vmatprep.subr.bf16.mxu0 0
    %1755 = vmatpush2.bf16.xpose.msra.mxu0 0
    %1756 = vmatprep.subr.bf16.mxu0 0
    %1757 = vmatpush2.bf16.xpose.msra.mxu0 0
    %1758 = vmatprep.subr.bf16.mxu0 0
    %1759 = vmatpush2.bf16.xpose.msra.mxu0 0
    %1760 = vmatprep.subr.bf16.mxu0 0
    %1761 = vmatpush2.bf16.xpose.msra.mxu0 0
    %1762 = vmatprep.subr.bf16.mxu0 0
    %1763 = vmatpush2.bf16.xpose.msra.mxu0 0
    %1764 = vmatprep.subr.bf16.mxu0 0
    %1765 = vmatpush2.bf16.xpose.msra.mxu0 0
    %1766 = vmatprep.subr.bf16.mxu0 0
    %1767 = vmatpush2.bf16.xpose.msra.mxu0 0
    %1768 = vmatprep.mubr.bf16.mxu0 0
    %1769 = vmatmul.mubr.bf16.gmra.mxu0 %v1731
    %v1770 = vpop.f32.mrf.mxu0
    %v1771 = vadd.f32 %v79, %v1770
    %v1772 = vpop.f32.mrf.mxu0
    %v1773 = vpop.f32.mrf.mxu0
    %v1774 = vpop.f32.mrf.mxu0
    %1775 = vdwg.mxu0
    %v1776 = vsel %vm169, %v1721, -inf
    %1777 = vmax.xlane.f32.xlu0 %v1776
    %v1778 = vpop.xlane.xlu0 %1777
    %v1779 = vsel %vm169, %v1771, -inf
    %1780 = vmax.xlane.f32.xlu0 %v1779
    %v1781 = vpop.xlane.xlu0 %1780
    %v1782 = vsub.f32 %v1721, %v1778
    %v1783 = vsub.f32 %v1771, %v1781
    %v1784 = vmul.f32 %v1782, 1.442695
    %v1785 = vpow.pop %v1784
    %v1786 = vmul.f32 %v1783, 1.442695
    %v1787 = vpow.pop %v1786
    %v1788 = vsel %vm169, %v1785, 0.0
    %1789 = vadd.xlane.f32.xlu0 %v1788
    %v1790 = vpop.xlane.xlu0 %1789
    %v1791 = vsel %vm169, %v1787, 0.0
    %1792 = vadd.xlane.f32.xlu0 %v1791
    %v1793 = vpop.xlane.xlu0 %1792
    %v1794 = vrcp.pop %v1790
    %v1795 = vrcp.pop %v1793
    %v1796 = vmul.f32 %v1785, %v1794
    %v1797 = vmul.f32 %v1787, %v1795
    %v1798 = vpack.c.bf16 %v1796, %v1796
    %v1799 = vpack.c.bf16 %v1797, %v1797
    %1800 = vrot.lane.b32.xlu0 %v1456, 56
    %v1801 = vpop.permute.xlu0 %1800
    %v1803 = vsel %vm169, %v1798, 0
    %v1806 = vsel %vm294, %v1801, 0
    %1808 = vmatprep.subr.bf16.mxu0 0
    %1809 = vmatpush1.bf16.msra.mxu0 0
    %1810 = vmatprep.subr.bf16.mxu0 0
    %1811 = vmatpush1.bf16.msra.mxu0 0
    %1812 = vmatprep.subr.bf16.mxu0 0
    %1813 = vmatpush1.bf16.msra.mxu0 0
    %1814 = vmatprep.subr.bf16.mxu0 0
    %1815 = vmatpush1.bf16.msra.mxu0 0
    %1816 = vmatprep.subr.bf16.mxu0 0
    %1817 = vmatpush1.bf16.msra.mxu0 0
    %1818 = vmatprep.subr.bf16.mxu0 0
    %1819 = vmatpush1.bf16.msra.mxu0 0
    %1820 = vmatprep.subr.bf16.mxu0 0
    %1821 = vmatpush1.bf16.msra.mxu0 0
    %1822 = vmatprep.subr.bf16.mxu0 0
    %1823 = vmatpush1.bf16.msra.mxu0 %v1806
    %1824 = vmatprep.subr.bf16.mxu0 0
    %1825 = vmatpush2.bf16.msra.mxu0 0
    %1826 = vmatprep.subr.bf16.mxu0 0
    %1827 = vmatpush2.bf16.msra.mxu0 0
    %1828 = vmatprep.subr.bf16.mxu0 0
    %1829 = vmatpush2.bf16.msra.mxu0 0
    %1830 = vmatprep.subr.bf16.mxu0 0
    %1831 = vmatpush2.bf16.msra.mxu0 0
    %1832 = vmatprep.subr.bf16.mxu0 0
    %1833 = vmatpush2.bf16.msra.mxu0 0
    %1834 = vmatprep.subr.bf16.mxu0 0
    %1835 = vmatpush2.bf16.msra.mxu0 0
    %1836 = vmatprep.subr.bf16.mxu0 0
    %1837 = vmatpush2.bf16.msra.mxu0 0
    %1838 = vmatprep.subr.bf16.mxu0 0
    %1839 = vmatpush2.bf16.msra.mxu0 0
    %1840 = vmatprep.mubr.bf16.mxu0 0
    %1841 = vmatmul.mubr.bf16.gmra.mxu0 %v1803
    %v1842 = vpop.f32.mrf.mxu0
    %v1843 = vadd.f32 0.0, %v1842
    %v1844 = vpop.f32.mrf.mxu0
    %v1845 = vpop.f32.mrf.mxu0
    %v1846 = vpop.f32.mrf.mxu0
    %1847 = vdwg.mxu0
    %1848 = vrot.lane.b32.xlu0 %v1457, 56
    %v1849 = vpop.permute.xlu0 %1848
    %v1851 = vsel %vm169, %v1799, 0
    %v1854 = vsel %vm294, %v1849, 0
    %1856 = vmatprep.subr.bf16.mxu0 0
    %1857 = vmatpush1.bf16.msra.mxu0 0
    %1858 = vmatprep.subr.bf16.mxu0 0
    %1859 = vmatpush1.bf16.msra.mxu0 0
    %1860 = vmatprep.subr.bf16.mxu0 0
    %1861 = vmatpush1.bf16.msra.mxu0 0
    %1862 = vmatprep.subr.bf16.mxu0 0
    %1863 = vmatpush1.bf16.msra.mxu0 0
    %1864 = vmatprep.subr.bf16.mxu0 0
    %1865 = vmatpush1.bf16.msra.mxu0 0
    %1866 = vmatprep.subr.bf16.mxu0 0
    %1867 = vmatpush1.bf16.msra.mxu0 0
    %1868 = vmatprep.subr.bf16.mxu0 0
    %1869 = vmatpush1.bf16.msra.mxu0 0
    %1870 = vmatprep.subr.bf16.mxu0 0
    %1871 = vmatpush1.bf16.msra.mxu0 %v1854
    %1872 = vmatprep.subr.bf16.mxu0 0
    %1873 = vmatpush2.bf16.msra.mxu0 0
    %1874 = vmatprep.subr.bf16.mxu0 0
    %1875 = vmatpush2.bf16.msra.mxu0 0
    %1876 = vmatprep.subr.bf16.mxu0 0
    %1877 = vmatpush2.bf16.msra.mxu0 0
    %1878 = vmatprep.subr.bf16.mxu0 0
    %1879 = vmatpush2.bf16.msra.mxu0 0
    %1880 = vmatprep.subr.bf16.mxu0 0
    %1881 = vmatpush2.bf16.msra.mxu0 0
    %1882 = vmatprep.subr.bf16.mxu0 0
    %1883 = vmatpush2.bf16.msra.mxu0 0
    %1884 = vmatprep.subr.bf16.mxu0 0
    %1885 = vmatpush2.bf16.msra.mxu0 0
    %1886 = vmatprep.subr.bf16.mxu0 0
    %1887 = vmatpush2.bf16.msra.mxu0 0
    %1888 = vmatprep.mubr.bf16.mxu0 0
    %1889 = vmatmul.mubr.bf16.gmra.mxu0 %v1851
    %v1890 = vpop.f32.mrf.mxu0
    %v1891 = vadd.f32 0.0, %v1890
    %v1892 = vpop.f32.mrf.mxu0
    %v1893 = vpop.f32.mrf.mxu0
    %v1894 = vpop.f32.mrf.mxu0
    %1895 = vdwg.mxu0
    %1896 = vrot.lane.b32.xlu0 %v1456, 112
    %v1897 = vpop.permute.xlu0 %1896
    %1898 = vrot.lane.b32.xlu0 %v1456, 80
    %v1899 = vpop.permute.xlu0 %1898
    %v1901 = vsel %vm169, %v1897, 0
    %v1904 = vsel %vm169, %v1899, 0
    %1906 = vmatprep.subr.bf16.mxu0 0
    %1907 = vmatpush1.bf16.xpose.msra.mxu0 0
    %1908 = vmatprep.subr.bf16.mxu0 0
    %1909 = vmatpush1.bf16.xpose.msra.mxu0 0
    %1910 = vmatprep.subr.bf16.mxu0 0
    %1911 = vmatpush1.bf16.xpose.msra.mxu0 0
    %1912 = vmatprep.subr.bf16.mxu0 0
    %1913 = vmatpush1.bf16.xpose.msra.mxu0 0
    %1914 = vmatprep.subr.bf16.mxu0 0
    %1915 = vmatpush1.bf16.xpose.msra.mxu0 0
    %1916 = vmatprep.subr.bf16.mxu0 0
    %1917 = vmatpush1.bf16.xpose.msra.mxu0 0
    %1918 = vmatprep.subr.bf16.mxu0 0
    %1919 = vmatpush1.bf16.xpose.msra.mxu0 0
    %1920 = vmatprep.subr.bf16.mxu0 0
    %1921 = vmatpush1.bf16.xpose.msra.mxu0 %v1904
    %1922 = vmatprep.subr.bf16.mxu0 0
    %1923 = vmatpush2.bf16.xpose.msra.mxu0 0
    %1924 = vmatprep.subr.bf16.mxu0 0
    %1925 = vmatpush2.bf16.xpose.msra.mxu0 0
    %1926 = vmatprep.subr.bf16.mxu0 0
    %1927 = vmatpush2.bf16.xpose.msra.mxu0 0
    %1928 = vmatprep.subr.bf16.mxu0 0
    %1929 = vmatpush2.bf16.xpose.msra.mxu0 0
    %1930 = vmatprep.subr.bf16.mxu0 0
    %1931 = vmatpush2.bf16.xpose.msra.mxu0 0
    %1932 = vmatprep.subr.bf16.mxu0 0
    %1933 = vmatpush2.bf16.xpose.msra.mxu0 0
    %1934 = vmatprep.subr.bf16.mxu0 0
    %1935 = vmatpush2.bf16.xpose.msra.mxu0 0
    %1936 = vmatprep.subr.bf16.mxu0 0
    %1937 = vmatpush2.bf16.xpose.msra.mxu0 0
    %1938 = vmatprep.mubr.bf16.mxu0 0
    %1939 = vmatmul.mubr.bf16.gmra.mxu0 %v1901
    %v1940 = vpop.f32.mrf.mxu0
    %v1941 = vadd.f32 %v75, %v1940
    %v1942 = vpop.f32.mrf.mxu0
    %v1943 = vpop.f32.mrf.mxu0
    %v1944 = vpop.f32.mrf.mxu0
    %1945 = vdwg.mxu0
    %1946 = vrot.lane.b32.xlu0 %v1457, 112
    %v1947 = vpop.permute.xlu0 %1946
    %1948 = vrot.lane.b32.xlu0 %v1457, 80
    %v1949 = vpop.permute.xlu0 %1948
    %v1951 = vsel %vm169, %v1947, 0
    %v1954 = vsel %vm169, %v1949, 0
    %1956 = vmatprep.subr.bf16.mxu0 0
    %1957 = vmatpush1.bf16.xpose.msra.mxu0 0
    %1958 = vmatprep.subr.bf16.mxu0 0
    %1959 = vmatpush1.bf16.xpose.msra.mxu0 0
    %1960 = vmatprep.subr.bf16.mxu0 0
    %1961 = vmatpush1.bf16.xpose.msra.mxu0 0
    %1962 = vmatprep.subr.bf16.mxu0 0
    %1963 = vmatpush1.bf16.xpose.msra.mxu0 0
    %1964 = vmatprep.subr.bf16.mxu0 0
    %1965 = vmatpush1.bf16.xpose.msra.mxu0 0
    %1966 = vmatprep.subr.bf16.mxu0 0
    %1967 = vmatpush1.bf16.xpose.msra.mxu0 0
    %1968 = vmatprep.subr.bf16.mxu0 0
    %1969 = vmatpush1.bf16.xpose.msra.mxu0 0
    %1970 = vmatprep.subr.bf16.mxu0 0
    %1971 = vmatpush1.bf16.xpose.msra.mxu0 %v1954
    %1972 = vmatprep.subr.bf16.mxu0 0
    %1973 = vmatpush2.bf16.xpose.msra.mxu0 0
    %1974 = vmatprep.subr.bf16.mxu0 0
    %1975 = vmatpush2.bf16.xpose.msra.mxu0 0
    %1976 = vmatprep.subr.bf16.mxu0 0
    %1977 = vmatpush2.bf16.xpose.msra.mxu0 0
    %1978 = vmatprep.subr.bf16.mxu0 0
    %1979 = vmatpush2.bf16.xpose.msra.mxu0 0
    %1980 = vmatprep.subr.bf16.mxu0 0
    %1981 = vmatpush2.bf16.xpose.msra.mxu0 0
    %1982 = vmatprep.subr.bf16.mxu0 0
    %1983 = vmatpush2.bf16.xpose.msra.mxu0 0
    %1984 = vmatprep.subr.bf16.mxu0 0
    %1985 = vmatpush2.bf16.xpose.msra.mxu0 0
    %1986 = vmatprep.subr.bf16.mxu0 0
    %1987 = vmatpush2.bf16.xpose.msra.mxu0 0
    %1988 = vmatprep.mubr.bf16.mxu0 0
    %1989 = vmatmul.mubr.bf16.gmra.mxu0 %v1951
    %v1990 = vpop.f32.mrf.mxu0
    %v1991 = vadd.f32 %v79, %v1990
    %v1992 = vpop.f32.mrf.mxu0
    %v1993 = vpop.f32.mrf.mxu0
    %v1994 = vpop.f32.mrf.mxu0
    %1995 = vdwg.mxu0
    %v1996 = vsel %vm169, %v1941, -inf
    %1997 = vmax.xlane.f32.xlu0 %v1996
    %v1998 = vpop.xlane.xlu0 %1997
    %v1999 = vsel %vm169, %v1991, -inf
    %2000 = vmax.xlane.f32.xlu0 %v1999
    %v2001 = vpop.xlane.xlu0 %2000
    %v2002 = vsub.f32 %v1941, %v1998
    %v2003 = vsub.f32 %v1991, %v2001
    %v2004 = vmul.f32 %v2002, 1.442695
    %v2005 = vpow.pop %v2004
    %v2006 = vmul.f32 %v2003, 1.442695
    %v2007 = vpow.pop %v2006
    %v2008 = vsel %vm169, %v2005, 0.0
    %2009 = vadd.xlane.f32.xlu0 %v2008
    %v2010 = vpop.xlane.xlu0 %2009
    %v2011 = vsel %vm169, %v2007, 0.0
    %2012 = vadd.xlane.f32.xlu0 %v2011
    %v2013 = vpop.xlane.xlu0 %2012
    %v2014 = vrcp.pop %v2010
    %v2015 = vrcp.pop %v2013
    %v2016 = vmul.f32 %v2005, %v2014
    %v2017 = vmul.f32 %v2007, %v2015
    %v2018 = vpack.c.bf16 %v2016, %v2016
    %v2019 = vpack.c.bf16 %v2017, %v2017
    %2020 = vrot.lane.b32.xlu0 %v1456, 48
    %v2021 = vpop.permute.xlu0 %2020
    %v2023 = vsel %vm169, %v2018, 0
    %v2026 = vsel %vm294, %v2021, 0
    %2028 = vmatprep.subr.bf16.mxu0 0
    %2029 = vmatpush1.bf16.msra.mxu0 0
    %2030 = vmatprep.subr.bf16.mxu0 0
    %2031 = vmatpush1.bf16.msra.mxu0 0
    %2032 = vmatprep.subr.bf16.mxu0 0
    %2033 = vmatpush1.bf16.msra.mxu0 0
    %2034 = vmatprep.subr.bf16.mxu0 0
    %2035 = vmatpush1.bf16.msra.mxu0 0
    %2036 = vmatprep.subr.bf16.mxu0 0
    %2037 = vmatpush1.bf16.msra.mxu0 0
    %2038 = vmatprep.subr.bf16.mxu0 0
    %2039 = vmatpush1.bf16.msra.mxu0 0
    %2040 = vmatprep.subr.bf16.mxu0 0
    %2041 = vmatpush1.bf16.msra.mxu0 0
    %2042 = vmatprep.subr.bf16.mxu0 0
    %2043 = vmatpush1.bf16.msra.mxu0 %v2026
    %2044 = vmatprep.subr.bf16.mxu0 0
    %2045 = vmatpush2.bf16.msra.mxu0 0
    %2046 = vmatprep.subr.bf16.mxu0 0
    %2047 = vmatpush2.bf16.msra.mxu0 0
    %2048 = vmatprep.subr.bf16.mxu0 0
    %2049 = vmatpush2.bf16.msra.mxu0 0
    %2050 = vmatprep.subr.bf16.mxu0 0
    %2051 = vmatpush2.bf16.msra.mxu0 0
    %2052 = vmatprep.subr.bf16.mxu0 0
    %2053 = vmatpush2.bf16.msra.mxu0 0
    %2054 = vmatprep.subr.bf16.mxu0 0
    %2055 = vmatpush2.bf16.msra.mxu0 0
    %2056 = vmatprep.subr.bf16.mxu0 0
    %2057 = vmatpush2.bf16.msra.mxu0 0
    %2058 = vmatprep.subr.bf16.mxu0 0
    %2059 = vmatpush2.bf16.msra.mxu0 0
    %2060 = vmatprep.mubr.bf16.mxu0 0
    %2061 = vmatmul.mubr.bf16.gmra.mxu0 %v2023
    %v2062 = vpop.f32.mrf.mxu0
    %v2063 = vadd.f32 0.0, %v2062
    %v2064 = vpop.f32.mrf.mxu0
    %v2065 = vpop.f32.mrf.mxu0
    %v2066 = vpop.f32.mrf.mxu0
    %2067 = vdwg.mxu0
    %2068 = vrot.lane.b32.xlu0 %v1457, 48
    %v2069 = vpop.permute.xlu0 %2068
    %v2071 = vsel %vm169, %v2019, 0
    %v2074 = vsel %vm294, %v2069, 0
    %2076 = vmatprep.subr.bf16.mxu0 0
    %2077 = vmatpush1.bf16.msra.mxu0 0
    %2078 = vmatprep.subr.bf16.mxu0 0
    %2079 = vmatpush1.bf16.msra.mxu0 0
    %2080 = vmatprep.subr.bf16.mxu0 0
    %2081 = vmatpush1.bf16.msra.mxu0 0
    %2082 = vmatprep.subr.bf16.mxu0 0
    %2083 = vmatpush1.bf16.msra.mxu0 0
    %2084 = vmatprep.subr.bf16.mxu0 0
    %2085 = vmatpush1.bf16.msra.mxu0 0
    %2086 = vmatprep.subr.bf16.mxu0 0
    %2087 = vmatpush1.bf16.msra.mxu0 0
    %2088 = vmatprep.subr.bf16.mxu0 0
    %2089 = vmatpush1.bf16.msra.mxu0 0
    %2090 = vmatprep.subr.bf16.mxu0 0
    %2091 = vmatpush1.bf16.msra.mxu0 %v2074
    %2092 = vmatprep.subr.bf16.mxu0 0
    %2093 = vmatpush2.bf16.msra.mxu0 0
    %2094 = vmatprep.subr.bf16.mxu0 0
    %2095 = vmatpush2.bf16.msra.mxu0 0
    %2096 = vmatprep.subr.bf16.mxu0 0
    %2097 = vmatpush2.bf16.msra.mxu0 0
    %2098 = vmatprep.subr.bf16.mxu0 0
    %2099 = vmatpush2.bf16.msra.mxu0 0
    %2100 = vmatprep.subr.bf16.mxu0 0
    %2101 = vmatpush2.bf16.msra.mxu0 0
    %2102 = vmatprep.subr.bf16.mxu0 0
    %2103 = vmatpush2.bf16.msra.mxu0 0
    %2104 = vmatprep.subr.bf16.mxu0 0
    %2105 = vmatpush2.bf16.msra.mxu0 0
    %2106 = vmatprep.subr.bf16.mxu0 0
    %2107 = vmatpush2.bf16.msra.mxu0 0
    %2108 = vmatprep.mubr.bf16.mxu0 0
    %2109 = vmatmul.mubr.bf16.gmra.mxu0 %v2071
    %v2110 = vpop.f32.mrf.mxu0
    %v2111 = vadd.f32 0.0, %v2110
    %v2112 = vpop.f32.mrf.mxu0
    %v2113 = vpop.f32.mrf.mxu0
    %v2114 = vpop.f32.mrf.mxu0
    %2115 = vdwg.mxu0
    %2116 = vrot.lane.b32.xlu0 %v1456, 104
    %v2117 = vpop.permute.xlu0 %2116
    %2118 = vrot.lane.b32.xlu0 %v1456, 72
    %v2119 = vpop.permute.xlu0 %2118
    %v2121 = vsel %vm169, %v2117, 0
    %v2124 = vsel %vm169, %v2119, 0
    %2126 = vmatprep.subr.bf16.mxu0 0
    %2127 = vmatpush1.bf16.xpose.msra.mxu0 0
    %2128 = vmatprep.subr.bf16.mxu0 0
    %2129 = vmatpush1.bf16.xpose.msra.mxu0 0
    %2130 = vmatprep.subr.bf16.mxu0 0
    %2131 = vmatpush1.bf16.xpose.msra.mxu0 0
    %2132 = vmatprep.subr.bf16.mxu0 0
    %2133 = vmatpush1.bf16.xpose.msra.mxu0 0
    %2134 = vmatprep.subr.bf16.mxu0 0
    %2135 = vmatpush1.bf16.xpose.msra.mxu0 0
    %2136 = vmatprep.subr.bf16.mxu0 0
    %2137 = vmatpush1.bf16.xpose.msra.mxu0 0
    %2138 = vmatprep.subr.bf16.mxu0 0
    %2139 = vmatpush1.bf16.xpose.msra.mxu0 0
    %2140 = vmatprep.subr.bf16.mxu0 0
    %2141 = vmatpush1.bf16.xpose.msra.mxu0 %v2124
    %2142 = vmatprep.subr.bf16.mxu0 0
    %2143 = vmatpush2.bf16.xpose.msra.mxu0 0
    %2144 = vmatprep.subr.bf16.mxu0 0
    %2145 = vmatpush2.bf16.xpose.msra.mxu0 0
    %2146 = vmatprep.subr.bf16.mxu0 0
    %2147 = vmatpush2.bf16.xpose.msra.mxu0 0
    %2148 = vmatprep.subr.bf16.mxu0 0
    %2149 = vmatpush2.bf16.xpose.msra.mxu0 0
    %2150 = vmatprep.subr.bf16.mxu0 0
    %2151 = vmatpush2.bf16.xpose.msra.mxu0 0
    %2152 = vmatprep.subr.bf16.mxu0 0
    %2153 = vmatpush2.bf16.xpose.msra.mxu0 0
    %2154 = vmatprep.subr.bf16.mxu0 0
    %2155 = vmatpush2.bf16.xpose.msra.mxu0 0
    %2156 = vmatprep.subr.bf16.mxu0 0
    %2157 = vmatpush2.bf16.xpose.msra.mxu0 0
    %2158 = vmatprep.mubr.bf16.mxu0 0
    %2159 = vmatmul.mubr.bf16.gmra.mxu0 %v2121
    %v2160 = vpop.f32.mrf.mxu0
    %v2161 = vadd.f32 %v75, %v2160
    %v2162 = vpop.f32.mrf.mxu0
    %v2163 = vpop.f32.mrf.mxu0
    %v2164 = vpop.f32.mrf.mxu0
    %2165 = vdwg.mxu0
    %2166 = vrot.lane.b32.xlu0 %v1457, 104
    %v2167 = vpop.permute.xlu0 %2166
    %2168 = vrot.lane.b32.xlu0 %v1457, 72
    %v2169 = vpop.permute.xlu0 %2168
    %v2171 = vsel %vm169, %v2167, 0
    %v2174 = vsel %vm169, %v2169, 0
    %2176 = vmatprep.subr.bf16.mxu0 0
    %2177 = vmatpush1.bf16.xpose.msra.mxu0 0
    %2178 = vmatprep.subr.bf16.mxu0 0
    %2179 = vmatpush1.bf16.xpose.msra.mxu0 0
    %2180 = vmatprep.subr.bf16.mxu0 0
    %2181 = vmatpush1.bf16.xpose.msra.mxu0 0
    %2182 = vmatprep.subr.bf16.mxu0 0
    %2183 = vmatpush1.bf16.xpose.msra.mxu0 0
    %2184 = vmatprep.subr.bf16.mxu0 0
    %2185 = vmatpush1.bf16.xpose.msra.mxu0 0
    %2186 = vmatprep.subr.bf16.mxu0 0
    %2187 = vmatpush1.bf16.xpose.msra.mxu0 0
    %2188 = vmatprep.subr.bf16.mxu0 0
    %2189 = vmatpush1.bf16.xpose.msra.mxu0 0
    %2190 = vmatprep.subr.bf16.mxu0 0
    %2191 = vmatpush1.bf16.xpose.msra.mxu0 %v2174
    %2192 = vmatprep.subr.bf16.mxu0 0
    %2193 = vmatpush2.bf16.xpose.msra.mxu0 0
    %2194 = vmatprep.subr.bf16.mxu0 0
    %2195 = vmatpush2.bf16.xpose.msra.mxu0 0
    %2196 = vmatprep.subr.bf16.mxu0 0
    %2197 = vmatpush2.bf16.xpose.msra.mxu0 0
    %2198 = vmatprep.subr.bf16.mxu0 0
    %2199 = vmatpush2.bf16.xpose.msra.mxu0 0
    %2200 = vmatprep.subr.bf16.mxu0 0
    %2201 = vmatpush2.bf16.xpose.msra.mxu0 0
    %2202 = vmatprep.subr.bf16.mxu0 0
    %2203 = vmatpush2.bf16.xpose.msra.mxu0 0
    %2204 = vmatprep.subr.bf16.mxu0 0
    %2205 = vmatpush2.bf16.xpose.msra.mxu0 0
    %2206 = vmatprep.subr.bf16.mxu0 0
    %2207 = vmatpush2.bf16.xpose.msra.mxu0 0
    %2208 = vmatprep.mubr.bf16.mxu0 0
    %2209 = vmatmul.mubr.bf16.gmra.mxu0 %v2171
    %v2210 = vpop.f32.mrf.mxu0
    %v2211 = vadd.f32 %v79, %v2210
    %v2212 = vpop.f32.mrf.mxu0
    %v2213 = vpop.f32.mrf.mxu0
    %v2214 = vpop.f32.mrf.mxu0
    %2215 = vdwg.mxu0
    %v2216 = vsel %vm169, %v2161, -inf
    %2217 = vmax.xlane.f32.xlu0 %v2216
    %v2218 = vpop.xlane.xlu0 %2217
    %v2219 = vsel %vm169, %v2211, -inf
    %2220 = vmax.xlane.f32.xlu0 %v2219
    %v2221 = vpop.xlane.xlu0 %2220
    %v2222 = vsub.f32 %v2161, %v2218
    %v2223 = vsub.f32 %v2211, %v2221
    %v2224 = vmul.f32 %v2222, 1.442695
    %v2225 = vpow.pop %v2224
    %v2226 = vmul.f32 %v2223, 1.442695
    %v2227 = vpow.pop %v2226
    %v2228 = vsel %vm169, %v2225, 0.0
    %2229 = vadd.xlane.f32.xlu0 %v2228
    %v2230 = vpop.xlane.xlu0 %2229
    %v2231 = vsel %vm169, %v2227, 0.0
    %2232 = vadd.xlane.f32.xlu0 %v2231
    %v2233 = vpop.xlane.xlu0 %2232
    %v2234 = vrcp.pop %v2230
    %v2235 = vrcp.pop %v2233
    %v2236 = vmul.f32 %v2225, %v2234
    %v2237 = vmul.f32 %v2227, %v2235
    %v2238 = vpack.c.bf16 %v2236, %v2236
    %v2239 = vpack.c.bf16 %v2237, %v2237
    %2240 = vrot.lane.b32.xlu0 %v1456, 40
    %v2241 = vpop.permute.xlu0 %2240
    %v2243 = vsel %vm169, %v2238, 0
    %v2246 = vsel %vm294, %v2241, 0
    %2248 = vmatprep.subr.bf16.mxu0 0
    %2249 = vmatpush1.bf16.msra.mxu0 0
    %2250 = vmatprep.subr.bf16.mxu0 0
    %2251 = vmatpush1.bf16.msra.mxu0 0
    %2252 = vmatprep.subr.bf16.mxu0 0
    %2253 = vmatpush1.bf16.msra.mxu0 0
    %2254 = vmatprep.subr.bf16.mxu0 0
    %2255 = vmatpush1.bf16.msra.mxu0 0
    %2256 = vmatprep.subr.bf16.mxu0 0
    %2257 = vmatpush1.bf16.msra.mxu0 0
    %2258 = vmatprep.subr.bf16.mxu0 0
    %2259 = vmatpush1.bf16.msra.mxu0 0
    %2260 = vmatprep.subr.bf16.mxu0 0
    %2261 = vmatpush1.bf16.msra.mxu0 0
    %2262 = vmatprep.subr.bf16.mxu0 0
    %2263 = vmatpush1.bf16.msra.mxu0 %v2246
    %2264 = vmatprep.subr.bf16.mxu0 0
    %2265 = vmatpush2.bf16.msra.mxu0 0
    %2266 = vmatprep.subr.bf16.mxu0 0
    %2267 = vmatpush2.bf16.msra.mxu0 0
    %2268 = vmatprep.subr.bf16.mxu0 0
    %2269 = vmatpush2.bf16.msra.mxu0 0
    %2270 = vmatprep.subr.bf16.mxu0 0
    %2271 = vmatpush2.bf16.msra.mxu0 0
    %2272 = vmatprep.subr.bf16.mxu0 0
    %2273 = vmatpush2.bf16.msra.mxu0 0
    %2274 = vmatprep.subr.bf16.mxu0 0
    %2275 = vmatpush2.bf16.msra.mxu0 0
    %2276 = vmatprep.subr.bf16.mxu0 0
    %2277 = vmatpush2.bf16.msra.mxu0 0
    %2278 = vmatprep.subr.bf16.mxu0 0
    %2279 = vmatpush2.bf16.msra.mxu0 0
    %2280 = vmatprep.mubr.bf16.mxu0 0
    %2281 = vmatmul.mubr.bf16.gmra.mxu0 %v2243
    %v2282 = vpop.f32.mrf.mxu0
    %v2283 = vadd.f32 0.0, %v2282
    %v2284 = vpop.f32.mrf.mxu0
    %v2285 = vpop.f32.mrf.mxu0
    %v2286 = vpop.f32.mrf.mxu0
    %2287 = vdwg.mxu0
    %2288 = vrot.lane.b32.xlu0 %v1457, 40
    %v2289 = vpop.permute.xlu0 %2288
    %v2291 = vsel %vm169, %v2239, 0
    %v2294 = vsel %vm294, %v2289, 0
    %2296 = vmatprep.subr.bf16.mxu0 0
    %2297 = vmatpush1.bf16.msra.mxu0 0
    %2298 = vmatprep.subr.bf16.mxu0 0
    %2299 = vmatpush1.bf16.msra.mxu0 0
    %2300 = vmatprep.subr.bf16.mxu0 0
    %2301 = vmatpush1.bf16.msra.mxu0 0
    %2302 = vmatprep.subr.bf16.mxu0 0
    %2303 = vmatpush1.bf16.msra.mxu0 0
    %2304 = vmatprep.subr.bf16.mxu0 0
    %2305 = vmatpush1.bf16.msra.mxu0 0
    %2306 = vmatprep.subr.bf16.mxu0 0
    %2307 = vmatpush1.bf16.msra.mxu0 0
    %2308 = vmatprep.subr.bf16.mxu0 0
    %2309 = vmatpush1.bf16.msra.mxu0 0
    %2310 = vmatprep.subr.bf16.mxu0 0
    %2311 = vmatpush1.bf16.msra.mxu0 %v2294
    %2312 = vmatprep.subr.bf16.mxu0 0
    %2313 = vmatpush2.bf16.msra.mxu0 0
    %2314 = vmatprep.subr.bf16.mxu0 0
    %2315 = vmatpush2.bf16.msra.mxu0 0
    %2316 = vmatprep.subr.bf16.mxu0 0
    %2317 = vmatpush2.bf16.msra.mxu0 0
    %2318 = vmatprep.subr.bf16.mxu0 0
    %2319 = vmatpush2.bf16.msra.mxu0 0
    %2320 = vmatprep.subr.bf16.mxu0 0
    %2321 = vmatpush2.bf16.msra.mxu0 0
    %2322 = vmatprep.subr.bf16.mxu0 0
    %2323 = vmatpush2.bf16.msra.mxu0 0
    %2324 = vmatprep.subr.bf16.mxu0 0
    %2325 = vmatpush2.bf16.msra.mxu0 0
    %2326 = vmatprep.subr.bf16.mxu0 0
    %2327 = vmatpush2.bf16.msra.mxu0 0
    %2328 = vmatprep.mubr.bf16.mxu0 0
    %2329 = vmatmul.mubr.bf16.gmra.mxu0 %v2291
    %v2330 = vpop.f32.mrf.mxu0
    %v2331 = vadd.f32 0.0, %v2330
    %v2332 = vpop.f32.mrf.mxu0
    %v2333 = vpop.f32.mrf.mxu0
    %v2334 = vpop.f32.mrf.mxu0
    %2335 = vdwg.mxu0
    %2338 = vrot.lane.b32.xlu0 %v1843, 8
    %v2339 = vpop.permute.xlu0 %2338
    %2340 = vrot.lane.b32.xlu0 %v1891, 8
    %v2341 = vpop.permute.xlu0 %2340
    %2346 = vrot.lane.b32.xlu0 %v2063, 16
    %v2347 = vpop.permute.xlu0 %2346
    %2348 = vrot.lane.b32.xlu0 %v2111, 16
    %v2349 = vpop.permute.xlu0 %2348
    %2354 = vrot.lane.b32.xlu0 %v2283, 24
    %v2355 = vpop.permute.xlu0 %2354
    %2356 = vrot.lane.b32.xlu0 %v2331, 24
    %v2357 = vpop.permute.xlu0 %2356
    %v2360 = vsel %vm169, %v1623, %v2339
    %v2361 = vsel %vm169, %v1671, %v2341
    %v2362 = vsel %vm1072, %v2360, %v2347
    %v2363 = vsel %vm1072, %v2361, %v2349
    %v2364 = vsel %vm1075, %v2362, %v2355
    %v2365 = vsel %vm1075, %v2363, %v2357
    %v2366 = vpack.c.bf16 %v2365, %v2364
    %v2367 = vlaneseq
    %v2368 = vshrl.u32 %v2367, 7
    %v2369 = vsub.s32 1, %v2368
    %v2370 = vrot.slane %v1394, %v2369
    %v2375 = vunpack.c.l.b16 %v1377
    %v2376 = vunpack.c.l.b16 %v1378
    %v2377 = vunpack.c.l.b16 %v1379
    %v2378 = vunpack.c.l.b16 %v1380
    %v2379 = vpack.c.b16 %v2376, %v2375
    %v2380 = vpack.c.b16 %v2378, %v2377
    %v2384 = vsel %vm28, %v2366, 0
    %2386 = vmatprep.subr.bf16.mxu0 0
    %2387 = vmatpush1.bf16.msra.mxu0 0
    %2388 = vmatprep.subr.bf16.mxu0 0
    %2389 = vmatpush1.bf16.msra.mxu0 0
    %2390 = vmatprep.subr.bf16.mxu0 0
    %2391 = vmatpush1.bf16.msra.mxu0 0
    %2392 = vmatprep.subr.bf16.mxu0 0
    %2393 = vmatpush1.bf16.msra.mxu0 0
    %2394 = vmatprep.subr.bf16.mxu0 0
    %2395 = vmatpush1.bf16.msra.mxu0 0
    %2396 = vmatprep.subr.bf16.mxu0 0
    %2397 = vmatpush1.bf16.msra.mxu0 0
    %2398 = vmatprep.subr.bf16.mxu0 0
    %2399 = vmatpush1.bf16.msra.mxu0 %v2380
    %2400 = vmatprep.subr.bf16.mxu0 0
    %2401 = vmatpush1.bf16.msra.mxu0 %v2379
    %2402 = vmatprep.subr.bf16.mxu0 0
    %2403 = vmatpush2.bf16.msra.mxu0 0
    %2404 = vmatprep.subr.bf16.mxu0 0
    %2405 = vmatpush2.bf16.msra.mxu0 0
    %2406 = vmatprep.subr.bf16.mxu0 0
    %2407 = vmatpush2.bf16.msra.mxu0 0
    %2408 = vmatprep.subr.bf16.mxu0 0
    %2409 = vmatpush2.bf16.msra.mxu0 0
    %2410 = vmatprep.subr.bf16.mxu0 0
    %2411 = vmatpush2.bf16.msra.mxu0 0
    %2412 = vmatprep.subr.bf16.mxu0 0
    %2413 = vmatpush2.bf16.msra.mxu0 0
    %2414 = vmatprep.subr.bf16.mxu0 0
    %2415 = vmatpush2.bf16.msra.mxu0 0
    %2416 = vmatprep.subr.bf16.mxu0 0
    %2417 = vmatpush2.bf16.msra.mxu0 0
    %2418 = vmatprep.mubr.bf16.mxu0 0
    %2419 = vmatmul.mubr.bf16.gmra.mxu0 %v2384
    %v2420 = vpop.f32.mrf.mxu0
    %v2421 = vadd.f32 %v2370, %v2420
    %v2422 = vpop.f32.mrf.mxu0
    %v2423 = vpop.f32.mrf.mxu0
    %v2424 = vadd.f32 %v2370, %v2423
    %v2425 = vpop.f32.mrf.mxu0
    %2426 = vdwg.mxu0
    %v2427 = vadd.f32 %v2421, %v1370
    %v2428 = vadd.f32 %v2424, %v1371
    %v2429 = vsel %vm28, %v2427, 0.0
    %2430 = vadd.xlane.f32.xlu0 %v2429
    %v2431 = vpop.xlane.xlu0 %2430
    %v2432 = vsel %vm28, %v2428, 0.0
    %2433 = vadd.xlane.f32.xlu0 %v2432
    %v2434 = vpop.xlane.xlu0 %2433
    %v2435 = vmul.f32 %v2431, %v35
    %v2436 = vmul.f32 %v2434, %v35
    %v2437 = vsub.f32 %v2427, %v2435
    %v2438 = vsub.f32 %v2428, %v2436
    %v2439 = vmul.f32 %v2437, %v2437
    %v2440 = vmul.f32 %v2438, %v2438
    %v2441 = vsel %vm28, %v2439, 0.0
    %2442 = vadd.xlane.f32.xlu0 %v2441
    %v2443 = vpop.xlane.xlu0 %2442
    %v2444 = vsel %vm28, %v2440, 0.0
    %2445 = vadd.xlane.f32.xlu0 %v2444
    %v2446 = vpop.xlane.xlu0 %2445
    %v2447 = vmul.f32 %v2443, %v35
    %v2448 = vmul.f32 %v2446, %v35
    %v2449 = vadd.f32 %v2447, 1e-12
    %v2450 = vadd.f32 %v2448, 1e-12
    %v2451 = vrsqrt.pop %v2449
    %v2452 = vrsqrt.pop %v2450
    %v2453 = vmul.f32 %v2437, %v2451
    %v2454 = vmul.f32 %v2438, %v2452
    %v2455 = vlaneseq
    %v2456 = vshrl.u32 %v2455, 7
    %v2457 = vsub.s32 2, %v2456
    %v2458 = vrot.slane %v1394, %v2457
    %v2459 = vmul.f32 %v2453, %v2458
    %v2460 = vmul.f32 %v2454, %v2458
    %v2461 = vlaneseq
    %v2462 = vshrl.u32 %v2461, 7
    %v2463 = vsub.s32 3, %v2462
    %v2464 = vrot.slane %v1394, %v2463
    %v2465 = vadd.f32 %v2459, %v2464
    %v2466 = vadd.f32 %v2460, %v2464
    %v2467 = vpack.c.bf16 %v2466, %v2465
    %v2468 = vlaneseq
    %v2469 = vshrl.u32 %v2468, 7
    %v2470 = vsub.s32 4, %v2469
    %v2471 = vrot.slane %v1394, %v2470
    %v2476 = vunpack.c.l.b16 %v1381
    %v2477 = vunpack.c.l.b16 %v1382
    %v2478 = vunpack.c.l.b16 %v1383
    %v2479 = vunpack.c.l.b16 %v1384
    %v2480 = vpack.c.b16 %v2477, %v2476
    %v2481 = vpack.c.b16 %v2479, %v2478
    %v2485 = vsel %vm28, %v2467, 0
    %2487 = vmatprep.subr.bf16.mxu0 0
    %2488 = vmatpush1.bf16.msra.mxu0 0
    %2489 = vmatprep.subr.bf16.mxu0 0
    %2490 = vmatpush1.bf16.msra.mxu0 0
    %2491 = vmatprep.subr.bf16.mxu0 0
    %2492 = vmatpush1.bf16.msra.mxu0 0
    %2493 = vmatprep.subr.bf16.mxu0 0
    %2494 = vmatpush1.bf16.msra.mxu0 0
    %2495 = vmatprep.subr.bf16.mxu0 0
    %2496 = vmatpush1.bf16.msra.mxu0 0
    %2497 = vmatprep.subr.bf16.mxu0 0
    %2498 = vmatpush1.bf16.msra.mxu0 0
    %2499 = vmatprep.subr.bf16.mxu0 0
    %2500 = vmatpush1.bf16.msra.mxu0 %v2481
    %2501 = vmatprep.subr.bf16.mxu0 0
    %2502 = vmatpush1.bf16.msra.mxu0 %v2480
    %2503 = vmatprep.subr.bf16.mxu0 0
    %2504 = vmatpush2.bf16.msra.mxu0 0
    %2505 = vmatprep.subr.bf16.mxu0 0
    %2506 = vmatpush2.bf16.msra.mxu0 0
    %2507 = vmatprep.subr.bf16.mxu0 0
    %2508 = vmatpush2.bf16.msra.mxu0 0
    %2509 = vmatprep.subr.bf16.mxu0 0
    %2510 = vmatpush2.bf16.msra.mxu0 0
    %2511 = vmatprep.subr.bf16.mxu0 0
    %2512 = vmatpush2.bf16.msra.mxu0 0
    %2513 = vmatprep.subr.bf16.mxu0 0
    %2514 = vmatpush2.bf16.msra.mxu0 0
    %2515 = vmatprep.subr.bf16.mxu0 0
    %2516 = vmatpush2.bf16.msra.mxu0 0
    %2517 = vmatprep.subr.bf16.mxu0 0
    %2518 = vmatpush2.bf16.msra.mxu0 0
    %2519 = vmatprep.mubr.bf16.mxu0 0
    %2520 = vmatmul.mubr.bf16.gmra.mxu0 %v2485
    %v2521 = vpop.f32.mrf.mxu0
    %v2522 = vadd.f32 %v2471, %v2521
    %v2523 = vpop.f32.mrf.mxu0
    %v2524 = vpop.f32.mrf.mxu0
    %v2525 = vadd.f32 %v2471, %v2524
    %v2526 = vpop.f32.mrf.mxu0
    %2527 = vdwg.mxu0
    %v2528 = vmul.f32 %v2522, %v2522
    %v2529 = vmul.f32 %v2525, %v2525
    %v2530 = vmul.f32 %v2522, %v2528
    %v2531 = vmul.f32 %v2525, %v2529
    %v2532 = vmul.f32 %v2530, 0.044715
    %v2533 = vmul.f32 %v2531, 0.044715
    %v2534 = vadd.f32 %v2522, %v2532
    %v2535 = vadd.f32 %v2525, %v2533
    %v2536 = vmul.f32 %v2534, 0.7978846
    %v2537 = vmul.f32 %v2535, 0.7978846
    %v2538 = vtanh.pop %v2536
    %v2539 = vtanh.pop %v2537
    %v2540 = vadd.f32 %v2538, 1.0
    %v2541 = vadd.f32 %v2539, 1.0
    %v2542 = vmul.f32 %v2540, 0.5
    %v2543 = vmul.f32 %v2541, 0.5
    %v2544 = vmul.f32 %v2522, %v2542
    %v2545 = vmul.f32 %v2525, %v2543
    %v2546 = vpack.c.bf16 %v2545, %v2544
    %v2547 = vlaneseq
    %v2548 = vshrl.u32 %v2547, 7
    %v2549 = vsub.s32 5, %v2548
    %v2550 = vrot.slane %v1394, %v2549
    %v2559 = vunpack.c.l.b16 %v1385
    %v2560 = vunpack.c.l.b16 %v1386
    %v2561 = vunpack.c.l.b16 %v1387
    %v2562 = vunpack.c.l.b16 %v1388
    %v2563 = vunpack.c.l.b16 %v1389
    %v2564 = vunpack.c.l.b16 %v1390
    %v2565 = vunpack.c.l.b16 %v1391
    %v2566 = vunpack.c.l.b16 %v1392
    %v2567 = vpack.c.b16 %v2560, %v2559
    %v2568 = vpack.c.b16 %v2562, %v2561
    %v2569 = vpack.c.b16 %v2564, %v2563
    %v2570 = vpack.c.b16 %v2566, %v2565
    %v2576 = vsel %vm1287, %v2546, 0
    %2578 = vmatprep.subr.bf16.mxu0 0
    %2579 = vmatpush1.bf16.msra.mxu0 0
    %2580 = vmatprep.subr.bf16.mxu0 0
    %2581 = vmatpush1.bf16.msra.mxu0 0
    %2582 = vmatprep.subr.bf16.mxu0 0
    %2583 = vmatpush1.bf16.msra.mxu0 0
    %2584 = vmatprep.subr.bf16.mxu0 0
    %2585 = vmatpush1.bf16.msra.mxu0 0
    %2586 = vmatprep.subr.bf16.mxu0 0
    %2587 = vmatpush1.bf16.msra.mxu0 %v2570
    %2588 = vmatprep.subr.bf16.mxu0 0
    %2589 = vmatpush1.bf16.msra.mxu0 %v2569
    %2590 = vmatprep.subr.bf16.mxu0 0
    %2591 = vmatpush1.bf16.msra.mxu0 %v2568
    %2592 = vmatprep.subr.bf16.mxu0 0
    %2593 = vmatpush1.bf16.msra.mxu0 %v2567
    %2594 = vmatprep.subr.bf16.mxu0 0
    %2595 = vmatpush2.bf16.msra.mxu0 0
    %2596 = vmatprep.subr.bf16.mxu0 0
    %2597 = vmatpush2.bf16.msra.mxu0 0
    %2598 = vmatprep.subr.bf16.mxu0 0
    %2599 = vmatpush2.bf16.msra.mxu0 0
    %2600 = vmatprep.subr.bf16.mxu0 0
    %2601 = vmatpush2.bf16.msra.mxu0 0
    %2602 = vmatprep.subr.bf16.mxu0 0
    %2603 = vmatpush2.bf16.msra.mxu0 0
    %2604 = vmatprep.subr.bf16.mxu0 0
    %2605 = vmatpush2.bf16.msra.mxu0 0
    %2606 = vmatprep.subr.bf16.mxu0 0
    %2607 = vmatpush2.bf16.msra.mxu0 0
    %2608 = vmatprep.subr.bf16.mxu0 0
    %2609 = vmatpush2.bf16.msra.mxu0 0
    %2610 = vmatprep.mubr.bf16.mxu0 0
    %2611 = vmatmul.mubr.bf16.gmra.mxu0 %v2576
    %v2612 = vpop.f32.mrf.mxu0
    %v2613 = vadd.f32 %v2550, %v2612
    %v2614 = vpop.f32.mrf.mxu0
    %v2615 = vpop.f32.mrf.mxu0
    %v2616 = vadd.f32 %v2550, %v2615
    %v2617 = vpop.f32.mrf.mxu0
    %2618 = vdwg.mxu0
    %v2619 = vadd.f32 %v2613, %v2465
    %v2620 = vadd.f32 %v2616, %v2466
    %v2621 = vsel %vm28, %v2619, 0.0
    %2622 = vadd.xlane.f32.xlu0 %v2621
    %v2623 = vpop.xlane.xlu0 %2622
    %v2624 = vsel %vm28, %v2620, 0.0
    %2625 = vadd.xlane.f32.xlu0 %v2624
    %v2626 = vpop.xlane.xlu0 %2625
    %v2627 = vmul.f32 %v2623, %v35
    %v2628 = vmul.f32 %v2626, %v35
    %v2629 = vsub.f32 %v2619, %v2627
    %v2630 = vsub.f32 %v2620, %v2628
    %v2631 = vmul.f32 %v2629, %v2629
    %v2632 = vmul.f32 %v2630, %v2630
    %v2633 = vsel %vm28, %v2631, 0.0
    %2634 = vadd.xlane.f32.xlu0 %v2633
    %v2635 = vpop.xlane.xlu0 %2634
    %v2636 = vsel %vm28, %v2632, 0.0
    %2637 = vadd.xlane.f32.xlu0 %v2636
    %v2638 = vpop.xlane.xlu0 %2637
    %v2639 = vmul.f32 %v2635, %v35
    %v2640 = vmul.f32 %v2638, %v35
    %v2641 = vadd.f32 %v2639, 1e-12
    %v2642 = vadd.f32 %v2640, 1e-12
    %v2643 = vrsqrt.pop %v2641
    %v2644 = vrsqrt.pop %v2642
    %v2645 = vmul.f32 %v2629, %v2643
    %v2646 = vmul.f32 %v2630, %v2644
    %v2647 = vlaneseq
    %v2648 = vshrl.u32 %v2647, 7
    %v2649 = vsub.s32 6, %v2648
    %v2650 = vrot.slane %v1394, %v2649
    %v2651 = vmul.f32 %v2645, %v2650
    %v2652 = vmul.f32 %v2646, %v2650
    %v2653 = vlaneseq
    %v2654 = vshrl.u32 %v2653, 7
    %v2655 = vsub.s32 7, %v2654
    %v2656 = vrot.slane %v1394, %v2655
    %v2657 = vadd.f32 %v2651, %v2656
    %v2658 = vadd.f32 %v2652, %v2656
    %v2659 = vpack.c.bf16 %v2657, %v2657
    %v2660 = vpack.c.bf16 %v2658, %v2658
    %v2661 = vld [vmem:[%s5] sm:$0xf]
    %v2662 = vld [vmem:[%s5 + $0x4] sm:$0xf]
    %v2663 = vld [vmem:[%s5 + $0x8] sm:$0xf]
    %v2664 = vld [vmem:[%s5 + $0xc] sm:$0xf]
    %v2665 = vlaneseq
    %v2666 = vshrl.u32 %v2665, 7
    %v2667 = vsub.s32 2, %v2666
    %v2668 = vrot.slane %v25, %v2667
    %v2671 = vunpack.c.l.b16 %v2659
    %v2672 = vunpack.c.l.b16 %v2660
    %v2673 = vrot.slane %v2672, 7
    %vm2674 = vcmask 1041409
    %v2675 = vsel %vm2674, %v2673, %v2671
    %v2676 = vpack.c.b16 %v2675, %v2675
    %v2681 = vunpack.c.l.b16 %v2661
    %v2682 = vunpack.c.l.b16 %v2662
    %v2683 = vunpack.c.l.b16 %v2663
    %v2684 = vunpack.c.l.b16 %v2664
    %v2685 = vpack.c.b16 %v2682, %v2681
    %v2686 = vpack.c.b16 %v2684, %v2683
    %v2690 = vsel %vm28, %v2676, 0
    %2692 = vmatprep.subr.bf16.mxu0 0
    %2693 = vmatpush1.bf16.msra.mxu0 0
    %2694 = vmatprep.subr.bf16.mxu0 0
    %2695 = vmatpush1.bf16.msra.mxu0 0
    %2696 = vmatprep.subr.bf16.mxu0 0
    %2697 = vmatpush1.bf16.msra.mxu0 0
    %2698 = vmatprep.subr.bf16.mxu0 0
    %2699 = vmatpush1.bf16.msra.mxu0 0
    %2700 = vmatprep.subr.bf16.mxu0 0
    %2701 = vmatpush1.bf16.msra.mxu0 0
    %2702 = vmatprep.subr.bf16.mxu0 0
    %2703 = vmatpush1.bf16.msra.mxu0 0
    %2704 = vmatprep.subr.bf16.mxu0 0
    %2705 = vmatpush1.bf16.msra.mxu0 %v2686
    %2706 = vmatprep.subr.bf16.mxu0 0
    %2707 = vmatpush1.bf16.msra.mxu0 %v2685
    %2708 = vmatprep.subr.bf16.mxu0 0
    %2709 = vmatpush2.bf16.msra.mxu0 0
    %2710 = vmatprep.subr.bf16.mxu0 0
    %2711 = vmatpush2.bf16.msra.mxu0 0
    %2712 = vmatprep.subr.bf16.mxu0 0
    %2713 = vmatpush2.bf16.msra.mxu0 0
    %2714 = vmatprep.subr.bf16.mxu0 0
    %2715 = vmatpush2.bf16.msra.mxu0 0
    %2716 = vmatprep.subr.bf16.mxu0 0
    %2717 = vmatpush2.bf16.msra.mxu0 0
    %2718 = vmatprep.subr.bf16.mxu0 0
    %2719 = vmatpush2.bf16.msra.mxu0 0
    %2720 = vmatprep.subr.bf16.mxu0 0
    %2721 = vmatpush2.bf16.msra.mxu0 0
    %2722 = vmatprep.subr.bf16.mxu0 0
    %2723 = vmatpush2.bf16.msra.mxu0 0
    %2724 = vmatprep.mubr.bf16.mxu0 0
    %2725 = vmatmul.mubr.bf16.gmra.mxu0 %v2690
    %v2726 = vpop.f32.mrf.mxu0
    %v2727 = vadd.f32 %v2668, %v2726
    %v2728 = vpop.f32.mrf.mxu0
    %v2729 = vpop.f32.mrf.mxu0
    %v2730 = vpop.f32.mrf.mxu0
    %2731 = vdwg.mxu0
    %2732 = vst [vmem:[#allocation2] sm:$0x3] %v2727
    // Predicated region
    $region26: #{_lambda_.1} parent=1 // pred_check
      _
    $region27: #{_lambda_.1} parent=1 // pred_check_branch
      %2734 = sbr.rel (0) target = $region29
    $region28: #{_lambda_.1} parent=1 // pred_region
      %s2736 = ssub.s32 32, 32
      %2737 = vsyncadd [#allocation3], %s2736
      %s2739 = sshll.u32 [#allocation2], 4
      %s2740 = int_to_ptr.vmem [resolvable:$true] %s2739
      %2742 = dma.vmem_to_hbm [thread:$0]  %s2740, 32, %s6, [#allocation3]
    $region29: #{_lambda_.1} parent=1 // pred_fallthru
      _
    // Predicated region
    $region30: #{_lambda_.1} parent=1 // pred_check
      _
    $region31: #{_lambda_.1} parent=1 // pred_check_branch
      %2744 = sbr.rel (0) target = $region33
    $region32: #{_lambda_.1} parent=1 // pred_region
      %2745 = dma.done [#allocation3], 32
    $region33: #{_lambda_.1} parent=1 // pred_fallthru
      _
    %2746 = vsyncpa [#allocation3], 1

</llo_original>
